<compile_context>
chip_gen: v7x
topology: tpu7x:2x2x1
jax: 0.10.0
libtpu: 0.0.40
codegen_flags: <defaults>
</compile_context>

<pallas_src>
from typing import NamedTuple

import jax
import jax.numpy as jnp
import numpy as np
from jax.experimental import pallas as pl
from jax.experimental.pallas import tpu as pltpu


def _round_up(n, m):
    return ((n + m - 1) // m) * m


# ------------------------------ geometry -------------------------------------
class Geom(NamedTuple):
    n_frames: int
    h: int
    w: int
    ch1: int
    k1: int
    st1: int
    ch2: int
    k2: int
    st2: int
    ch3: int
    k3: int
    st3: int
    h1: int
    w1: int
    h2: int
    w2: int
    h3: int
    w3: int
    gh: int
    gw: int
    gsize: int   # padded rows per conv1 parity group
    m2: int      # conv2 rows computed (full gh x gw grid)
    m3: int      # conv3 rows computed ((h3-1)*gw + w3)
    fc1: int
    fc2: int


def make_geom(n_frames, h, w, ch1, k1, st1, ch2, k2, st2, ch3, k3, st3,
              fc1, fc2):
    h1, w1 = (h - k1) // st1 + 1, (w - k1) // st1 + 1
    h2, w2 = (h1 - k2) // st2 + 1, (w1 - k2) // st2 + 1
    h3, w3 = (h2 - k3) // st3 + 1, (w2 - k3) // st3 + 1
    # nn.Linear(3136, fc1) in the reference module pins this geometry.
    assert ch3 * h3 * w3 == 3136, (ch3, h3, w3)
    # The slice-gather layout tricks below need the classic DQN strides.
    assert st2 == 2 and st3 == 1
    assert h1 % 2 == 0 and w1 % 2 == 0
    gh, gw = h1 // 2, w1 // 2
    assert h2 <= gh and w2 <= gw
    m2 = gh * gw
    base_max2 = ((k2 - 1) // 2) * gw + (k2 - 1) // 2
    gsize = _round_up(m2 + base_max2, 8)
    m3 = (h3 - 1) * gw + w3
    # conv3 tap slices must stay inside the m2 computed conv2 rows.
    assert m3 + (k3 - 1) * gw + (k3 - 1) <= m2
    return Geom(n_frames, h, w, ch1, k1, st1, ch2, k2, st2, ch3, k3, st3,
                h1, w1, h2, w2, h3, w3, gh, gw, gsize, m2, m3, fc1, fc2)


# ------------------------ static parameter re-layout -------------------------
def prepare_params(params, g):
    """One-time re-layout of the PyTorch-style parameters (all static)."""
    bf16 = jnp.bfloat16
    # Each conv layer becomes ONE GEMM contracting over (ki, kj, cin), the
    # same order used by the in-kernel window concatenation.
    w1 = params["c1_w"].transpose(2, 3, 1, 0).reshape(
        g.k1 * g.k1 * g.n_frames, g.ch1)
    w2 = params["c2_w"].transpose(2, 3, 1, 0).reshape(
        g.k2 * g.k2 * g.ch1, g.ch2)
    w3 = params["c3_w"].transpose(2, 3, 1, 0).reshape(
        g.k3 * g.k3 * g.ch2, g.ch3)
    # fc1 weight permuted to consume features ordered (spatial, channel),
    # absorbing torch.nn.Flatten's NCHW (channel, spatial) order at init time.
    sp3 = g.h3 * g.w3
    fw1 = params["fc1_w"].reshape(g.fc1, g.ch3, sp3).transpose(2, 1, 0)
    fw1 = fw1.reshape(sp3 * g.ch3, g.fc1)
    return {
        "w1": w1.astype(bf16),
        "b1": params["c1_b"].reshape(1, g.ch1).astype(jnp.float32),
        "w2": w2.astype(bf16),
        "b2": params["c2_b"].reshape(1, g.ch2).astype(jnp.float32),
        "w3": w3.astype(bf16),
        "b3": params["c3_b"].reshape(1, g.ch3).astype(jnp.float32),
        "fw1": fw1.astype(bf16),
        "fb1": params["fc1_b"].reshape(1, g.fc1).astype(jnp.float32),
        "fw2": params["fc2_w"].T.astype(bf16),
        "fb2": params["fc2_b"].reshape(1, g.fc2).astype(jnp.float32),
    }


# ------------------------------ Pallas kernel ---------------------------------
def _make_dqn_kernel(g):
    """Fully fused conv1+conv2+conv3+fc1+fc2 for one batch element."""

    def kernel(p1_ref, w1_ref, b1_ref, w2_ref, b2_ref, w3_ref, b3_ref,
               fw1_ref, fb1_ref, fw2_ref, fb2_ref, o_ref):
        # ---- conv1: one im2col GEMM; output rows are parity-grouped -------
        h1 = jnp.dot(p1_ref[...], w1_ref[...],
                     preferred_element_type=jnp.float32)
        h1 = jnp.maximum(h1 + b1_ref[...], 0.0).astype(jnp.bfloat16)

        # ---- conv2 (stride 2): each tap window is a contiguous slice of
        # one parity group; concat along K -> one GEMM (m2, k2*k2*ch1). -----
        pieces = []
        for ki in range(g.k2):
            for kj in range(g.k2):
                grp = (ki % 2) * 2 + (kj % 2)
                base = grp * g.gsize + (ki // 2) * g.gw + (kj // 2)
                pieces.append(h1[base:base + g.m2, :])
        p2 = jnp.concatenate(pieces, axis=1)
        h2 = jnp.dot(p2, w2_ref[...], preferred_element_type=jnp.float32)
        h2 = jnp.maximum(h2 + b2_ref[...], 0.0).astype(jnp.bfloat16)

        # ---- conv3 (stride 1): same trick on the width-gw grid ------------
        pieces = []
        for ki in range(g.k3):
            for kj in range(g.k3):
                base = ki * g.gw + kj
                pieces.append(h2[base:base + g.m3, :])
        p3 = jnp.concatenate(pieces, axis=1)
        h3 = jnp.dot(p3, w3_ref[...], preferred_element_type=jnp.float32)
        h3 = jnp.maximum(h3 + b3_ref[...], 0.0).astype(jnp.bfloat16)

        # ---- flatten: gather ONLY the h3*w3 valid rows (garbage/pad rows
        # never reach the FC head), then fc1 + ReLU + fc2 fused. ------------
        rows = []
        for idx in range(g.h3 * g.w3):
            r = (idx // g.w3) * g.gw + idx % g.w3
            rows.append(h3[r:r + 1, :])
        flat = jnp.concatenate(rows, axis=1)                # (1, 3136)

        f1 = jnp.dot(flat, fw1_ref[...], preferred_element_type=jnp.float32)
        f1 = jnp.maximum(f1 + fb1_ref[...], 0.0).astype(jnp.bfloat16)
        out = jnp.dot(f1, fw2_ref[...], preferred_element_type=jnp.float32)
        o_ref[...] = out + fb2_ref[...]

    return kernel


# ------------------------------ forward pass ---------------------------------
def _conv1_patches(x, g):
    """Wrapper-side conv1 im2col with parity-grouped, padded row order.

    Row layout (per batch element): 4 parity groups of `gsize` rows; group
    G = (y1%2)*2 + (x1%2); within a group, rows are (y1//2, x1//2) row-major
    over a gh x gw grid, followed by zero padding rows.
    """
    b = x.shape[0]
    cols = []
    for ki in range(g.k1):
        for kj in range(g.k1):
            sl = x[:, :,
                   ki:ki + g.st1 * (g.h1 - 1) + 1:g.st1,
                   kj:kj + g.st1 * (g.w1 - 1) + 1:g.st1]     # (B, nf, h1, w1)
            cols.append(sl)
    p = jnp.stack(cols, axis=-1)                             # (B, nf, h1, w1, k1*k1)
    p = p.transpose(0, 2, 3, 4, 1)                           # feature = (ki,kj,cin)
    p = p.reshape(b, g.h1, g.w1, g.k1 * g.k1 * g.n_frames)
    groups = []
    for py in range(2):
        for px in range(2):
            gp = p[:, py::2, px::2, :].reshape(b, g.gh * g.gw, -1)
            gp = jnp.pad(gp, ((0, 0), (0, g.gsize - g.gh * g.gw), (0, 0)))
            groups.append(gp)
    return jnp.concatenate(groups, axis=1).astype(jnp.bfloat16)


def dqn_forward(g, prep, x):
    b = x.shape[0]
    patches = _conv1_patches(x, g)                 # (B, 4*gsize, k1*k1*nf)
    rows1 = 4 * g.gsize
    feat1 = g.k1 * g.k1 * g.n_frames

    def full2(a):
        return pl.BlockSpec(a.shape, lambda i: (0, 0))

    weight_keys = ("w1", "b1", "w2", "b2", "w3", "b3",
                   "fw1", "fb1", "fw2", "fb2")
    out = pl.pallas_call(
        _make_dqn_kernel(g),
        out_shape=jax.ShapeDtypeStruct((b, 1, g.fc2), jnp.float32),
        grid=(b,),
        in_specs=[pl.BlockSpec((None, rows1, feat1), lambda i: (i, 0, 0))]
                 + [full2(prep[k]) for k in weight_keys],
        out_specs=pl.BlockSpec((None, 1, g.fc2), lambda i: (i, 0, 0)),
        compiler_params=pltpu.CompilerParams(
            dimension_semantics=("parallel",)),
    )(patches, *[prep[k] for k in weight_keys])
    return out.reshape(b, g.fc2)


# ------------------------- reference (plain XLA, f32) -------------------------
def dqn_reference(params, x, strides):
    st1, st2, st3 = strides

    def conv(h, w, bias, s):
        y = jax.lax.conv_general_dilated(
            h, w, (s, s), "VALID", dimension_numbers=("NCHW", "OIHW", "NCHW"))
        return jax.nn.relu(y + bias.reshape(1, -1, 1, 1))

    y = conv(x, params["c1_w"], params["c1_b"], st1)
    y = conv(y, params["c2_w"], params["c2_b"], st2)
    y = conv(y, params["c3_w"], params["c3_b"], st3)
    f = y.reshape(y.shape[0], -1)
    f = jax.nn.relu(f @ params["fc1_w"].T + params["fc1_b"])
    return f @ params["fc2_w"].T + params["fc2_b"]


# --------------------------- parameter initialization ------------------------
def _uniform(key, shape, fan_in):
    bound = 1.0 / float(np.sqrt(fan_in))
    return jax.random.uniform(key, shape, jnp.float32, -bound, bound)


def init_dqn_params(key, n_frames, ch1, ch2, ch3, k1, k2, k3, fc1, fc2):
    ks = jax.random.split(key, 10)
    return {
        "c1_w": _uniform(ks[0], (ch1, n_frames, k1, k1), n_frames * k1 * k1),
        "c1_b": _uniform(ks[1], (ch1,), n_frames * k1 * k1),
        "c2_w": _uniform(ks[2], (ch2, ch1, k2, k2), ch1 * k2 * k2),
        "c2_b": _uniform(ks[3], (ch2,), ch1 * k2 * k2),
        "c3_w": _uniform(ks[4], (ch3, ch2, k3, k3), ch2 * k3 * k3),
        "c3_b": _uniform(ks[5], (ch3,), ch2 * k3 * k3),
        "fc1_w": _uniform(ks[6], (fc1, 3136), 3136),       # PyTorch (out, in)
        "fc1_b": _uniform(ks[7], (fc1,), 3136),
        "fc2_w": _uniform(ks[8], (fc2, fc1), fc1),
        "fc2_b": _uniform(ks[9], (fc2,), fc1),
    }


# ----------------------------------- main -------------------------------------
if __name__ == "__main__":
    # fc1 in_features is hard-coded to 3136 = 64 * 7 * 7 in the module, which
    # pins the classic Atari DQN geometry: 84x84 input, convs (32,8,4),
    # (64,4,2), (64,3,1).
    n_frames, ch1, ch2, ch3 = 4, 32, 64, 64
    k1, k2, k3 = 8, 4, 3
    st1, st2, st3 = 4, 2, 1
    fc1_size, fc2_size = 128, 8
    batch, height, width = 2, 84, 84

    geom = make_geom(n_frames, height, width, ch1, k1, st1, ch2, k2, st2,
                     ch3, k3, st3, fc1_size, fc2_size)

    key = jax.random.PRNGKey(0)
    k_params, k_input = jax.random.split(key)
    params = init_dqn_params(k_params, n_frames, ch1, ch2, ch3, k1, k2, k3,
                             fc1_size, fc2_size)
    x = jax.random.normal(k_input, (batch, n_frames, height, width),
                          jnp.float32)

    prep = prepare_params(params, geom)
    fwd = jax.jit(dqn_forward, static_argnums=0)
    out = jax.block_until_ready(fwd(geom, prep, x))

    assert out.shape == (batch, fc2_size), out.shape
    assert out.dtype == jnp.float32
    assert bool(jnp.all(jnp.isfinite(out)))

    # Sanity-check against a plain-XLA f32 reference.  The kernel rounds
    # activations to bf16 between layers (intentional, MXU bf16 path), hence
    # the loose tolerance.
    ref = dqn_reference(params, x, (st1, st2, st3))
    np.testing.assert_allclose(np.asarray(out), np.asarray(ref),
                               rtol=5e-2, atol=2e-2)
    print("KERNEL_OK")
</pallas_src>

<mosaic_0001>
module attributes {stable_mosaic.version = 11 : i64} {
  func.func @kernel(%arg0: i32, %arg1: memref<1x448x256xbf16, #tpu.memory_space<vmem>>, %arg2: memref<256x32xbf16, #tpu.memory_space<vmem>>, %arg3: memref<1x32xf32, #tpu.memory_space<vmem>>, %arg4: memref<512x64xbf16, #tpu.memory_space<vmem>>, %arg5: memref<1x64xf32, #tpu.memory_space<vmem>>, %arg6: memref<576x64xbf16, #tpu.memory_space<vmem>>, %arg7: memref<1x64xf32, #tpu.memory_space<vmem>>, %arg8: memref<3136x128xbf16, #tpu.memory_space<vmem>>, %arg9: memref<1x128xf32, #tpu.memory_space<vmem>>, %arg10: memref<128x8xbf16, #tpu.memory_space<vmem>>, %arg11: memref<1x8xf32, #tpu.memory_space<vmem>>, %arg12: memref<1x1x8xf32, #tpu.memory_space<vmem>>) attributes {dimension_semantics = [#tpu.dimension_semantics<parallel>], iteration_bounds = array<i64: 2>, scalar_prefetch = 0 : i64, scratch_operands = 0 : i64, tpu.core_type = #tpu.core_type<tc>, window_params = [{transform_indices = @transform_0, window_bounds = array<i64: 1, 448, 256>}, {pipeline_mode = #tpu.pipeline_mode<synchronous>, transform_indices = @transform_1, window_bounds = array<i64: 256, 32>}, {pipeline_mode = #tpu.pipeline_mode<synchronous>, transform_indices = @transform_2, window_bounds = array<i64: 1, 32>}, {pipeline_mode = #tpu.pipeline_mode<synchronous>, transform_indices = @transform_3, window_bounds = array<i64: 512, 64>}, {pipeline_mode = #tpu.pipeline_mode<synchronous>, transform_indices = @transform_4, window_bounds = array<i64: 1, 64>}, {pipeline_mode = #tpu.pipeline_mode<synchronous>, transform_indices = @transform_5, window_bounds = array<i64: 576, 64>}, {pipeline_mode = #tpu.pipeline_mode<synchronous>, transform_indices = @transform_6, window_bounds = array<i64: 1, 64>}, {pipeline_mode = #tpu.pipeline_mode<synchronous>, transform_indices = @transform_7, window_bounds = array<i64: 3136, 128>}, {pipeline_mode = #tpu.pipeline_mode<synchronous>, transform_indices = @transform_8, window_bounds = array<i64: 1, 128>}, {pipeline_mode = #tpu.pipeline_mode<synchronous>, transform_indices = @transform_9, window_bounds = array<i64: 128, 8>}, {pipeline_mode = #tpu.pipeline_mode<synchronous>, transform_indices = @transform_10, window_bounds = array<i64: 1, 8>}, {transform_indices = @transform_11, window_bounds = array<i64: 1, 1, 8>}]} {
    %c0 = arith.constant 0 : index
    %c0_0 = arith.constant 0 : index
    %c0_1 = arith.constant 0 : index
    %0 = vector.load %arg1[%c0, %c0_0, %c0_1] : memref<1x448x256xbf16, #tpu.memory_space<vmem>>, vector<1x448x256xbf16>
    %1 = vector.shape_cast %0 : vector<1x448x256xbf16> to vector<448x256xbf16>
    %c0_2 = arith.constant 0 : index
    %c0_3 = arith.constant 0 : index
    %2 = vector.load %arg2[%c0_2, %c0_3] : memref<256x32xbf16, #tpu.memory_space<vmem>>, vector<256x32xbf16>
    %cst = arith.constant dense<0.000000e+00> : vector<448x32xf32>
    %3 = tpu.matmul %1, %2, %cst {dimension_numbers = #tpu.dot_dimension_numbers<[1], [0], [0], [1], [0, 0, 1, 1], [], []>} : vector<448x256xbf16>, vector<256x32xbf16>, vector<448x32xf32> -> vector<448x32xf32>
    %c0_4 = arith.constant 0 : index
    %c0_5 = arith.constant 0 : index
    %4 = vector.load %arg3[%c0_4, %c0_5] : memref<1x32xf32, #tpu.memory_space<vmem>>, vector<1x32xf32>
    %5 = vector.broadcast %4 : vector<1x32xf32> to vector<448x32xf32>
    %6 = arith.addf %3, %5 : vector<448x32xf32>
    %cst_6 = arith.constant 0.000000e+00 : f32
    %7 = vector.broadcast %cst_6 : f32 to vector<448x32xf32>
    %8 = arith.maximumf %6, %7 : vector<448x32xf32>
    %9 = arith.truncf %8 : vector<448x32xf32> to vector<448x32xbf16>
    %10 = vector.extract_strided_slice %9 {offsets = [0, 0], sizes = [100, 32], strides = [1, 1]} : vector<448x32xbf16> to vector<100x32xbf16>
    %11 = vector.extract_strided_slice %9 {offsets = [112, 0], sizes = [100, 32], strides = [1, 1]} : vector<448x32xbf16> to vector<100x32xbf16>
    %12 = vector.extract_strided_slice %9 {offsets = [1, 0], sizes = [100, 32], strides = [1, 1]} : vector<448x32xbf16> to vector<100x32xbf16>
    %13 = vector.extract_strided_slice %9 {offsets = [113, 0], sizes = [100, 32], strides = [1, 1]} : vector<448x32xbf16> to vector<100x32xbf16>
    %14 = vector.extract_strided_slice %9 {offsets = [224, 0], sizes = [100, 32], strides = [1, 1]} : vector<448x32xbf16> to vector<100x32xbf16>
    %15 = vector.extract_strided_slice %9 {offsets = [336, 0], sizes = [100, 32], strides = [1, 1]} : vector<448x32xbf16> to vector<100x32xbf16>
    %16 = vector.extract_strided_slice %9 {offsets = [225, 0], sizes = [100, 32], strides = [1, 1]} : vector<448x32xbf16> to vector<100x32xbf16>
    %17 = vector.extract_strided_slice %9 {offsets = [337, 0], sizes = [100, 32], strides = [1, 1]} : vector<448x32xbf16> to vector<100x32xbf16>
    %18 = vector.extract_strided_slice %9 {offsets = [10, 0], sizes = [100, 32], strides = [1, 1]} : vector<448x32xbf16> to vector<100x32xbf16>
    %19 = vector.extract_strided_slice %9 {offsets = [122, 0], sizes = [100, 32], strides = [1, 1]} : vector<448x32xbf16> to vector<100x32xbf16>
    %20 = vector.extract_strided_slice %9 {offsets = [11, 0], sizes = [100, 32], strides = [1, 1]} : vector<448x32xbf16> to vector<100x32xbf16>
    %21 = vector.extract_strided_slice %9 {offsets = [123, 0], sizes = [100, 32], strides = [1, 1]} : vector<448x32xbf16> to vector<100x32xbf16>
    %22 = vector.extract_strided_slice %9 {offsets = [234, 0], sizes = [100, 32], strides = [1, 1]} : vector<448x32xbf16> to vector<100x32xbf16>
    %23 = vector.extract_strided_slice %9 {offsets = [346, 0], sizes = [100, 32], strides = [1, 1]} : vector<448x32xbf16> to vector<100x32xbf16>
    %24 = vector.extract_strided_slice %9 {offsets = [235, 0], sizes = [100, 32], strides = [1, 1]} : vector<448x32xbf16> to vector<100x32xbf16>
    %25 = vector.extract_strided_slice %9 {offsets = [347, 0], sizes = [100, 32], strides = [1, 1]} : vector<448x32xbf16> to vector<100x32xbf16>
    %26 = tpu.concatenate %10, %11, %12, %13, %14, %15, %16, %17, %18, %19, %20, %21, %22, %23, %24, %25 in 1 : vector<100x32xbf16>, vector<100x32xbf16>, vector<100x32xbf16>, vector<100x32xbf16>, vector<100x32xbf16>, vector<100x32xbf16>, vector<100x32xbf16>, vector<100x32xbf16>, vector<100x32xbf16>, vector<100x32xbf16>, vector<100x32xbf16>, vector<100x32xbf16>, vector<100x32xbf16>, vector<100x32xbf16>, vector<100x32xbf16>, vector<100x32xbf16> -> vector<100x512xbf16>
    %c0_7 = arith.constant 0 : index
    %c0_8 = arith.constant 0 : index
    %27 = vector.load %arg4[%c0_7, %c0_8] : memref<512x64xbf16, #tpu.memory_space<vmem>>, vector<512x64xbf16>
    %cst_9 = arith.constant dense<0.000000e+00> : vector<100x64xf32>
    %28 = tpu.matmul %26, %27, %cst_9 {dimension_numbers = #tpu.dot_dimension_numbers<[1], [0], [0], [1], [0, 0, 1, 1], [], []>} : vector<100x512xbf16>, vector<512x64xbf16>, vector<100x64xf32> -> vector<100x64xf32>
    %c0_10 = arith.constant 0 : index
    %c0_11 = arith.constant 0 : index
    %29 = vector.load %arg5[%c0_10, %c0_11] : memref<1x64xf32, #tpu.memory_space<vmem>>, vector<1x64xf32>
    %30 = vector.broadcast %29 : vector<1x64xf32> to vector<100x64xf32>
    %31 = arith.addf %28, %30 : vector<100x64xf32>
    %cst_12 = arith.constant 0.000000e+00 : f32
    %32 = vector.broadcast %cst_12 : f32 to vector<100x64xf32>
    %33 = arith.maximumf %31, %32 : vector<100x64xf32>
    %34 = arith.truncf %33 : vector<100x64xf32> to vector<100x64xbf16>
    %35 = vector.extract_strided_slice %34 {offsets = [0, 0], sizes = [67, 64], strides = [1, 1]} : vector<100x64xbf16> to vector<67x64xbf16>
    %36 = vector.extract_strided_slice %34 {offsets = [1, 0], sizes = [67, 64], strides = [1, 1]} : vector<100x64xbf16> to vector<67x64xbf16>
    %37 = vector.extract_strided_slice %34 {offsets = [2, 0], sizes = [67, 64], strides = [1, 1]} : vector<100x64xbf16> to vector<67x64xbf16>
    %38 = vector.extract_strided_slice %34 {offsets = [10, 0], sizes = [67, 64], strides = [1, 1]} : vector<100x64xbf16> to vector<67x64xbf16>
    %39 = vector.extract_strided_slice %34 {offsets = [11, 0], sizes = [67, 64], strides = [1, 1]} : vector<100x64xbf16> to vector<67x64xbf16>
    %40 = vector.extract_strided_slice %34 {offsets = [12, 0], sizes = [67, 64], strides = [1, 1]} : vector<100x64xbf16> to vector<67x64xbf16>
    %41 = vector.extract_strided_slice %34 {offsets = [20, 0], sizes = [67, 64], strides = [1, 1]} : vector<100x64xbf16> to vector<67x64xbf16>
    %42 = vector.extract_strided_slice %34 {offsets = [21, 0], sizes = [67, 64], strides = [1, 1]} : vector<100x64xbf16> to vector<67x64xbf16>
    %43 = vector.extract_strided_slice %34 {offsets = [22, 0], sizes = [67, 64], strides = [1, 1]} : vector<100x64xbf16> to vector<67x64xbf16>
    %44 = tpu.concatenate %35, %36, %37, %38, %39, %40, %41, %42, %43 in 1 : vector<67x64xbf16>, vector<67x64xbf16>, vector<67x64xbf16>, vector<67x64xbf16>, vector<67x64xbf16>, vector<67x64xbf16>, vector<67x64xbf16>, vector<67x64xbf16>, vector<67x64xbf16> -> vector<67x576xbf16>
    %c0_13 = arith.constant 0 : index
    %c0_14 = arith.constant 0 : index
    %45 = vector.load %arg6[%c0_13, %c0_14] : memref<576x64xbf16, #tpu.memory_space<vmem>>, vector<576x64xbf16>
    %cst_15 = arith.constant dense<0.000000e+00> : vector<67x64xf32>
    %46 = tpu.matmul %44, %45, %cst_15 {dimension_numbers = #tpu.dot_dimension_numbers<[1], [0], [0], [1], [0, 0, 1, 1], [], []>} : vector<67x576xbf16>, vector<576x64xbf16>, vector<67x64xf32> -> vector<67x64xf32>
    %c0_16 = arith.constant 0 : index
    %c0_17 = arith.constant 0 : index
    %47 = vector.load %arg7[%c0_16, %c0_17] : memref<1x64xf32, #tpu.memory_space<vmem>>, vector<1x64xf32>
    %48 = vector.broadcast %47 : vector<1x64xf32> to vector<67x64xf32>
    %49 = arith.addf %46, %48 : vector<67x64xf32>
    %cst_18 = arith.constant 0.000000e+00 : f32
    %50 = vector.broadcast %cst_18 : f32 to vector<67x64xf32>
    %51 = arith.maximumf %49, %50 : vector<67x64xf32>
    %52 = arith.truncf %51 : vector<67x64xf32> to vector<67x64xbf16>
    %53 = vector.extract_strided_slice %52 {offsets = [0, 0], sizes = [1, 64], strides = [1, 1]} : vector<67x64xbf16> to vector<1x64xbf16>
    %54 = vector.extract_strided_slice %52 {offsets = [1, 0], sizes = [1, 64], strides = [1, 1]} : vector<67x64xbf16> to vector<1x64xbf16>
    %55 = vector.extract_strided_slice %52 {offsets = [2, 0], sizes = [1, 64], strides = [1, 1]} : vector<67x64xbf16> to vector<1x64xbf16>
    %56 = vector.extract_strided_slice %52 {offsets = [3, 0], sizes = [1, 64], strides = [1, 1]} : vector<67x64xbf16> to vector<1x64xbf16>
    %57 = vector.extract_strided_slice %52 {offsets = [4, 0], sizes = [1, 64], strides = [1, 1]} : vector<67x64xbf16> to vector<1x64xbf16>
    %58 = vector.extract_strided_slice %52 {offsets = [5, 0], sizes = [1, 64], strides = [1, 1]} : vector<67x64xbf16> to vector<1x64xbf16>
    %59 = vector.extract_strided_slice %52 {offsets = [6, 0], sizes = [1, 64], strides = [1, 1]} : vector<67x64xbf16> to vector<1x64xbf16>
    %60 = vector.extract_strided_slice %52 {offsets = [10, 0], sizes = [1, 64], strides = [1, 1]} : vector<67x64xbf16> to vector<1x64xbf16>
    %61 = vector.extract_strided_slice %52 {offsets = [11, 0], sizes = [1, 64], strides = [1, 1]} : vector<67x64xbf16> to vector<1x64xbf16>
    %62 = vector.extract_strided_slice %52 {offsets = [12, 0], sizes = [1, 64], strides = [1, 1]} : vector<67x64xbf16> to vector<1x64xbf16>
    %63 = vector.extract_strided_slice %52 {offsets = [13, 0], sizes = [1, 64], strides = [1, 1]} : vector<67x64xbf16> to vector<1x64xbf16>
    %64 = vector.extract_strided_slice %52 {offsets = [14, 0], sizes = [1, 64], strides = [1, 1]} : vector<67x64xbf16> to vector<1x64xbf16>
    %65 = vector.extract_strided_slice %52 {offsets = [15, 0], sizes = [1, 64], strides = [1, 1]} : vector<67x64xbf16> to vector<1x64xbf16>
    %66 = vector.extract_strided_slice %52 {offsets = [16, 0], sizes = [1, 64], strides = [1, 1]} : vector<67x64xbf16> to vector<1x64xbf16>
    %67 = vector.extract_strided_slice %52 {offsets = [20, 0], sizes = [1, 64], strides = [1, 1]} : vector<67x64xbf16> to vector<1x64xbf16>
    %68 = vector.extract_strided_slice %52 {offsets = [21, 0], sizes = [1, 64], strides = [1, 1]} : vector<67x64xbf16> to vector<1x64xbf16>
    %69 = vector.extract_strided_slice %52 {offsets = [22, 0], sizes = [1, 64], strides = [1, 1]} : vector<67x64xbf16> to vector<1x64xbf16>
    %70 = vector.extract_strided_slice %52 {offsets = [23, 0], sizes = [1, 64], strides = [1, 1]} : vector<67x64xbf16> to vector<1x64xbf16>
    %71 = vector.extract_strided_slice %52 {offsets = [24, 0], sizes = [1, 64], strides = [1, 1]} : vector<67x64xbf16> to vector<1x64xbf16>
    %72 = vector.extract_strided_slice %52 {offsets = [25, 0], sizes = [1, 64], strides = [1, 1]} : vector<67x64xbf16> to vector<1x64xbf16>
    %73 = vector.extract_strided_slice %52 {offsets = [26, 0], sizes = [1, 64], strides = [1, 1]} : vector<67x64xbf16> to vector<1x64xbf16>
    %74 = vector.extract_strided_slice %52 {offsets = [30, 0], sizes = [1, 64], strides = [1, 1]} : vector<67x64xbf16> to vector<1x64xbf16>
    %75 = vector.extract_strided_slice %52 {offsets = [31, 0], sizes = [1, 64], strides = [1, 1]} : vector<67x64xbf16> to vector<1x64xbf16>
    %76 = vector.extract_strided_slice %52 {offsets = [32, 0], sizes = [1, 64], strides = [1, 1]} : vector<67x64xbf16> to vector<1x64xbf16>
    %77 = vector.extract_strided_slice %52 {offsets = [33, 0], sizes = [1, 64], strides = [1, 1]} : vector<67x64xbf16> to vector<1x64xbf16>
    %78 = vector.extract_strided_slice %52 {offsets = [34, 0], sizes = [1, 64], strides = [1, 1]} : vector<67x64xbf16> to vector<1x64xbf16>
    %79 = vector.extract_strided_slice %52 {offsets = [35, 0], sizes = [1, 64], strides = [1, 1]} : vector<67x64xbf16> to vector<1x64xbf16>
    %80 = vector.extract_strided_slice %52 {offsets = [36, 0], sizes = [1, 64], strides = [1, 1]} : vector<67x64xbf16> to vector<1x64xbf16>
    %81 = vector.extract_strided_slice %52 {offsets = [40, 0], sizes = [1, 64], strides = [1, 1]} : vector<67x64xbf16> to vector<1x64xbf16>
    %82 = vector.extract_strided_slice %52 {offsets = [41, 0], sizes = [1, 64], strides = [1, 1]} : vector<67x64xbf16> to vector<1x64xbf16>
    %83 = vector.extract_strided_slice %52 {offsets = [42, 0], sizes = [1, 64], strides = [1, 1]} : vector<67x64xbf16> to vector<1x64xbf16>
    %84 = vector.extract_strided_slice %52 {offsets = [43, 0], sizes = [1, 64], strides = [1, 1]} : vector<67x64xbf16> to vector<1x64xbf16>
    %85 = vector.extract_strided_slice %52 {offsets = [44, 0], sizes = [1, 64], strides = [1, 1]} : vector<67x64xbf16> to vector<1x64xbf16>
    %86 = vector.extract_strided_slice %52 {offsets = [45, 0], sizes = [1, 64], strides = [1, 1]} : vector<67x64xbf16> to vector<1x64xbf16>
    %87 = vector.extract_strided_slice %52 {offsets = [46, 0], sizes = [1, 64], strides = [1, 1]} : vector<67x64xbf16> to vector<1x64xbf16>
    %88 = vector.extract_strided_slice %52 {offsets = [50, 0], sizes = [1, 64], strides = [1, 1]} : vector<67x64xbf16> to vector<1x64xbf16>
    %89 = vector.extract_strided_slice %52 {offsets = [51, 0], sizes = [1, 64], strides = [1, 1]} : vector<67x64xbf16> to vector<1x64xbf16>
    %90 = vector.extract_strided_slice %52 {offsets = [52, 0], sizes = [1, 64], strides = [1, 1]} : vector<67x64xbf16> to vector<1x64xbf16>
    %91 = vector.extract_strided_slice %52 {offsets = [53, 0], sizes = [1, 64], strides = [1, 1]} : vector<67x64xbf16> to vector<1x64xbf16>
    %92 = vector.extract_strided_slice %52 {offsets = [54, 0], sizes = [1, 64], strides = [1, 1]} : vector<67x64xbf16> to vector<1x64xbf16>
    %93 = vector.extract_strided_slice %52 {offsets = [55, 0], sizes = [1, 64], strides = [1, 1]} : vector<67x64xbf16> to vector<1x64xbf16>
    %94 = vector.extract_strided_slice %52 {offsets = [56, 0], sizes = [1, 64], strides = [1, 1]} : vector<67x64xbf16> to vector<1x64xbf16>
    %95 = vector.extract_strided_slice %52 {offsets = [60, 0], sizes = [1, 64], strides = [1, 1]} : vector<67x64xbf16> to vector<1x64xbf16>
    %96 = vector.extract_strided_slice %52 {offsets = [61, 0], sizes = [1, 64], strides = [1, 1]} : vector<67x64xbf16> to vector<1x64xbf16>
    %97 = vector.extract_strided_slice %52 {offsets = [62, 0], sizes = [1, 64], strides = [1, 1]} : vector<67x64xbf16> to vector<1x64xbf16>
    %98 = vector.extract_strided_slice %52 {offsets = [63, 0], sizes = [1, 64], strides = [1, 1]} : vector<67x64xbf16> to vector<1x64xbf16>
    %99 = vector.extract_strided_slice %52 {offsets = [64, 0], sizes = [1, 64], strides = [1, 1]} : vector<67x64xbf16> to vector<1x64xbf16>
    %100 = vector.extract_strided_slice %52 {offsets = [65, 0], sizes = [1, 64], strides = [1, 1]} : vector<67x64xbf16> to vector<1x64xbf16>
    %101 = vector.extract_strided_slice %52 {offsets = [66, 0], sizes = [1, 64], strides = [1, 1]} : vector<67x64xbf16> to vector<1x64xbf16>
    %102 = tpu.concatenate %53, %54, %55, %56, %57, %58, %59, %60, %61, %62, %63, %64, %65, %66, %67, %68 in 1 : vector<1x64xbf16>, vector<1x64xbf16>, vector<1x64xbf16>, vector<1x64xbf16>, vector<1x64xbf16>, vector<1x64xbf16>, vector<1x64xbf16>, vector<1x64xbf16>, vector<1x64xbf16>, vector<1x64xbf16>, vector<1x64xbf16>, vector<1x64xbf16>, vector<1x64xbf16>, vector<1x64xbf16>, vector<1x64xbf16>, vector<1x64xbf16> -> vector<1x1024xbf16>
    %103 = tpu.concatenate %69, %70, %71, %72, %73, %74, %75, %76, %77, %78, %79, %80, %81, %82, %83, %84 in 1 : vector<1x64xbf16>, vector<1x64xbf16>, vector<1x64xbf16>, vector<1x64xbf16>, vector<1x64xbf16>, vector<1x64xbf16>, vector<1x64xbf16>, vector<1x64xbf16>, vector<1x64xbf16>, vector<1x64xbf16>, vector<1x64xbf16>, vector<1x64xbf16>, vector<1x64xbf16>, vector<1x64xbf16>, vector<1x64xbf16>, vector<1x64xbf16> -> vector<1x1024xbf16>
    %104 = tpu.concatenate %85, %86, %87, %88, %89, %90, %91, %92, %93, %94, %95, %96, %97, %98, %99, %100 in 1 : vector<1x64xbf16>, vector<1x64xbf16>, vector<1x64xbf16>, vector<1x64xbf16>, vector<1x64xbf16>, vector<1x64xbf16>, vector<1x64xbf16>, vector<1x64xbf16>, vector<1x64xbf16>, vector<1x64xbf16>, vector<1x64xbf16>, vector<1x64xbf16>, vector<1x64xbf16>, vector<1x64xbf16>, vector<1x64xbf16>, vector<1x64xbf16> -> vector<1x1024xbf16>
    %105 = tpu.concatenate %102, %103, %104, %101 in 1 : vector<1x1024xbf16>, vector<1x1024xbf16>, vector<1x1024xbf16>, vector<1x64xbf16> -> vector<1x3136xbf16>
    %c0_19 = arith.constant 0 : index
    %c0_20 = arith.constant 0 : index
    %106 = vector.load %arg8[%c0_19, %c0_20] : memref<3136x128xbf16, #tpu.memory_space<vmem>>, vector<3136x128xbf16>
    %cst_21 = arith.constant dense<0.000000e+00> : vector<1x128xf32>
    %107 = tpu.matmul %105, %106, %cst_21 {dimension_numbers = #tpu.dot_dimension_numbers<[1], [0], [0], [1], [0, 0, 1, 1], [], []>} : vector<1x3136xbf16>, vector<3136x128xbf16>, vector<1x128xf32> -> vector<1x128xf32>
    %c0_22 = arith.constant 0 : index
    %c0_23 = arith.constant 0 : index
    %108 = vector.load %arg9[%c0_22, %c0_23] : memref<1x128xf32, #tpu.memory_space<vmem>>, vector<1x128xf32>
    %109 = arith.addf %107, %108 : vector<1x128xf32>
    %cst_24 = arith.constant 0.000000e+00 : f32
    %110 = vector.broadcast %cst_24 : f32 to vector<1x128xf32>
    %111 = arith.maximumf %109, %110 : vector<1x128xf32>
    %112 = arith.truncf %111 : vector<1x128xf32> to vector<1x128xbf16>
    %c0_25 = arith.constant 0 : index
    %c0_26 = arith.constant 0 : index
    %113 = vector.load %arg10[%c0_25, %c0_26] : memref<128x8xbf16, #tpu.memory_space<vmem>>, vector<128x8xbf16>
    %cst_27 = arith.constant dense<0.000000e+00> : vector<1x8xf32>
    %114 = tpu.matmul %112, %113, %cst_27 {dimension_numbers = #tpu.dot_dimension_numbers<[1], [0], [0], [1], [0, 0, 1, 1], [], []>} : vector<1x128xbf16>, vector<128x8xbf16>, vector<1x8xf32> -> vector<1x8xf32>
    %c0_28 = arith.constant 0 : index
    %c0_29 = arith.constant 0 : index
    %115 = vector.load %arg11[%c0_28, %c0_29] : memref<1x8xf32, #tpu.memory_space<vmem>>, vector<1x8xf32>
    %116 = arith.addf %114, %115 : vector<1x8xf32>
    %c0_30 = arith.constant 0 : index
    %c0_31 = arith.constant 0 : index
    %c0_32 = arith.constant 0 : index
    %117 = vector.load %arg12[%c0_30, %c0_31, %c0_32] : memref<1x1x8xf32, #tpu.memory_space<vmem>>, vector<1x1x8xf32>
    %118 = vector.shape_cast %117 : vector<1x1x8xf32> to vector<1x8xf32>
    %119 = vector.shape_cast %116 : vector<1x8xf32> to vector<1x1x8xf32>
    tpu.vector_store %arg12[%c0_30, %c0_31, %c0_32], %119 {strides = array<i32>} : memref<1x1x8xf32, #tpu.memory_space<vmem>>, vector<1x1x8xf32>,
    return
  }
  func.func @transform_0(%arg0: i32) -> (i32, i32, i32) {
    %c0_i32 = arith.constant 0 : i32
    %c0_i32_0 = arith.constant 0 : i32
    %c0_i32_1 = arith.constant 0 : i32
    return %arg0, %c0_i32, %c0_i32_0 : i32, i32, i32
  }
  func.func @transform_1(%arg0: i32) -> (i32, i32) {
    %c0_i32 = arith.constant 0 : i32
    %c0_i32_0 = arith.constant 0 : i32
    %c0_i32_1 = arith.constant 0 : i32
    return %c0_i32, %c0_i32_0 : i32, i32
  }
  func.func @transform_2(%arg0: i32) -> (i32, i32) {
    %c0_i32 = arith.constant 0 : i32
    %c0_i32_0 = arith.constant 0 : i32
    %c0_i32_1 = arith.constant 0 : i32
    return %c0_i32, %c0_i32_0 : i32, i32
  }
  func.func @transform_3(%arg0: i32) -> (i32, i32) {
    %c0_i32 = arith.constant 0 : i32
    %c0_i32_0 = arith.constant 0 : i32
    %c0_i32_1 = arith.constant 0 : i32
    return %c0_i32, %c0_i32_0 : i32, i32
  }
  func.func @transform_4(%arg0: i32) -> (i32, i32) {
    %c0_i32 = arith.constant 0 : i32
    %c0_i32_0 = arith.constant 0 : i32
    %c0_i32_1 = arith.constant 0 : i32
    return %c0_i32, %c0_i32_0 : i32, i32
  }
  func.func @transform_5(%arg0: i32) -> (i32, i32) {
    %c0_i32 = arith.constant 0 : i32
    %c0_i32_0 = arith.constant 0 : i32
    %c0_i32_1 = arith.constant 0 : i32
    return %c0_i32, %c0_i32_0 : i32, i32
  }
  func.func @transform_6(%arg0: i32) -> (i32, i32) {
    %c0_i32 = arith.constant 0 : i32
    %c0_i32_0 = arith.constant 0 : i32
    %c0_i32_1 = arith.constant 0 : i32
    return %c0_i32, %c0_i32_0 : i32, i32
  }
  func.func @transform_7(%arg0: i32) -> (i32, i32) {
    %c0_i32 = arith.constant 0 : i32
    %c0_i32_0 = arith.constant 0 : i32
    %c0_i32_1 = arith.constant 0 : i32
    return %c0_i32, %c0_i32_0 : i32, i32
  }
  func.func @transform_8(%arg0: i32) -> (i32, i32) {
    %c0_i32 = arith.constant 0 : i32
    %c0_i32_0 = arith.constant 0 : i32
    %c0_i32_1 = arith.constant 0 : i32
    return %c0_i32, %c0_i32_0 : i32, i32
  }
  func.func @transform_9(%arg0: i32) -> (i32, i32) {
    %c0_i32 = arith.constant 0 : i32
    %c0_i32_0 = arith.constant 0 : i32
    %c0_i32_1 = arith.constant 0 : i32
    return %c0_i32, %c0_i32_0 : i32, i32
  }
  func.func @transform_10(%arg0: i32) -> (i32, i32) {
    %c0_i32 = arith.constant 0 : i32
    %c0_i32_0 = arith.constant 0 : i32
    %c0_i32_1 = arith.constant 0 : i32
    return %c0_i32, %c0_i32_0 : i32, i32
  }
  func.func @transform_11(%arg0: i32) -> (i32, i32, i32) {
    %c0_i32 = arith.constant 0 : i32
    %c0_i32_0 = arith.constant 0 : i32
    %c0_i32_1 = arith.constant 0 : i32
    return %arg0, %c0_i32, %c0_i32_0 : i32, i32, i32
  }
}

</mosaic_0001>

<llo_original>
// kernel: dqn_forward.1
$region0: #{dqn_forward.1}
  #allocation0 [shape = 'u32[]', space=smem, size = 0x4, offset = 0x4, fixed_abs, tag = 'smem constant byte address 0x4 - core index']
  #allocation1 [shape = 'u32[144,128]{1,0:T(1,128)}', space=vmem, size = 0x12000, scoped, tag = 'internal scratch']
  %s0 = inlined_call_operand.vmem [shape: bf16[2,448,256], index: 0, kind: input, shape index: {}]
  %s1 = inlined_call_operand.vmem [shape: bf16[256,32], index: 1, kind: input, shape index: {}]
  %s2 = inlined_call_operand.vmem [shape: f32[1,32], index: 2, kind: input, shape index: {}]
  %s3 = inlined_call_operand.vmem [shape: bf16[512,64], index: 3, kind: input, shape index: {}]
  %s4 = inlined_call_operand.vmem [shape: f32[1,64], index: 4, kind: input, shape index: {}]
  %s5 = inlined_call_operand.vmem [shape: bf16[576,64], index: 5, kind: input, shape index: {}]
  %s6 = inlined_call_operand.vmem [shape: f32[1,64], index: 6, kind: input, shape index: {}]
  %s7 = inlined_call_operand.vmem [shape: bf16[3136,128], index: 7, kind: input, shape index: {}]
  %s8 = inlined_call_operand.vmem [shape: f32[1,128], index: 8, kind: input, shape index: {}]
  %s9 = inlined_call_operand.vmem [shape: bf16[128,8], index: 9, kind: input, shape index: {}]
  %s10 = inlined_call_operand.vmem [shape: f32[1,8], index: 10, kind: input, shape index: {}]
  %s11 = inlined_call_operand.hbm [shape: f32[2,1,8], index: 11, kind: output, shape index: {}]
  %s12 = sld [smem:[#allocation0]]
  $region77: #{dqn_forward.1} parent=0
    _
  %s14 = ssub.s32 1, %s12
  %s15 = scalar_select 0, %s14, %s12
  $region1: #{dqn_forward.1} parent=0
    #allocation2 [shape = 'u8[1024]{0}', space=vmem, size = 0x400, scoped, tag = 'output window, operand 0']
    #allocation3 [shape = 's32[2]{0}', space=sflag, size = 0x8, scoped, tag = 'scoped memory for dqn_forward.1']
    %16 = vsyncpa [#allocation3], 0
    %s17 = scalar_lea.sflag [#allocation3], 1
    %18 = vsyncpa %s17, 0
    loop: start=0, step=1, limit=4
    $region2: #{dqn_forward.1} parent=1 // loop_pre_header
      _
    $region3: #{dqn_forward.1} parent=1 // loop_header
      %s20 = sphi 0, %s24
      %p21 = scmp.ge.s32.totalorder %s20, 4
      %s30 = sphi 0, %s32
      %s33 = sphi 0, %s30
      %s34 = sphi 0, %s33
      %s50 = sphi 0, %s34
      %s54 = sphi 0, %s54
      %s56 = sphi 0, %s54
      %s57 = sphi 0, %s56
      %s71 = sphi 0, %s57
      %s75 = sphi 0, %s75
      %s77 = sphi 0, %s75
      %s78 = sphi 0, %s77
      %s92 = sphi 0, %s78
      %s96 = sphi 0, %s96
      %s98 = sphi 0, %s96
      %s99 = sphi 0, %s98
      %s113 = sphi 0, %s99
      %s117 = sphi 0, %s117
      %s119 = sphi 0, %s117
      %s120 = sphi 0, %s119
      %s134 = sphi 0, %s120
      %s138 = sphi 0, %s138
      %s140 = sphi 0, %s138
      %s141 = sphi 0, %s140
      %s155 = sphi 0, %s141
      %s159 = sphi 0, %s159
      %s161 = sphi 0, %s159
      %s162 = sphi 0, %s161
      %s176 = sphi 0, %s162
      %s180 = sphi 0, %s180
      %s182 = sphi 0, %s180
      %s183 = sphi 0, %s182
      %s197 = sphi 0, %s183
      %s201 = sphi 0, %s201
      %s203 = sphi 0, %s201
      %s204 = sphi 0, %s203
      %s218 = sphi 0, %s204
      %s222 = sphi 0, %s222
      %s224 = sphi 0, %s222
      %s225 = sphi 0, %s224
      %s239 = sphi 0, %s225
      %s243 = sphi 0, %s243
      %s245 = sphi 0, %s243
      %s246 = sphi 0, %s245
      %s260 = sphi 0, %s246
      %s266 = sphi 0, %s268
      %s269 = sphi 0, %s266
      %s270 = sphi 0, %s269
      %s286 = sphi 0, %s270
    $region4: #{dqn_forward.1} parent=1 // loop_header_branch
      %23 = sbr.rel (%p21) target = $region8
    $region5: #{dqn_forward.1} parent=1 // loop_body
      %s25 = ssub.s32 %s20, 1
      %s26 = ssub.s32 %s20, 2
      %s27 = sadd.s32 %s20, 1
      %s28 = ssub.s32 %s20, %s27
      %p29 = scmp.eq.s32.totalorder %s28, 0
      %s31 = sadd.s32 %s30, 1
      %s32 = scalar_select %p29, %s30, %s31
      %p35 = pneg %p29
      %p36 = scmp.eq.s32.totalorder %s20, 1
      %p37 = por %p35, %p36
      %p38 = scmp.ne.s32.totalorder %s30, %s33
      %p39 = scmp.eq.s32.totalorder %s20, 0
      %p40 = por %p38, %p39
      %p41 = scmp.ne.s32.totalorder %s30, %s33
      %p42 = scmp.eq.s32.totalorder %s25, 1
      %p43 = por %p41, %p42
      %p44 = scmp.ne.s32.totalorder %s33, %s34
      %p45 = scmp.eq.s32.totalorder %s25, 0
      %p46 = por %p44, %p45
      %p47 = scmp.ne.s32.totalorder %s33, %s34
      %p48 = scmp.eq.s32.totalorder %s26, 1
      %p49 = por %p47, %p48
      %p51 = scmp.ne.s32.totalorder %s34, %s50
      %p52 = scmp.eq.s32.totalorder %s26, 0
      %p53 = por %p51, %p52
      %s55 = sadd.s32 %s54, 1
      %p58 = scmp.eq.s32.totalorder %s20, 1
      %p59 = scmp.ne.s32.totalorder %s54, %s56
      %p60 = scmp.eq.s32.totalorder %s20, 0
      %p61 = por %p59, %p60
      %p62 = scmp.ne.s32.totalorder %s54, %s56
      %p63 = scmp.eq.s32.totalorder %s25, 1
      %p64 = por %p62, %p63
      %p65 = scmp.ne.s32.totalorder %s56, %s57
      %p66 = scmp.eq.s32.totalorder %s25, 0
      %p67 = por %p65, %p66
      %p68 = scmp.ne.s32.totalorder %s56, %s57
      %p69 = scmp.eq.s32.totalorder %s26, 1
      %p70 = por %p68, %p69
      %p72 = scmp.ne.s32.totalorder %s57, %s71
      %p73 = scmp.eq.s32.totalorder %s26, 0
      %p74 = por %p72, %p73
      %s76 = sadd.s32 %s75, 1
      %p79 = scmp.eq.s32.totalorder %s20, 1
      %p80 = scmp.ne.s32.totalorder %s75, %s77
      %p81 = scmp.eq.s32.totalorder %s20, 0
      %p82 = por %p80, %p81
      %p83 = scmp.ne.s32.totalorder %s75, %s77
      %p84 = scmp.eq.s32.totalorder %s25, 1
      %p85 = por %p83, %p84
      %p86 = scmp.ne.s32.totalorder %s77, %s78
      %p87 = scmp.eq.s32.totalorder %s25, 0
      %p88 = por %p86, %p87
      %p89 = scmp.ne.s32.totalorder %s77, %s78
      %p90 = scmp.eq.s32.totalorder %s26, 1
      %p91 = por %p89, %p90
      %p93 = scmp.ne.s32.totalorder %s78, %s92
      %p94 = scmp.eq.s32.totalorder %s26, 0
      %p95 = por %p93, %p94
      %s97 = sadd.s32 %s96, 1
      %p100 = scmp.eq.s32.totalorder %s20, 1
      %p101 = scmp.ne.s32.totalorder %s96, %s98
      %p102 = scmp.eq.s32.totalorder %s20, 0
      %p103 = por %p101, %p102
      %p104 = scmp.ne.s32.totalorder %s96, %s98
      %p105 = scmp.eq.s32.totalorder %s25, 1
      %p106 = por %p104, %p105
      %p107 = scmp.ne.s32.totalorder %s98, %s99
      %p108 = scmp.eq.s32.totalorder %s25, 0
      %p109 = por %p107, %p108
      %p110 = scmp.ne.s32.totalorder %s98, %s99
      %p111 = scmp.eq.s32.totalorder %s26, 1
      %p112 = por %p110, %p111
      %p114 = scmp.ne.s32.totalorder %s99, %s113
      %p115 = scmp.eq.s32.totalorder %s26, 0
      %p116 = por %p114, %p115
      %s118 = sadd.s32 %s117, 1
      %p121 = scmp.eq.s32.totalorder %s20, 1
      %p122 = scmp.ne.s32.totalorder %s117, %s119
      %p123 = scmp.eq.s32.totalorder %s20, 0
      %p124 = por %p122, %p123
      %p125 = scmp.ne.s32.totalorder %s117, %s119
      %p126 = scmp.eq.s32.totalorder %s25, 1
      %p127 = por %p125, %p126
      %p128 = scmp.ne.s32.totalorder %s119, %s120
      %p129 = scmp.eq.s32.totalorder %s25, 0
      %p130 = por %p128, %p129
      %p131 = scmp.ne.s32.totalorder %s119, %s120
      %p132 = scmp.eq.s32.totalorder %s26, 1
      %p133 = por %p131, %p132
      %p135 = scmp.ne.s32.totalorder %s120, %s134
      %p136 = scmp.eq.s32.totalorder %s26, 0
      %p137 = por %p135, %p136
      %s139 = sadd.s32 %s138, 1
      %p142 = scmp.eq.s32.totalorder %s20, 1
      %p143 = scmp.ne.s32.totalorder %s138, %s140
      %p144 = scmp.eq.s32.totalorder %s20, 0
      %p145 = por %p143, %p144
      %p146 = scmp.ne.s32.totalorder %s138, %s140
      %p147 = scmp.eq.s32.totalorder %s25, 1
      %p148 = por %p146, %p147
      %p149 = scmp.ne.s32.totalorder %s140, %s141
      %p150 = scmp.eq.s32.totalorder %s25, 0
      %p151 = por %p149, %p150
      %p152 = scmp.ne.s32.totalorder %s140, %s141
      %p153 = scmp.eq.s32.totalorder %s26, 1
      %p154 = por %p152, %p153
      %p156 = scmp.ne.s32.totalorder %s141, %s155
      %p157 = scmp.eq.s32.totalorder %s26, 0
      %p158 = por %p156, %p157
      %s160 = sadd.s32 %s159, 1
      %p163 = scmp.eq.s32.totalorder %s20, 1
      %p164 = scmp.ne.s32.totalorder %s159, %s161
      %p165 = scmp.eq.s32.totalorder %s20, 0
      %p166 = por %p164, %p165
      %p167 = scmp.ne.s32.totalorder %s159, %s161
      %p168 = scmp.eq.s32.totalorder %s25, 1
      %p169 = por %p167, %p168
      %p170 = scmp.ne.s32.totalorder %s161, %s162
      %p171 = scmp.eq.s32.totalorder %s25, 0
      %p172 = por %p170, %p171
      %p173 = scmp.ne.s32.totalorder %s161, %s162
      %p174 = scmp.eq.s32.totalorder %s26, 1
      %p175 = por %p173, %p174
      %p177 = scmp.ne.s32.totalorder %s162, %s176
      %p178 = scmp.eq.s32.totalorder %s26, 0
      %p179 = por %p177, %p178
      %s181 = sadd.s32 %s180, 1
      %p184 = scmp.eq.s32.totalorder %s20, 1
      %p185 = scmp.ne.s32.totalorder %s180, %s182
      %p186 = scmp.eq.s32.totalorder %s20, 0
      %p187 = por %p185, %p186
      %p188 = scmp.ne.s32.totalorder %s180, %s182
      %p189 = scmp.eq.s32.totalorder %s25, 1
      %p190 = por %p188, %p189
      %p191 = scmp.ne.s32.totalorder %s182, %s183
      %p192 = scmp.eq.s32.totalorder %s25, 0
      %p193 = por %p191, %p192
      %p194 = scmp.ne.s32.totalorder %s182, %s183
      %p195 = scmp.eq.s32.totalorder %s26, 1
      %p196 = por %p194, %p195
      %p198 = scmp.ne.s32.totalorder %s183, %s197
      %p199 = scmp.eq.s32.totalorder %s26, 0
      %p200 = por %p198, %p199
      %s202 = sadd.s32 %s201, 1
      %p205 = scmp.eq.s32.totalorder %s20, 1
      %p206 = scmp.ne.s32.totalorder %s201, %s203
      %p207 = scmp.eq.s32.totalorder %s20, 0
      %p208 = por %p206, %p207
      %p209 = scmp.ne.s32.totalorder %s201, %s203
      %p210 = scmp.eq.s32.totalorder %s25, 1
      %p211 = por %p209, %p210
      %p212 = scmp.ne.s32.totalorder %s203, %s204
      %p213 = scmp.eq.s32.totalorder %s25, 0
      %p214 = por %p212, %p213
      %p215 = scmp.ne.s32.totalorder %s203, %s204
      %p216 = scmp.eq.s32.totalorder %s26, 1
      %p217 = por %p215, %p216
      %p219 = scmp.ne.s32.totalorder %s204, %s218
      %p220 = scmp.eq.s32.totalorder %s26, 0
      %p221 = por %p219, %p220
      %s223 = sadd.s32 %s222, 1
      %p226 = scmp.eq.s32.totalorder %s20, 1
      %p227 = scmp.ne.s32.totalorder %s222, %s224
      %p228 = scmp.eq.s32.totalorder %s20, 0
      %p229 = por %p227, %p228
      %p230 = scmp.ne.s32.totalorder %s222, %s224
      %p231 = scmp.eq.s32.totalorder %s25, 1
      %p232 = por %p230, %p231
      %p233 = scmp.ne.s32.totalorder %s224, %s225
      %p234 = scmp.eq.s32.totalorder %s25, 0
      %p235 = por %p233, %p234
      %p236 = scmp.ne.s32.totalorder %s224, %s225
      %p237 = scmp.eq.s32.totalorder %s26, 1
      %p238 = por %p236, %p237
      %p240 = scmp.ne.s32.totalorder %s225, %s239
      %p241 = scmp.eq.s32.totalorder %s26, 0
      %p242 = por %p240, %p241
      %s244 = sadd.s32 %s243, 1
      %p247 = scmp.eq.s32.totalorder %s20, 1
      %p248 = scmp.ne.s32.totalorder %s243, %s245
      %p249 = scmp.eq.s32.totalorder %s20, 0
      %p250 = por %p248, %p249
      %p251 = scmp.ne.s32.totalorder %s243, %s245
      %p252 = scmp.eq.s32.totalorder %s25, 1
      %p253 = por %p251, %p252
      %p254 = scmp.ne.s32.totalorder %s245, %s246
      %p255 = scmp.eq.s32.totalorder %s25, 0
      %p256 = por %p254, %p255
      %p257 = scmp.ne.s32.totalorder %s245, %s246
      %p258 = scmp.eq.s32.totalorder %s26, 1
      %p259 = por %p257, %p258
      %p261 = scmp.ne.s32.totalorder %s246, %s260
      %p262 = scmp.eq.s32.totalorder %s26, 0
      %p263 = por %p261, %p262
      %s264 = ssub.s32 %s20, %s27
      %p265 = scmp.eq.s32.totalorder %s264, 0
      %s267 = sadd.s32 %s266, 1
      %s268 = scalar_select %p265, %s266, %s267
      %p271 = pneg %p265
      %p272 = scmp.eq.s32.totalorder %s20, 1
      %p273 = por %p271, %p272
      %p274 = scmp.ne.s32.totalorder %s266, %s269
      %p275 = scmp.eq.s32.totalorder %s20, 0
      %p276 = por %p274, %p275
      %p277 = scmp.ne.s32.totalorder %s266, %s269
      %p278 = scmp.eq.s32.totalorder %s25, 1
      %p279 = por %p277, %p278
      %p280 = scmp.ne.s32.totalorder %s269, %s270
      %p281 = scmp.eq.s32.totalorder %s25, 0
      %p282 = por %p280, %p281
      %p283 = scmp.ne.s32.totalorder %s269, %s270
      %p284 = scmp.eq.s32.totalorder %s26, 1
      %p285 = por %p283, %p284
      %p287 = scmp.ne.s32.totalorder %s270, %s286
      %p288 = scmp.eq.s32.totalorder %s26, 0
      %p289 = por %p287, %p288
      %p290 = scmp.le.s32.totalorder 1, %s20
      %p291 = scmp.lt.s32.totalorder %s20, 3
      %p292 = pnand %p290, %p291
      %p293 = pneg %p292
      // Predicated region
      $region9: #{dqn_forward.1} parent=5 // pred_check
        _
      $region10: #{dqn_forward.1} parent=5 // pred_check_branch
        %295 = sbr.rel (%p292) target = $region12
      $region11: #{dqn_forward.1} parent=5 // pred_region
        %s296 = ssub.s32 %s20, 1
        // Predicated region
        $region13: #{dqn_forward.1} parent=11 // pred_check
          %p297 = pneg %p67
        $region14: #{dqn_forward.1} parent=11 // pred_check_branch
          %299 = sbr.rel (%p297) target = $region16
        $region15: #{dqn_forward.1} parent=11 // pred_region
          _
        $region16: #{dqn_forward.1} parent=11 // pred_fallthru
          _
        // Predicated region
        $region17: #{dqn_forward.1} parent=11 // pred_check
          %p300 = pneg %p88
        $region18: #{dqn_forward.1} parent=11 // pred_check_branch
          %302 = sbr.rel (%p300) target = $region20
        $region19: #{dqn_forward.1} parent=11 // pred_region
          _
        $region20: #{dqn_forward.1} parent=11 // pred_fallthru
          _
        // Predicated region
        $region21: #{dqn_forward.1} parent=11 // pred_check
          %p303 = pneg %p109
        $region22: #{dqn_forward.1} parent=11 // pred_check_branch
          %305 = sbr.rel (%p303) target = $region24
        $region23: #{dqn_forward.1} parent=11 // pred_region
          _
        $region24: #{dqn_forward.1} parent=11 // pred_fallthru
          _
        // Predicated region
        $region25: #{dqn_forward.1} parent=11 // pred_check
          %p306 = pneg %p130
        $region26: #{dqn_forward.1} parent=11 // pred_check_branch
          %308 = sbr.rel (%p306) target = $region28
        $region27: #{dqn_forward.1} parent=11 // pred_region
          _
        $region28: #{dqn_forward.1} parent=11 // pred_fallthru
          _
        // Predicated region
        $region29: #{dqn_forward.1} parent=11 // pred_check
          %p309 = pneg %p151
        $region30: #{dqn_forward.1} parent=11 // pred_check_branch
          %311 = sbr.rel (%p309) target = $region32
        $region31: #{dqn_forward.1} parent=11 // pred_region
          _
        $region32: #{dqn_forward.1} parent=11 // pred_fallthru
          _
        // Predicated region
        $region33: #{dqn_forward.1} parent=11 // pred_check
          %p312 = pneg %p172
        $region34: #{dqn_forward.1} parent=11 // pred_check_branch
          %314 = sbr.rel (%p312) target = $region36
        $region35: #{dqn_forward.1} parent=11 // pred_region
          _
        $region36: #{dqn_forward.1} parent=11 // pred_fallthru
          _
        // Predicated region
        $region37: #{dqn_forward.1} parent=11 // pred_check
          %p315 = pneg %p193
        $region38: #{dqn_forward.1} parent=11 // pred_check_branch
          %317 = sbr.rel (%p315) target = $region40
        $region39: #{dqn_forward.1} parent=11 // pred_region
          _
        $region40: #{dqn_forward.1} parent=11 // pred_fallthru
          _
        // Predicated region
        $region41: #{dqn_forward.1} parent=11 // pred_check
          %p318 = pneg %p214
        $region42: #{dqn_forward.1} parent=11 // pred_check_branch
          %320 = sbr.rel (%p318) target = $region44
        $region43: #{dqn_forward.1} parent=11 // pred_region
          _
        $region44: #{dqn_forward.1} parent=11 // pred_fallthru
          _
        // Predicated region
        $region45: #{dqn_forward.1} parent=11 // pred_check
          %p321 = pneg %p235
        $region46: #{dqn_forward.1} parent=11 // pred_check_branch
          %323 = sbr.rel (%p321) target = $region48
        $region47: #{dqn_forward.1} parent=11 // pred_region
          _
        $region48: #{dqn_forward.1} parent=11 // pred_fallthru
          _
        // Predicated region
        $region49: #{dqn_forward.1} parent=11 // pred_check
          %p324 = pneg %p256
        $region50: #{dqn_forward.1} parent=11 // pred_check_branch
          %326 = sbr.rel (%p324) target = $region52
        $region51: #{dqn_forward.1} parent=11 // pred_region
          _
        $region52: #{dqn_forward.1} parent=11 // pred_fallthru
          _
      $region12: #{dqn_forward.1} parent=5 // pred_fallthru
        _
      %p327 = scmp.lt.s32.totalorder %s20, 2
      // Predicated region
      $region53: #{dqn_forward.1} parent=5 // pred_check
        %p328 = pneg %p327
      $region54: #{dqn_forward.1} parent=5 // pred_check_branch
        %330 = sbr.rel (%p328) target = $region56
      $region55: #{dqn_forward.1} parent=5 // pred_region
        // Predicated region
        $region57: #{dqn_forward.1} parent=55 // pred_check
          %p331 = pneg %p40
        $region58: #{dqn_forward.1} parent=55 // pred_check_branch
          %333 = sbr.rel (%p331) target = $region60
        $region59: #{dqn_forward.1} parent=55 // pred_region
          %p334 = scmp.lt.s32.totalorder %s20, 1
          %s335 = scalar_select %p334, %s20, 1
          %s336 = smul.addr %s335, 112
          %s337 = smul.addr %s336, 4
          %s338 = scalar_lea.vmem %s0, %s337
        $region60: #{dqn_forward.1} parent=55 // pred_fallthru
          _
      $region56: #{dqn_forward.1} parent=5 // pred_fallthru
        _
      %p339 = scmp.le.s32.totalorder 1, %s20
      %p340 = scmp.lt.s32.totalorder %s20, 3
      %p341 = pnand %p339, %p340
      %p342 = pneg %p341
      // Predicated region
      $region61: #{dqn_forward.1} parent=5 // pred_check
        _
      $region62: #{dqn_forward.1} parent=5 // pred_check_branch
        %344 = sbr.rel (%p341) target = $region64
      $region63: #{dqn_forward.1} parent=5 // pred_region
        %s345 = ssub.s32 %s20, 1
        %p346 = scmp.lt.s32.totalorder %s25, 1
        %s347 = scalar_select %p346, %s25, 1
        %s348 = smul.addr %s347, 112
        %s349 = smul.addr %s348, 4
        %s350 = scalar_lea.vmem %s0, %s349
        %p351 = pneg %p46
        %p352 = pneg %p43
        %p353 = pneg %p67
        %p354 = pneg %p64
        %p355 = pneg %p88
        %p356 = pneg %p85
        %p357 = pneg %p109
        %p358 = pneg %p106
        %p359 = pneg %p130
        %p360 = pneg %p127
        %p361 = pneg %p151
        %p362 = pneg %p148
        %p363 = pneg %p172
        %p364 = pneg %p169
        %p365 = pneg %p193
        %p366 = pneg %p190
        %p367 = pneg %p214
        %p368 = pneg %p211
        %p369 = pneg %p235
        %p370 = pneg %p232
        %p371 = pneg %p256
        %p372 = pneg %p253
        %p373 = pneg %p282
        %p374 = pneg %p279
        %s375 = sand.u32 %s269, 1
        %s376 = scalar_lea.sflag [#allocation3], %s375
        %s377 = sand.u32 %s269, 1
        %s378 = scalar_lea.vmem [#allocation2], %s377
        %p379 = scmp.lt.s32.totalorder %s25, 1
        %s380 = scalar_select %p379, %s25, 1
        %s381 = smul.addr %s380, 112
        %s382 = smul.addr %s381, 4
        %s383 = scalar_lea.vmem %s0, %s382
        %v385 = vld [vmem:[%s383] sm:$0xff]
        %v386 = vld [vmem:[%s383 + $0x8] sm:$0xff]
        %v387 = vld [vmem:[%s383 + $0x10] sm:$0xff]
        %v388 = vld [vmem:[%s383 + $0x18] sm:$0xff]
        %v389 = vld [vmem:[%s383 + $0x20] sm:$0xff]
        %v390 = vld [vmem:[%s383 + $0x28] sm:$0xff]
        %v391 = vld [vmem:[%s383 + $0x30] sm:$0xff]
        %v392 = vld [vmem:[%s383 + $0x38] sm:$0xff]
        %v393 = vld [vmem:[%s383 + $0x40] sm:$0xff]
        %v394 = vld [vmem:[%s383 + $0x48] sm:$0xff]
        %v395 = vld [vmem:[%s383 + $0x50] sm:$0xff]
        %v396 = vld [vmem:[%s383 + $0x58] sm:$0xff]
        %v397 = vld [vmem:[%s383 + $0x60] sm:$0xff]
        %v398 = vld [vmem:[%s383 + $0x68] sm:$0xff]
        %v399 = vld [vmem:[%s383 + $0x70] sm:$0xff]
        %v400 = vld [vmem:[%s383 + $0x78] sm:$0xff]
        %v401 = vld [vmem:[%s383 + $0x80] sm:$0xff]
        %v402 = vld [vmem:[%s383 + $0x88] sm:$0xff]
        %v403 = vld [vmem:[%s383 + $0x90] sm:$0xff]
        %v404 = vld [vmem:[%s383 + $0x98] sm:$0xff]
        %v405 = vld [vmem:[%s383 + $0xa0] sm:$0xff]
        %v406 = vld [vmem:[%s383 + $0xa8] sm:$0xff]
        %v407 = vld [vmem:[%s383 + $0xb0] sm:$0xff]
        %v408 = vld [vmem:[%s383 + $0xb8] sm:$0xff]
        %v409 = vld [vmem:[%s383 + $0xc0] sm:$0xff]
        %v410 = vld [vmem:[%s383 + $0xc8] sm:$0xff]
        %v411 = vld [vmem:[%s383 + $0xd0] sm:$0xff]
        %v412 = vld [vmem:[%s383 + $0xd8] sm:$0xff]
        %v413 = vld [vmem:[%s383 + $0xe0] sm:$0xff]
        %v414 = vld [vmem:[%s383 + $0xe8] sm:$0xff]
        %v415 = vld [vmem:[%s383 + $0xf0] sm:$0xff]
        %v416 = vld [vmem:[%s383 + $0xf8] sm:$0xff]
        %v417 = vld [vmem:[%s383 + $0x100] sm:$0xff]
        %v418 = vld [vmem:[%s383 + $0x108] sm:$0xff]
        %v419 = vld [vmem:[%s383 + $0x110] sm:$0xff]
        %v420 = vld [vmem:[%s383 + $0x118] sm:$0xff]
        %v421 = vld [vmem:[%s383 + $0x120] sm:$0xff]
        %v422 = vld [vmem:[%s383 + $0x128] sm:$0xff]
        %v423 = vld [vmem:[%s383 + $0x130] sm:$0xff]
        %v424 = vld [vmem:[%s383 + $0x138] sm:$0xff]
        %v425 = vld [vmem:[%s383 + $0x140] sm:$0xff]
        %v426 = vld [vmem:[%s383 + $0x148] sm:$0xff]
        %v427 = vld [vmem:[%s383 + $0x150] sm:$0xff]
        %v428 = vld [vmem:[%s383 + $0x158] sm:$0xff]
        %v429 = vld [vmem:[%s383 + $0x160] sm:$0xff]
        %v430 = vld [vmem:[%s383 + $0x168] sm:$0xff]
        %v431 = vld [vmem:[%s383 + $0x170] sm:$0xff]
        %v432 = vld [vmem:[%s383 + $0x178] sm:$0xff]
        %v433 = vld [vmem:[%s383 + $0x180] sm:$0xff]
        %v434 = vld [vmem:[%s383 + $0x188] sm:$0xff]
        %v435 = vld [vmem:[%s383 + $0x190] sm:$0xff]
        %v436 = vld [vmem:[%s383 + $0x198] sm:$0xff]
        %v437 = vld [vmem:[%s383 + $0x1a0] sm:$0xff]
        %v438 = vld [vmem:[%s383 + $0x1a8] sm:$0xff]
        %v439 = vld [vmem:[%s383 + $0x1b0] sm:$0xff]
        %v440 = vld [vmem:[%s383 + $0x1b8] sm:$0xff]
        %v441 = vld [vmem:[%s1] sm:$0xf]
        %v442 = vld [vmem:[%s1 + $0x4] sm:$0xf]
        %v443 = vld [vmem:[%s1 + $0x8] sm:$0xf]
        %v444 = vld [vmem:[%s1 + $0xc] sm:$0xf]
        %v445 = vld [vmem:[%s1 + $0x10] sm:$0xf]
        %v446 = vld [vmem:[%s1 + $0x14] sm:$0xf]
        %v447 = vld [vmem:[%s1 + $0x18] sm:$0xf]
        %v448 = vld [vmem:[%s1 + $0x1c] sm:$0xf]
        %v449 = vld [vmem:[%s1 + $0x20] sm:$0xf]
        %v450 = vld [vmem:[%s1 + $0x24] sm:$0xf]
        %v451 = vld [vmem:[%s1 + $0x28] sm:$0xf]
        %v452 = vld [vmem:[%s1 + $0x2c] sm:$0xf]
        %v453 = vld [vmem:[%s1 + $0x30] sm:$0xf]
        %v454 = vld [vmem:[%s1 + $0x34] sm:$0xf]
        %v455 = vld [vmem:[%s1 + $0x38] sm:$0xf]
        %v456 = vld [vmem:[%s1 + $0x3c] sm:$0xf]
        %v457 = vld [vmem:[%s1 + $0x40] sm:$0xf]
        %v458 = vld [vmem:[%s1 + $0x44] sm:$0xf]
        %v459 = vld [vmem:[%s1 + $0x48] sm:$0xf]
        %v460 = vld [vmem:[%s1 + $0x4c] sm:$0xf]
        %v461 = vld [vmem:[%s1 + $0x50] sm:$0xf]
        %v462 = vld [vmem:[%s1 + $0x54] sm:$0xf]
        %v463 = vld [vmem:[%s1 + $0x58] sm:$0xf]
        %v464 = vld [vmem:[%s1 + $0x5c] sm:$0xf]
        %v465 = vld [vmem:[%s1 + $0x60] sm:$0xf]
        %v466 = vld [vmem:[%s1 + $0x64] sm:$0xf]
        %v467 = vld [vmem:[%s1 + $0x68] sm:$0xf]
        %v468 = vld [vmem:[%s1 + $0x6c] sm:$0xf]
        %v469 = vld [vmem:[%s1 + $0x70] sm:$0xf]
        %v470 = vld [vmem:[%s1 + $0x74] sm:$0xf]
        %v471 = vld [vmem:[%s1 + $0x78] sm:$0xf]
        %v472 = vld [vmem:[%s1 + $0x7c] sm:$0xf]
        %v473 = vld [vmem:[%s2] sm:$0x1]
        %v475 = vlaneseq
        %v476 = vshrl.u32 %v475, 7
        %v477 = vsub.s32 0, %v476
        %v478 = vrot.slane %v473, %v477
        %v536 = vunpack.c.l.b16 %v385
        %v537 = vunpack.c.h.b16 %v385
        %v538 = vunpack.c.l.b16 %v386
        %v539 = vunpack.c.h.b16 %v386
        %v540 = vunpack.c.l.b16 %v387
        %v541 = vunpack.c.h.b16 %v387
        %v542 = vunpack.c.l.b16 %v388
        %v543 = vunpack.c.h.b16 %v388
        %v544 = vunpack.c.l.b16 %v389
        %v545 = vunpack.c.h.b16 %v389
        %v546 = vunpack.c.l.b16 %v390
        %v547 = vunpack.c.h.b16 %v390
        %v548 = vunpack.c.l.b16 %v391
        %v549 = vunpack.c.h.b16 %v391
        %v550 = vunpack.c.l.b16 %v392
        %v551 = vunpack.c.h.b16 %v392
        %v552 = vunpack.c.l.b16 %v393
        %v553 = vunpack.c.h.b16 %v393
        %v554 = vunpack.c.l.b16 %v394
        %v555 = vunpack.c.h.b16 %v394
        %v556 = vunpack.c.l.b16 %v395
        %v557 = vunpack.c.h.b16 %v395
        %v558 = vunpack.c.l.b16 %v396
        %v559 = vunpack.c.h.b16 %v396
        %v560 = vunpack.c.l.b16 %v397
        %v561 = vunpack.c.h.b16 %v397
        %v562 = vunpack.c.l.b16 %v398
        %v563 = vunpack.c.h.b16 %v398
        %v564 = vunpack.c.l.b16 %v399
        %v565 = vunpack.c.h.b16 %v399
        %v566 = vunpack.c.l.b16 %v400
        %v567 = vunpack.c.h.b16 %v400
        %v568 = vunpack.c.l.b16 %v401
        %v569 = vunpack.c.h.b16 %v401
        %v570 = vunpack.c.l.b16 %v402
        %v571 = vunpack.c.h.b16 %v402
        %v572 = vunpack.c.l.b16 %v403
        %v573 = vunpack.c.h.b16 %v403
        %v574 = vunpack.c.l.b16 %v404
        %v575 = vunpack.c.h.b16 %v404
        %v576 = vunpack.c.l.b16 %v405
        %v577 = vunpack.c.h.b16 %v405
        %v578 = vunpack.c.l.b16 %v406
        %v579 = vunpack.c.h.b16 %v406
        %v580 = vunpack.c.l.b16 %v407
        %v581 = vunpack.c.h.b16 %v407
        %v582 = vunpack.c.l.b16 %v408
        %v583 = vunpack.c.h.b16 %v408
        %v584 = vunpack.c.l.b16 %v409
        %v585 = vunpack.c.h.b16 %v409
        %v586 = vunpack.c.l.b16 %v410
        %v587 = vunpack.c.h.b16 %v410
        %v588 = vunpack.c.l.b16 %v411
        %v589 = vunpack.c.h.b16 %v411
        %v590 = vunpack.c.l.b16 %v412
        %v591 = vunpack.c.h.b16 %v412
        %v592 = vunpack.c.l.b16 %v413
        %v593 = vunpack.c.h.b16 %v413
        %v594 = vunpack.c.l.b16 %v414
        %v595 = vunpack.c.h.b16 %v414
        %v596 = vunpack.c.l.b16 %v415
        %v597 = vunpack.c.h.b16 %v415
        %v598 = vunpack.c.l.b16 %v416
        %v599 = vunpack.c.h.b16 %v416
        %v600 = vunpack.c.l.b16 %v417
        %v601 = vunpack.c.h.b16 %v417
        %v602 = vunpack.c.l.b16 %v418
        %v603 = vunpack.c.h.b16 %v418
        %v604 = vunpack.c.l.b16 %v419
        %v605 = vunpack.c.h.b16 %v419
        %v606 = vunpack.c.l.b16 %v420
        %v607 = vunpack.c.h.b16 %v420
        %v608 = vunpack.c.l.b16 %v421
        %v609 = vunpack.c.h.b16 %v421
        %v610 = vunpack.c.l.b16 %v422
        %v611 = vunpack.c.h.b16 %v422
        %v612 = vunpack.c.l.b16 %v423
        %v613 = vunpack.c.h.b16 %v423
        %v614 = vunpack.c.l.b16 %v424
        %v615 = vunpack.c.h.b16 %v424
        %v616 = vunpack.c.l.b16 %v425
        %v617 = vunpack.c.h.b16 %v425
        %v618 = vunpack.c.l.b16 %v426
        %v619 = vunpack.c.h.b16 %v426
        %v620 = vunpack.c.l.b16 %v427
        %v621 = vunpack.c.h.b16 %v427
        %v622 = vunpack.c.l.b16 %v428
        %v623 = vunpack.c.h.b16 %v428
        %v624 = vunpack.c.l.b16 %v429
        %v625 = vunpack.c.h.b16 %v429
        %v626 = vunpack.c.l.b16 %v430
        %v627 = vunpack.c.h.b16 %v430
        %v628 = vunpack.c.l.b16 %v431
        %v629 = vunpack.c.h.b16 %v431
        %v630 = vunpack.c.l.b16 %v432
        %v631 = vunpack.c.h.b16 %v432
        %v632 = vunpack.c.l.b16 %v433
        %v633 = vunpack.c.h.b16 %v433
        %v634 = vunpack.c.l.b16 %v434
        %v635 = vunpack.c.h.b16 %v434
        %v636 = vunpack.c.l.b16 %v435
        %v637 = vunpack.c.h.b16 %v435
        %v638 = vunpack.c.l.b16 %v436
        %v639 = vunpack.c.h.b16 %v436
        %v640 = vunpack.c.l.b16 %v437
        %v641 = vunpack.c.h.b16 %v437
        %v642 = vunpack.c.l.b16 %v438
        %v643 = vunpack.c.h.b16 %v438
        %v644 = vunpack.c.l.b16 %v439
        %v645 = vunpack.c.h.b16 %v439
        %v646 = vunpack.c.l.b16 %v440
        %v647 = vunpack.c.h.b16 %v440
        %v648 = vpack.c.b16 %v538, %v536
        %v649 = vpack.c.b16 %v539, %v537
        %v650 = vpack.c.b16 %v542, %v540
        %v651 = vpack.c.b16 %v543, %v541
        %v652 = vpack.c.b16 %v546, %v544
        %v653 = vpack.c.b16 %v547, %v545
        %v654 = vpack.c.b16 %v550, %v548
        %v655 = vpack.c.b16 %v551, %v549
        %v656 = vpack.c.b16 %v554, %v552
        %v657 = vpack.c.b16 %v555, %v553
        %v658 = vpack.c.b16 %v558, %v556
        %v659 = vpack.c.b16 %v559, %v557
        %v660 = vpack.c.b16 %v562, %v560
        %v661 = vpack.c.b16 %v563, %v561
        %v662 = vpack.c.b16 %v566, %v564
        %v663 = vpack.c.b16 %v567, %v565
        %v664 = vpack.c.b16 %v570, %v568
        %v665 = vpack.c.b16 %v571, %v569
        %v666 = vpack.c.b16 %v574, %v572
        %v667 = vpack.c.b16 %v575, %v573
        %v668 = vpack.c.b16 %v578, %v576
        %v669 = vpack.c.b16 %v579, %v577
        %v670 = vpack.c.b16 %v582, %v580
        %v671 = vpack.c.b16 %v583, %v581
        %v672 = vpack.c.b16 %v586, %v584
        %v673 = vpack.c.b16 %v587, %v585
        %v674 = vpack.c.b16 %v590, %v588
        %v675 = vpack.c.b16 %v591, %v589
        %v676 = vpack.c.b16 %v594, %v592
        %v677 = vpack.c.b16 %v595, %v593
        %v678 = vpack.c.b16 %v598, %v596
        %v679 = vpack.c.b16 %v599, %v597
        %v680 = vpack.c.b16 %v602, %v600
        %v681 = vpack.c.b16 %v603, %v601
        %v682 = vpack.c.b16 %v606, %v604
        %v683 = vpack.c.b16 %v607, %v605
        %v684 = vpack.c.b16 %v610, %v608
        %v685 = vpack.c.b16 %v611, %v609
        %v686 = vpack.c.b16 %v614, %v612
        %v687 = vpack.c.b16 %v615, %v613
        %v688 = vpack.c.b16 %v618, %v616
        %v689 = vpack.c.b16 %v619, %v617
        %v690 = vpack.c.b16 %v622, %v620
        %v691 = vpack.c.b16 %v623, %v621
        %v692 = vpack.c.b16 %v626, %v624
        %v693 = vpack.c.b16 %v627, %v625
        %v694 = vpack.c.b16 %v630, %v628
        %v695 = vpack.c.b16 %v631, %v629
        %v696 = vpack.c.b16 %v634, %v632
        %v697 = vpack.c.b16 %v635, %v633
        %v698 = vpack.c.b16 %v638, %v636
        %v699 = vpack.c.b16 %v639, %v637
        %v700 = vpack.c.b16 %v642, %v640
        %v701 = vpack.c.b16 %v643, %v641
        %v702 = vpack.c.b16 %v646, %v644
        %v703 = vpack.c.b16 %v647, %v645
        %v792 = vunpack.c.l.b16 %v441
        %v793 = vunpack.c.l.b16 %v442
        %v794 = vunpack.c.l.b16 %v443
        %v795 = vunpack.c.l.b16 %v444
        %v796 = vunpack.c.l.b16 %v445
        %v797 = vunpack.c.l.b16 %v446
        %v798 = vunpack.c.l.b16 %v447
        %v799 = vunpack.c.l.b16 %v448
        %v800 = vunpack.c.l.b16 %v449
        %v801 = vunpack.c.l.b16 %v450
        %v802 = vunpack.c.l.b16 %v451
        %v803 = vunpack.c.l.b16 %v452
        %v804 = vunpack.c.l.b16 %v453
        %v805 = vunpack.c.l.b16 %v454
        %v806 = vunpack.c.l.b16 %v455
        %v807 = vunpack.c.l.b16 %v456
        %v808 = vunpack.c.l.b16 %v457
        %v809 = vunpack.c.l.b16 %v458
        %v810 = vunpack.c.l.b16 %v459
        %v811 = vunpack.c.l.b16 %v460
        %v812 = vunpack.c.l.b16 %v461
        %v813 = vunpack.c.l.b16 %v462
        %v814 = vunpack.c.l.b16 %v463
        %v815 = vunpack.c.l.b16 %v464
        %v816 = vunpack.c.l.b16 %v465
        %v817 = vunpack.c.l.b16 %v466
        %v818 = vunpack.c.l.b16 %v467
        %v819 = vunpack.c.l.b16 %v468
        %v820 = vunpack.c.l.b16 %v469
        %v821 = vunpack.c.l.b16 %v470
        %v822 = vunpack.c.l.b16 %v471
        %v823 = vunpack.c.l.b16 %v472
        %v824 = vpack.c.b16 %v793, %v792
        %v825 = vpack.c.b16 %v795, %v794
        %v826 = vpack.c.b16 %v797, %v796
        %v827 = vpack.c.b16 %v799, %v798
        %v828 = vpack.c.b16 %v801, %v800
        %v829 = vpack.c.b16 %v803, %v802
        %v830 = vpack.c.b16 %v805, %v804
        %v831 = vpack.c.b16 %v807, %v806
        %v832 = vpack.c.b16 %v809, %v808
        %v833 = vpack.c.b16 %v811, %v810
        %v834 = vpack.c.b16 %v813, %v812
        %v835 = vpack.c.b16 %v815, %v814
        %v836 = vpack.c.b16 %v817, %v816
        %v837 = vpack.c.b16 %v819, %v818
        %v838 = vpack.c.b16 %v821, %v820
        %v839 = vpack.c.b16 %v823, %v822
        %856 = vmatprep.subr.bf16.mxu0 0
        %857 = vmatpush1.bf16.msra.mxu0 %v824
        %858 = vmatprep.subr.bf16.mxu0 0
        %859 = vmatpush1.bf16.msra.mxu0 %v825
        %860 = vmatprep.subr.bf16.mxu0 0
        %861 = vmatpush1.bf16.msra.mxu0 %v826
        %862 = vmatprep.subr.bf16.mxu0 0
        %863 = vmatpush1.bf16.msra.mxu0 %v827
        %864 = vmatprep.subr.bf16.mxu0 0
        %865 = vmatpush1.bf16.msra.mxu0 %v828
        %866 = vmatprep.subr.bf16.mxu0 0
        %867 = vmatpush1.bf16.msra.mxu0 %v829
        %868 = vmatprep.subr.bf16.mxu0 0
        %869 = vmatpush1.bf16.msra.mxu0 %v830
        %870 = vmatprep.subr.bf16.mxu0 0
        %871 = vmatpush1.bf16.msra.mxu0 %v831
        %872 = vmatprep.subr.bf16.mxu0 0
        %873 = vmatpush1.bf16.msra.mxu0 %v832
        %874 = vmatprep.subr.bf16.mxu0 0
        %875 = vmatpush1.bf16.msra.mxu0 %v833
        %876 = vmatprep.subr.bf16.mxu0 0
        %877 = vmatpush1.bf16.msra.mxu0 %v834
        %878 = vmatprep.subr.bf16.mxu0 0
        %879 = vmatpush1.bf16.msra.mxu0 %v835
        %880 = vmatprep.subr.bf16.mxu0 0
        %881 = vmatpush1.bf16.msra.mxu0 %v836
        %882 = vmatprep.subr.bf16.mxu0 0
        %883 = vmatpush1.bf16.msra.mxu0 %v837
        %884 = vmatprep.subr.bf16.mxu0 0
        %885 = vmatpush1.bf16.msra.mxu0 %v838
        %886 = vmatprep.subr.bf16.mxu0 0
        %887 = vmatpush1.bf16.msra.mxu0 %v839
        %888 = vmatprep.mubr.bf16.mxu0 %v649
        %889 = vmatmul.mubr.bf16.gmra.mrb[0].mxu0 %v648
        %v890 = vpop.f32.mrb[0].mxu0
        %v891 = vadd.f32 %v478, %v890
        %v892 = vpop.f32.mrb[0].mxu0
        %v893 = vpop.f32.mrb[0].mxu0
        %v894 = vadd.f32 %v478, %v893
        %v895 = vpop.f32.mrb[0].mxu0
        %896 = vmatprep.mubr.bf16.mxu0 %v651
        %897 = vmatmul.mubr.bf16.gmra.mrb[0].mxu0 %v650
        %v898 = vpop.f32.mrb[0].mxu0
        %v899 = vadd.f32 %v478, %v898
        %v900 = vpop.f32.mrb[0].mxu0
        %v901 = vpop.f32.mrb[0].mxu0
        %v902 = vadd.f32 %v478, %v901
        %v903 = vpop.f32.mrb[0].mxu0
        %904 = vmatprep.mubr.bf16.mxu0 %v653
        %905 = vmatmul.mubr.bf16.gmra.mrb[0].mxu0 %v652
        %v906 = vpop.f32.mrb[0].mxu0
        %v907 = vadd.f32 %v478, %v906
        %v908 = vpop.f32.mrb[0].mxu0
        %v909 = vpop.f32.mrb[0].mxu0
        %v910 = vadd.f32 %v478, %v909
        %v911 = vpop.f32.mrb[0].mxu0
        %912 = vmatprep.mubr.bf16.mxu0 %v655
        %913 = vmatmul.mubr.bf16.gmra.mrb[0].mxu0 %v654
        %v914 = vpop.f32.mrb[0].mxu0
        %v915 = vadd.f32 %v478, %v914
        %v916 = vpop.f32.mrb[0].mxu0
        %v917 = vpop.f32.mrb[0].mxu0
        %v918 = vadd.f32 %v478, %v917
        %v919 = vpop.f32.mrb[0].mxu0
        %920 = vmatprep.mubr.bf16.mxu0 %v657
        %921 = vmatmul.mubr.bf16.gmra.mrb[0].mxu0 %v656
        %v922 = vpop.f32.mrb[0].mxu0
        %v923 = vadd.f32 %v478, %v922
        %v924 = vpop.f32.mrb[0].mxu0
        %v925 = vpop.f32.mrb[0].mxu0
        %v926 = vadd.f32 %v478, %v925
        %v927 = vpop.f32.mrb[0].mxu0
        %928 = vmatprep.mubr.bf16.mxu0 %v659
        %929 = vmatmul.mubr.bf16.gmra.mrb[0].mxu0 %v658
        %v930 = vpop.f32.mrb[0].mxu0
        %v931 = vadd.f32 %v478, %v930
        %v932 = vpop.f32.mrb[0].mxu0
        %v933 = vpop.f32.mrb[0].mxu0
        %v934 = vadd.f32 %v478, %v933
        %v935 = vpop.f32.mrb[0].mxu0
        %936 = vmatprep.mubr.bf16.mxu0 %v661
        %937 = vmatmul.mubr.bf16.gmra.mrb[0].mxu0 %v660
        %v938 = vpop.f32.mrb[0].mxu0
        %v939 = vadd.f32 %v478, %v938
        %v940 = vpop.f32.mrb[0].mxu0
        %v941 = vpop.f32.mrb[0].mxu0
        %v942 = vadd.f32 %v478, %v941
        %v943 = vpop.f32.mrb[0].mxu0
        %944 = vmatprep.mubr.bf16.mxu0 %v663
        %945 = vmatmul.mubr.bf16.gmra.mrb[0].mxu0 %v662
        %v946 = vpop.f32.mrb[0].mxu0
        %v947 = vadd.f32 %v478, %v946
        %v948 = vpop.f32.mrb[0].mxu0
        %v949 = vpop.f32.mrb[0].mxu0
        %v950 = vadd.f32 %v478, %v949
        %v951 = vpop.f32.mrb[0].mxu0
        %952 = vmatprep.mubr.bf16.mxu0 %v665
        %953 = vmatmul.mubr.bf16.gmra.mrb[0].mxu0 %v664
        %v954 = vpop.f32.mrb[0].mxu0
        %v955 = vadd.f32 %v478, %v954
        %v956 = vpop.f32.mrb[0].mxu0
        %v957 = vpop.f32.mrb[0].mxu0
        %v958 = vadd.f32 %v478, %v957
        %v959 = vpop.f32.mrb[0].mxu0
        %960 = vmatprep.mubr.bf16.mxu0 %v667
        %961 = vmatmul.mubr.bf16.gmra.mrb[0].mxu0 %v666
        %v962 = vpop.f32.mrb[0].mxu0
        %v963 = vadd.f32 %v478, %v962
        %v964 = vpop.f32.mrb[0].mxu0
        %v965 = vpop.f32.mrb[0].mxu0
        %v966 = vadd.f32 %v478, %v965
        %v967 = vpop.f32.mrb[0].mxu0
        %968 = vmatprep.mubr.bf16.mxu0 %v669
        %969 = vmatmul.mubr.bf16.gmra.mrb[0].mxu0 %v668
        %v970 = vpop.f32.mrb[0].mxu0
        %v971 = vadd.f32 %v478, %v970
        %v972 = vpop.f32.mrb[0].mxu0
        %v973 = vpop.f32.mrb[0].mxu0
        %v974 = vadd.f32 %v478, %v973
        %v975 = vpop.f32.mrb[0].mxu0
        %976 = vmatprep.mubr.bf16.mxu0 %v671
        %977 = vmatmul.mubr.bf16.gmra.mrb[0].mxu0 %v670
        %v978 = vpop.f32.mrb[0].mxu0
        %v979 = vadd.f32 %v478, %v978
        %v980 = vpop.f32.mrb[0].mxu0
        %v981 = vpop.f32.mrb[0].mxu0
        %v982 = vadd.f32 %v478, %v981
        %v983 = vpop.f32.mrb[0].mxu0
        %984 = vmatprep.mubr.bf16.mxu0 %v673
        %985 = vmatmul.mubr.bf16.gmra.mrb[0].mxu0 %v672
        %v986 = vpop.f32.mrb[0].mxu0
        %v987 = vadd.f32 %v478, %v986
        %v988 = vpop.f32.mrb[0].mxu0
        %v989 = vpop.f32.mrb[0].mxu0
        %v990 = vadd.f32 %v478, %v989
        %v991 = vpop.f32.mrb[0].mxu0
        %992 = vmatprep.mubr.bf16.mxu0 %v675
        %993 = vmatmul.mubr.bf16.gmra.mrb[0].mxu0 %v674
        %v994 = vpop.f32.mrb[0].mxu0
        %v995 = vadd.f32 %v478, %v994
        %v996 = vpop.f32.mrb[0].mxu0
        %v997 = vpop.f32.mrb[0].mxu0
        %v998 = vadd.f32 %v478, %v997
        %v999 = vpop.f32.mrb[0].mxu0
        %1000 = vmatprep.mubr.bf16.mxu0 %v677
        %1001 = vmatmul.mubr.bf16.gmra.mrb[0].mxu0 %v676
        %v1002 = vpop.f32.mrb[0].mxu0
        %v1003 = vadd.f32 %v478, %v1002
        %v1004 = vpop.f32.mrb[0].mxu0
        %v1005 = vpop.f32.mrb[0].mxu0
        %v1006 = vadd.f32 %v478, %v1005
        %v1007 = vpop.f32.mrb[0].mxu0
        %1008 = vmatprep.mubr.bf16.mxu0 %v679
        %1009 = vmatmul.mubr.bf16.gmra.mrb[0].mxu0 %v678
        %v1010 = vpop.f32.mrb[0].mxu0
        %v1011 = vadd.f32 %v478, %v1010
        %v1012 = vpop.f32.mrb[0].mxu0
        %v1013 = vpop.f32.mrb[0].mxu0
        %v1014 = vadd.f32 %v478, %v1013
        %v1015 = vpop.f32.mrb[0].mxu0
        %1016 = vmatprep.mubr.bf16.mxu0 %v681
        %1017 = vmatmul.mubr.bf16.gmra.mrb[0].mxu0 %v680
        %v1018 = vpop.f32.mrb[0].mxu0
        %v1019 = vadd.f32 %v478, %v1018
        %v1020 = vpop.f32.mrb[0].mxu0
        %v1021 = vpop.f32.mrb[0].mxu0
        %v1022 = vadd.f32 %v478, %v1021
        %v1023 = vpop.f32.mrb[0].mxu0
        %1024 = vmatprep.mubr.bf16.mxu0 %v683
        %1025 = vmatmul.mubr.bf16.gmra.mrb[0].mxu0 %v682
        %v1026 = vpop.f32.mrb[0].mxu0
        %v1027 = vadd.f32 %v478, %v1026
        %v1028 = vpop.f32.mrb[0].mxu0
        %v1029 = vpop.f32.mrb[0].mxu0
        %v1030 = vadd.f32 %v478, %v1029
        %v1031 = vpop.f32.mrb[0].mxu0
        %1032 = vmatprep.mubr.bf16.mxu0 %v685
        %1033 = vmatmul.mubr.bf16.gmra.mrb[0].mxu0 %v684
        %v1034 = vpop.f32.mrb[0].mxu0
        %v1035 = vadd.f32 %v478, %v1034
        %v1036 = vpop.f32.mrb[0].mxu0
        %v1037 = vpop.f32.mrb[0].mxu0
        %v1038 = vadd.f32 %v478, %v1037
        %v1039 = vpop.f32.mrb[0].mxu0
        %1040 = vmatprep.mubr.bf16.mxu0 %v687
        %1041 = vmatmul.mubr.bf16.gmra.mrb[0].mxu0 %v686
        %v1042 = vpop.f32.mrb[0].mxu0
        %v1043 = vadd.f32 %v478, %v1042
        %v1044 = vpop.f32.mrb[0].mxu0
        %v1045 = vpop.f32.mrb[0].mxu0
        %v1046 = vadd.f32 %v478, %v1045
        %v1047 = vpop.f32.mrb[0].mxu0
        %1048 = vmatprep.mubr.bf16.mxu0 %v689
        %1049 = vmatmul.mubr.bf16.gmra.mrb[0].mxu0 %v688
        %v1050 = vpop.f32.mrb[0].mxu0
        %v1051 = vadd.f32 %v478, %v1050
        %v1052 = vpop.f32.mrb[0].mxu0
        %v1053 = vpop.f32.mrb[0].mxu0
        %v1054 = vadd.f32 %v478, %v1053
        %v1055 = vpop.f32.mrb[0].mxu0
        %1056 = vmatprep.mubr.bf16.mxu0 %v691
        %1057 = vmatmul.mubr.bf16.gmra.mrb[0].mxu0 %v690
        %v1058 = vpop.f32.mrb[0].mxu0
        %v1059 = vadd.f32 %v478, %v1058
        %v1060 = vpop.f32.mrb[0].mxu0
        %v1061 = vpop.f32.mrb[0].mxu0
        %v1062 = vadd.f32 %v478, %v1061
        %v1063 = vpop.f32.mrb[0].mxu0
        %1064 = vmatprep.mubr.bf16.mxu0 %v693
        %1065 = vmatmul.mubr.bf16.gmra.mrb[0].mxu0 %v692
        %v1066 = vpop.f32.mrb[0].mxu0
        %v1067 = vadd.f32 %v478, %v1066
        %v1068 = vpop.f32.mrb[0].mxu0
        %v1069 = vpop.f32.mrb[0].mxu0
        %v1070 = vadd.f32 %v478, %v1069
        %v1071 = vpop.f32.mrb[0].mxu0
        %1072 = vmatprep.mubr.bf16.mxu0 %v695
        %1073 = vmatmul.mubr.bf16.gmra.mrb[0].mxu0 %v694
        %v1074 = vpop.f32.mrb[0].mxu0
        %v1075 = vadd.f32 %v478, %v1074
        %v1076 = vpop.f32.mrb[0].mxu0
        %v1077 = vpop.f32.mrb[0].mxu0
        %v1078 = vadd.f32 %v478, %v1077
        %v1079 = vpop.f32.mrb[0].mxu0
        %1080 = vmatprep.mubr.bf16.mxu0 %v697
        %1081 = vmatmul.mubr.bf16.gmra.mrb[0].mxu0 %v696
        %v1082 = vpop.f32.mrb[0].mxu0
        %v1083 = vadd.f32 %v478, %v1082
        %v1084 = vpop.f32.mrb[0].mxu0
        %v1085 = vpop.f32.mrb[0].mxu0
        %v1086 = vadd.f32 %v478, %v1085
        %v1087 = vpop.f32.mrb[0].mxu0
        %1088 = vmatprep.mubr.bf16.mxu0 %v699
        %1089 = vmatmul.mubr.bf16.gmra.mrb[0].mxu0 %v698
        %v1090 = vpop.f32.mrb[0].mxu0
        %v1091 = vadd.f32 %v478, %v1090
        %v1092 = vpop.f32.mrb[0].mxu0
        %v1093 = vpop.f32.mrb[0].mxu0
        %v1094 = vadd.f32 %v478, %v1093
        %v1095 = vpop.f32.mrb[0].mxu0
        %1096 = vmatprep.mubr.bf16.mxu0 %v701
        %1097 = vmatmul.mubr.bf16.gmra.mrb[0].mxu0 %v700
        %v1098 = vpop.f32.mrb[0].mxu0
        %v1099 = vadd.f32 %v478, %v1098
        %v1100 = vpop.f32.mrb[0].mxu0
        %v1101 = vpop.f32.mrb[0].mxu0
        %v1102 = vadd.f32 %v478, %v1101
        %v1103 = vpop.f32.mrb[0].mxu0
        %1104 = vmatprep.mubr.bf16.mxu0 %v703
        %1105 = vmatmul.mubr.bf16.gmra.mrb[0].mxu0 %v702
        %v1106 = vpop.f32.mrb[0].mxu0
        %v1107 = vadd.f32 %v478, %v1106
        %v1108 = vpop.f32.mrb[0].mxu0
        %v1109 = vpop.f32.mrb[0].mxu0
        %v1110 = vadd.f32 %v478, %v1109
        %v1111 = vpop.f32.mrb[0].mxu0
        %1112 = vdwg.mxu0
        %v1113 = vmax.f32 %v891, 0.0
        %v1114 = vmax.f32 %v894, 0.0
        %v1115 = vmax.f32 %v899, 0.0
        %v1116 = vmax.f32 %v902, 0.0
        %v1117 = vmax.f32 %v907, 0.0
        %v1118 = vmax.f32 %v910, 0.0
        %v1119 = vmax.f32 %v915, 0.0
        %v1120 = vmax.f32 %v918, 0.0
        %v1121 = vmax.f32 %v923, 0.0
        %v1122 = vmax.f32 %v926, 0.0
        %v1123 = vmax.f32 %v931, 0.0
        %v1124 = vmax.f32 %v934, 0.0
        %v1125 = vmax.f32 %v939, 0.0
        %v1126 = vmax.f32 %v942, 0.0
        %v1127 = vmax.f32 %v947, 0.0
        %v1128 = vmax.f32 %v950, 0.0
        %v1129 = vmax.f32 %v955, 0.0
        %v1130 = vmax.f32 %v958, 0.0
        %v1131 = vmax.f32 %v963, 0.0
        %v1132 = vmax.f32 %v966, 0.0
        %v1133 = vmax.f32 %v971, 0.0
        %v1134 = vmax.f32 %v974, 0.0
        %v1135 = vmax.f32 %v979, 0.0
        %v1136 = vmax.f32 %v982, 0.0
        %v1137 = vmax.f32 %v987, 0.0
        %v1138 = vmax.f32 %v990, 0.0
        %v1139 = vmax.f32 %v995, 0.0
        %v1140 = vmax.f32 %v998, 0.0
        %v1141 = vmax.f32 %v1003, 0.0
        %v1142 = vmax.f32 %v1006, 0.0
        %v1143 = vmax.f32 %v1011, 0.0
        %v1144 = vmax.f32 %v1014, 0.0
        %v1145 = vmax.f32 %v1019, 0.0
        %v1146 = vmax.f32 %v1022, 0.0
        %v1147 = vmax.f32 %v1027, 0.0
        %v1148 = vmax.f32 %v1030, 0.0
        %v1149 = vmax.f32 %v1035, 0.0
        %v1150 = vmax.f32 %v1038, 0.0
        %v1151 = vmax.f32 %v1043, 0.0
        %v1152 = vmax.f32 %v1046, 0.0
        %v1153 = vmax.f32 %v1051, 0.0
        %v1154 = vmax.f32 %v1054, 0.0
        %v1155 = vmax.f32 %v1059, 0.0
        %v1156 = vmax.f32 %v1062, 0.0
        %v1157 = vmax.f32 %v1067, 0.0
        %v1158 = vmax.f32 %v1070, 0.0
        %v1159 = vmax.f32 %v1075, 0.0
        %v1160 = vmax.f32 %v1078, 0.0
        %v1161 = vmax.f32 %v1083, 0.0
        %v1162 = vmax.f32 %v1086, 0.0
        %v1163 = vmax.f32 %v1091, 0.0
        %v1164 = vmax.f32 %v1094, 0.0
        %v1165 = vmax.f32 %v1099, 0.0
        %v1166 = vmax.f32 %v1102, 0.0
        %v1167 = vmax.f32 %v1107, 0.0
        %v1168 = vmax.f32 %v1110, 0.0
        %v1169 = vpack.c.bf16 %v1114, %v1113
        %v1170 = vpack.c.bf16 %v1116, %v1115
        %v1171 = vpack.c.bf16 %v1118, %v1117
        %v1172 = vpack.c.bf16 %v1120, %v1119
        %v1173 = vpack.c.bf16 %v1122, %v1121
        %v1174 = vpack.c.bf16 %v1124, %v1123
        %v1175 = vpack.c.bf16 %v1126, %v1125
        %v1176 = vpack.c.bf16 %v1128, %v1127
        %v1177 = vpack.c.bf16 %v1130, %v1129
        %v1178 = vpack.c.bf16 %v1132, %v1131
        %v1179 = vpack.c.bf16 %v1134, %v1133
        %v1180 = vpack.c.bf16 %v1136, %v1135
        %v1181 = vpack.c.bf16 %v1138, %v1137
        %v1182 = vpack.c.bf16 %v1140, %v1139
        %v1183 = vpack.c.bf16 %v1142, %v1141
        %v1184 = vpack.c.bf16 %v1144, %v1143
        %v1185 = vpack.c.bf16 %v1146, %v1145
        %v1186 = vpack.c.bf16 %v1148, %v1147
        %v1187 = vpack.c.bf16 %v1150, %v1149
        %v1188 = vpack.c.bf16 %v1152, %v1151
        %v1189 = vpack.c.bf16 %v1154, %v1153
        %v1190 = vpack.c.bf16 %v1156, %v1155
        %v1191 = vpack.c.bf16 %v1158, %v1157
        %v1192 = vpack.c.bf16 %v1160, %v1159
        %v1193 = vpack.c.bf16 %v1162, %v1161
        %v1194 = vpack.c.bf16 %v1164, %v1163
        %v1195 = vpack.c.bf16 %v1166, %v1165
        %v1196 = vpack.c.bf16 %v1168, %v1167
        %1204 = vrot.lane.b32.xlu0 %v1176, 32
        %v1205 = vpop.permute.xlu0 %1204
        %1206 = vrot.lane.b32.xlu0 %v1177, 32
        %v1207 = vpop.permute.xlu0 %1206
        %1208 = vrot.lane.b32.xlu0 %v1178, 32
        %v1209 = vpop.permute.xlu0 %1208
        %1210 = vrot.lane.b32.xlu0 %v1179, 32
        %v1211 = vpop.permute.xlu0 %1210
        %1212 = vrot.lane.b32.xlu0 %v1180, 32
        %v1213 = vpop.permute.xlu0 %1212
        %1214 = vrot.lane.b32.xlu0 %v1181, 32
        %v1215 = vpop.permute.xlu0 %1214
        %1216 = vrot.lane.b32.xlu0 %v1182, 32
        %v1217 = vpop.permute.xlu0 %1216
        %vm1218 = vsmask.f32 7424
        %v1220 = vshrl.u32 %v1169, 16
        %v1222 = vshll.u32 %v1169, 16
        %v1224 = vrot.slane %v1222, 1
        %v1225 = vor.u32 %v1220, %v1224
        %v1227 = vshll.u32 %v1170, 16
        %v1229 = vrot.slane %v1227, 1
        %v1230 = vsel %vm1218, %v1225, %v1229
        %v1231 = vshrl.u32 %v1170, 16
        %v1233 = vor.u32 %v1231, %v1229
        %v1235 = vshll.u32 %v1171, 16
        %v1237 = vrot.slane %v1235, 1
        %v1238 = vsel %vm1218, %v1233, %v1237
        %v1239 = vshrl.u32 %v1171, 16
        %v1241 = vor.u32 %v1239, %v1237
        %v1243 = vshll.u32 %v1172, 16
        %v1245 = vrot.slane %v1243, 1
        %v1246 = vsel %vm1218, %v1241, %v1245
        %v1247 = vshrl.u32 %v1172, 16
        %v1249 = vor.u32 %v1247, %v1245
        %v1251 = vshll.u32 %v1173, 16
        %v1253 = vrot.slane %v1251, 1
        %v1254 = vsel %vm1218, %v1249, %v1253
        %v1255 = vshrl.u32 %v1173, 16
        %v1257 = vor.u32 %v1255, %v1253
        %v1259 = vshll.u32 %v1174, 16
        %v1261 = vrot.slane %v1259, 1
        %v1262 = vsel %vm1218, %v1257, %v1261
        %v1263 = vshrl.u32 %v1174, 16
        %v1265 = vor.u32 %v1263, %v1261
        %v1267 = vshll.u32 %v1175, 16
        %v1269 = vrot.slane %v1267, 1
        %v1270 = vsel %vm1218, %v1265, %v1269
        %v1271 = vshrl.u32 %v1175, 16
        %v1273 = vor.u32 %v1271, %v1269
        %1274 = vrot.lane.b32.xlu0 %v1230, 64
        %v1275 = vpop.permute.xlu0 %1274
        %1276 = vrot.lane.b32.xlu0 %v1238, 64
        %v1277 = vpop.permute.xlu0 %1276
        %1278 = vrot.lane.b32.xlu0 %v1246, 64
        %v1279 = vpop.permute.xlu0 %1278
        %1280 = vrot.lane.b32.xlu0 %v1254, 64
        %v1281 = vpop.permute.xlu0 %1280
        %1282 = vrot.lane.b32.xlu0 %v1262, 64
        %v1283 = vpop.permute.xlu0 %1282
        %1284 = vrot.lane.b32.xlu0 %v1270, 64
        %v1285 = vpop.permute.xlu0 %1284
        %1286 = vrot.lane.b32.xlu0 %v1273, 64
        %v1287 = vpop.permute.xlu0 %1286
        %v1289 = vshrl.u32 %v1176, 16
        %v1291 = vshll.u32 %v1176, 16
        %v1293 = vrot.slane %v1291, 1
        %v1294 = vor.u32 %v1289, %v1293
        %v1296 = vshll.u32 %v1177, 16
        %v1298 = vrot.slane %v1296, 1
        %v1299 = vsel %vm1218, %v1294, %v1298
        %v1300 = vshrl.u32 %v1177, 16
        %v1302 = vor.u32 %v1300, %v1298
        %v1304 = vshll.u32 %v1178, 16
        %v1306 = vrot.slane %v1304, 1
        %v1307 = vsel %vm1218, %v1302, %v1306
        %v1308 = vshrl.u32 %v1178, 16
        %v1310 = vor.u32 %v1308, %v1306
        %v1312 = vshll.u32 %v1179, 16
        %v1314 = vrot.slane %v1312, 1
        %v1315 = vsel %vm1218, %v1310, %v1314
        %v1316 = vshrl.u32 %v1179, 16
        %v1318 = vor.u32 %v1316, %v1314
        %v1320 = vshll.u32 %v1180, 16
        %v1322 = vrot.slane %v1320, 1
        %v1323 = vsel %vm1218, %v1318, %v1322
        %v1324 = vshrl.u32 %v1180, 16
        %v1326 = vor.u32 %v1324, %v1322
        %v1328 = vshll.u32 %v1181, 16
        %v1330 = vrot.slane %v1328, 1
        %v1331 = vsel %vm1218, %v1326, %v1330
        %v1332 = vshrl.u32 %v1181, 16
        %v1334 = vor.u32 %v1332, %v1330
        %v1336 = vshll.u32 %v1182, 16
        %v1338 = vrot.slane %v1336, 1
        %v1339 = vsel %vm1218, %v1334, %v1338
        %v1340 = vshrl.u32 %v1182, 16
        %v1342 = vor.u32 %v1340, %v1338
        %1343 = vrot.lane.b32.xlu0 %v1299, 96
        %v1344 = vpop.permute.xlu0 %1343
        %1345 = vrot.lane.b32.xlu0 %v1307, 96
        %v1346 = vpop.permute.xlu0 %1345
        %1347 = vrot.lane.b32.xlu0 %v1315, 96
        %v1348 = vpop.permute.xlu0 %1347
        %1349 = vrot.lane.b32.xlu0 %v1323, 96
        %v1350 = vpop.permute.xlu0 %1349
        %1351 = vrot.lane.b32.xlu0 %v1331, 96
        %v1352 = vpop.permute.xlu0 %1351
        %1353 = vrot.lane.b32.xlu0 %v1339, 96
        %v1354 = vpop.permute.xlu0 %1353
        %1355 = vrot.lane.b32.xlu0 %v1342, 96
        %v1356 = vpop.permute.xlu0 %1355
        %1364 = vrot.lane.b32.xlu0 %v1190, 32
        %v1365 = vpop.permute.xlu0 %1364
        %1366 = vrot.lane.b32.xlu0 %v1191, 32
        %v1367 = vpop.permute.xlu0 %1366
        %1368 = vrot.lane.b32.xlu0 %v1192, 32
        %v1369 = vpop.permute.xlu0 %1368
        %1370 = vrot.lane.b32.xlu0 %v1193, 32
        %v1371 = vpop.permute.xlu0 %1370
        %1372 = vrot.lane.b32.xlu0 %v1194, 32
        %v1373 = vpop.permute.xlu0 %1372
        %1374 = vrot.lane.b32.xlu0 %v1195, 32
        %v1375 = vpop.permute.xlu0 %1374
        %1376 = vrot.lane.b32.xlu0 %v1196, 32
        %v1377 = vpop.permute.xlu0 %1376
        %v1379 = vshrl.u32 %v1183, 16
        %v1381 = vshll.u32 %v1183, 16
        %v1383 = vrot.slane %v1381, 1
        %v1384 = vor.u32 %v1379, %v1383
        %v1386 = vshll.u32 %v1184, 16
        %v1388 = vrot.slane %v1386, 1
        %v1389 = vsel %vm1218, %v1384, %v1388
        %v1390 = vshrl.u32 %v1184, 16
        %v1392 = vor.u32 %v1390, %v1388
        %v1394 = vshll.u32 %v1185, 16
        %v1396 = vrot.slane %v1394, 1
        %v1397 = vsel %vm1218, %v1392, %v1396
        %v1398 = vshrl.u32 %v1185, 16
        %v1400 = vor.u32 %v1398, %v1396
        %v1402 = vshll.u32 %v1186, 16
        %v1404 = vrot.slane %v1402, 1
        %v1405 = vsel %vm1218, %v1400, %v1404
        %v1406 = vshrl.u32 %v1186, 16
        %v1408 = vor.u32 %v1406, %v1404
        %v1410 = vshll.u32 %v1187, 16
        %v1412 = vrot.slane %v1410, 1
        %v1413 = vsel %vm1218, %v1408, %v1412
        %v1414 = vshrl.u32 %v1187, 16
        %v1416 = vor.u32 %v1414, %v1412
        %v1418 = vshll.u32 %v1188, 16
        %v1420 = vrot.slane %v1418, 1
        %v1421 = vsel %vm1218, %v1416, %v1420
        %v1422 = vshrl.u32 %v1188, 16
        %v1424 = vor.u32 %v1422, %v1420
        %v1426 = vshll.u32 %v1189, 16
        %v1428 = vrot.slane %v1426, 1
        %v1429 = vsel %vm1218, %v1424, %v1428
        %v1430 = vshrl.u32 %v1189, 16
        %v1432 = vor.u32 %v1430, %v1428
        %1433 = vrot.lane.b32.xlu0 %v1389, 64
        %v1434 = vpop.permute.xlu0 %1433
        %1435 = vrot.lane.b32.xlu0 %v1397, 64
        %v1436 = vpop.permute.xlu0 %1435
        %1437 = vrot.lane.b32.xlu0 %v1405, 64
        %v1438 = vpop.permute.xlu0 %1437
        %1439 = vrot.lane.b32.xlu0 %v1413, 64
        %v1440 = vpop.permute.xlu0 %1439
        %1441 = vrot.lane.b32.xlu0 %v1421, 64
        %v1442 = vpop.permute.xlu0 %1441
        %1443 = vrot.lane.b32.xlu0 %v1429, 64
        %v1444 = vpop.permute.xlu0 %1443
        %1445 = vrot.lane.b32.xlu0 %v1432, 64
        %v1446 = vpop.permute.xlu0 %1445
        %v1448 = vshrl.u32 %v1190, 16
        %v1450 = vshll.u32 %v1190, 16
        %v1452 = vrot.slane %v1450, 1
        %v1453 = vor.u32 %v1448, %v1452
        %v1455 = vshll.u32 %v1191, 16
        %v1457 = vrot.slane %v1455, 1
        %v1458 = vsel %vm1218, %v1453, %v1457
        %v1459 = vshrl.u32 %v1191, 16
        %v1461 = vor.u32 %v1459, %v1457
        %v1463 = vshll.u32 %v1192, 16
        %v1465 = vrot.slane %v1463, 1
        %v1466 = vsel %vm1218, %v1461, %v1465
        %v1467 = vshrl.u32 %v1192, 16
        %v1469 = vor.u32 %v1467, %v1465
        %v1471 = vshll.u32 %v1193, 16
        %v1473 = vrot.slane %v1471, 1
        %v1474 = vsel %vm1218, %v1469, %v1473
        %v1475 = vshrl.u32 %v1193, 16
        %v1477 = vor.u32 %v1475, %v1473
        %v1479 = vshll.u32 %v1194, 16
        %v1481 = vrot.slane %v1479, 1
        %v1482 = vsel %vm1218, %v1477, %v1481
        %v1483 = vshrl.u32 %v1194, 16
        %v1485 = vor.u32 %v1483, %v1481
        %v1487 = vshll.u32 %v1195, 16
        %v1489 = vrot.slane %v1487, 1
        %v1490 = vsel %vm1218, %v1485, %v1489
        %v1491 = vshrl.u32 %v1195, 16
        %v1493 = vor.u32 %v1491, %v1489
        %v1495 = vshll.u32 %v1196, 16
        %v1497 = vrot.slane %v1495, 1
        %v1498 = vsel %vm1218, %v1493, %v1497
        %v1499 = vshrl.u32 %v1196, 16
        %v1501 = vor.u32 %v1499, %v1497
        %1502 = vrot.lane.b32.xlu0 %v1458, 96
        %v1503 = vpop.permute.xlu0 %1502
        %1504 = vrot.lane.b32.xlu0 %v1466, 96
        %v1505 = vpop.permute.xlu0 %1504
        %1506 = vrot.lane.b32.xlu0 %v1474, 96
        %v1507 = vpop.permute.xlu0 %1506
        %1508 = vrot.lane.b32.xlu0 %v1482, 96
        %v1509 = vpop.permute.xlu0 %1508
        %1510 = vrot.lane.b32.xlu0 %v1490, 96
        %v1511 = vpop.permute.xlu0 %1510
        %1512 = vrot.lane.b32.xlu0 %v1498, 96
        %v1513 = vpop.permute.xlu0 %1512
        %1514 = vrot.lane.b32.xlu0 %v1501, 96
        %v1515 = vpop.permute.xlu0 %1514
        %vm1523 = vcmask 1042432
        %v1524 = vrot.slane %v1169, 5
        %v1525 = vrot.slane %v1170, 5
        %v1526 = vsel %vm1523, %v1524, %v1525
        %v1527 = vrot.slane %v1171, 5
        %v1528 = vsel %vm1523, %v1525, %v1527
        %v1529 = vrot.slane %v1172, 5
        %v1530 = vsel %vm1523, %v1527, %v1529
        %v1531 = vrot.slane %v1173, 5
        %v1532 = vsel %vm1523, %v1529, %v1531
        %v1533 = vrot.slane %v1174, 5
        %v1534 = vsel %vm1523, %v1531, %v1533
        %v1535 = vrot.slane %v1175, 5
        %v1536 = vsel %vm1523, %v1533, %v1535
        %v1537 = vrot.slane %v1176, 5
        %v1538 = vrot.slane %v1177, 5
        %v1539 = vsel %vm1523, %v1537, %v1538
        %v1540 = vrot.slane %v1178, 5
        %v1541 = vsel %vm1523, %v1538, %v1540
        %v1542 = vrot.slane %v1179, 5
        %v1543 = vsel %vm1523, %v1540, %v1542
        %v1544 = vrot.slane %v1180, 5
        %v1545 = vsel %vm1523, %v1542, %v1544
        %v1546 = vrot.slane %v1181, 5
        %v1547 = vsel %vm1523, %v1544, %v1546
        %v1548 = vrot.slane %v1182, 5
        %v1549 = vsel %vm1523, %v1546, %v1548
        %1550 = vrot.lane.b32.xlu0 %v1539, 32
        %v1551 = vpop.permute.xlu0 %1550
        %1552 = vrot.lane.b32.xlu0 %v1541, 32
        %v1553 = vpop.permute.xlu0 %1552
        %1554 = vrot.lane.b32.xlu0 %v1543, 32
        %v1555 = vpop.permute.xlu0 %1554
        %1556 = vrot.lane.b32.xlu0 %v1545, 32
        %v1557 = vpop.permute.xlu0 %1556
        %1558 = vrot.lane.b32.xlu0 %v1547, 32
        %v1559 = vpop.permute.xlu0 %1558
        %1560 = vrot.lane.b32.xlu0 %v1549, 32
        %v1561 = vpop.permute.xlu0 %1560
        %1562 = vrot.lane.b32.xlu0 %v1548, 32
        %v1563 = vpop.permute.xlu0 %1562
        %vm1564 = vsmask.f32 2304
        %v1565 = vrot.slane %v1220, 5
        %v1566 = vrot.slane %v1222, 6
        %v1567 = vor.u32 %v1565, %v1566
        %v1568 = vrot.slane %v1231, 5
        %v1569 = vrot.slane %v1227, 6
        %v1570 = vor.u32 %v1568, %v1569
        %v1571 = vsel %vm1564, %v1567, %v1570
        %v1572 = vrot.slane %v1239, 5
        %v1573 = vrot.slane %v1235, 6
        %v1574 = vor.u32 %v1572, %v1573
        %v1575 = vsel %vm1564, %v1570, %v1574
        %v1576 = vrot.slane %v1247, 5
        %v1577 = vrot.slane %v1243, 6
        %v1578 = vor.u32 %v1576, %v1577
        %v1579 = vsel %vm1564, %v1574, %v1578
        %v1580 = vrot.slane %v1255, 5
        %v1581 = vrot.slane %v1251, 6
        %v1582 = vor.u32 %v1580, %v1581
        %v1583 = vsel %vm1564, %v1578, %v1582
        %v1584 = vrot.slane %v1263, 5
        %v1585 = vrot.slane %v1259, 6
        %v1586 = vor.u32 %v1584, %v1585
        %v1587 = vsel %vm1564, %v1582, %v1586
        %v1588 = vrot.slane %v1271, 5
        %v1589 = vrot.slane %v1267, 6
        %v1590 = vor.u32 %v1588, %v1589
        %v1591 = vsel %vm1564, %v1586, %v1590
        %1592 = vrot.lane.b32.xlu0 %v1571, 64
        %v1593 = vpop.permute.xlu0 %1592
        %1594 = vrot.lane.b32.xlu0 %v1575, 64
        %v1595 = vpop.permute.xlu0 %1594
        %1596 = vrot.lane.b32.xlu0 %v1579, 64
        %v1597 = vpop.permute.xlu0 %1596
        %1598 = vrot.lane.b32.xlu0 %v1583, 64
        %v1599 = vpop.permute.xlu0 %1598
        %1600 = vrot.lane.b32.xlu0 %v1587, 64
        %v1601 = vpop.permute.xlu0 %1600
        %1602 = vrot.lane.b32.xlu0 %v1591, 64
        %v1603 = vpop.permute.xlu0 %1602
        %1604 = vrot.lane.b32.xlu0 %v1590, 64
        %v1605 = vpop.permute.xlu0 %1604
        %v1606 = vrot.slane %v1289, 5
        %v1607 = vrot.slane %v1291, 6
        %v1608 = vor.u32 %v1606, %v1607
        %v1609 = vrot.slane %v1300, 5
        %v1610 = vrot.slane %v1296, 6
        %v1611 = vor.u32 %v1609, %v1610
        %v1612 = vsel %vm1564, %v1608, %v1611
        %v1613 = vrot.slane %v1308, 5
        %v1614 = vrot.slane %v1304, 6
        %v1615 = vor.u32 %v1613, %v1614
        %v1616 = vsel %vm1564, %v1611, %v1615
        %v1617 = vrot.slane %v1316, 5
        %v1618 = vrot.slane %v1312, 6
        %v1619 = vor.u32 %v1617, %v1618
        %v1620 = vsel %vm1564, %v1615, %v1619
        %v1621 = vrot.slane %v1324, 5
        %v1622 = vrot.slane %v1320, 6
        %v1623 = vor.u32 %v1621, %v1622
        %v1624 = vsel %vm1564, %v1619, %v1623
        %v1625 = vrot.slane %v1332, 5
        %v1626 = vrot.slane %v1328, 6
        %v1627 = vor.u32 %v1625, %v1626
        %v1628 = vsel %vm1564, %v1623, %v1627
        %v1629 = vrot.slane %v1340, 5
        %v1630 = vrot.slane %v1336, 6
        %v1631 = vor.u32 %v1629, %v1630
        %v1632 = vsel %vm1564, %v1627, %v1631
        %1633 = vrot.lane.b32.xlu0 %v1612, 96
        %v1634 = vpop.permute.xlu0 %1633
        %1635 = vrot.lane.b32.xlu0 %v1616, 96
        %v1636 = vpop.permute.xlu0 %1635
        %1637 = vrot.lane.b32.xlu0 %v1620, 96
        %v1638 = vpop.permute.xlu0 %1637
        %1639 = vrot.lane.b32.xlu0 %v1624, 96
        %v1640 = vpop.permute.xlu0 %1639
        %1641 = vrot.lane.b32.xlu0 %v1628, 96
        %v1642 = vpop.permute.xlu0 %1641
        %1643 = vrot.lane.b32.xlu0 %v1632, 96
        %v1644 = vpop.permute.xlu0 %1643
        %1645 = vrot.lane.b32.xlu0 %v1631, 96
        %v1646 = vpop.permute.xlu0 %1645
        %v1654 = vrot.slane %v1183, 5
        %v1655 = vrot.slane %v1184, 5
        %v1656 = vsel %vm1523, %v1654, %v1655
        %v1657 = vrot.slane %v1185, 5
        %v1658 = vsel %vm1523, %v1655, %v1657
        %v1659 = vrot.slane %v1186, 5
        %v1660 = vsel %vm1523, %v1657, %v1659
        %v1661 = vrot.slane %v1187, 5
        %v1662 = vsel %vm1523, %v1659, %v1661
        %v1663 = vrot.slane %v1188, 5
        %v1664 = vsel %vm1523, %v1661, %v1663
        %v1665 = vrot.slane %v1189, 5
        %v1666 = vsel %vm1523, %v1663, %v1665
        %v1667 = vrot.slane %v1190, 5
        %v1668 = vrot.slane %v1191, 5
        %v1669 = vsel %vm1523, %v1667, %v1668
        %v1670 = vrot.slane %v1192, 5
        %v1671 = vsel %vm1523, %v1668, %v1670
        %v1672 = vrot.slane %v1193, 5
        %v1673 = vsel %vm1523, %v1670, %v1672
        %v1674 = vrot.slane %v1194, 5
        %v1675 = vsel %vm1523, %v1672, %v1674
        %v1676 = vrot.slane %v1195, 5
        %v1677 = vsel %vm1523, %v1674, %v1676
        %v1678 = vrot.slane %v1196, 5
        %v1679 = vsel %vm1523, %v1676, %v1678
        %1680 = vrot.lane.b32.xlu0 %v1669, 32
        %v1681 = vpop.permute.xlu0 %1680
        %1682 = vrot.lane.b32.xlu0 %v1671, 32
        %v1683 = vpop.permute.xlu0 %1682
        %1684 = vrot.lane.b32.xlu0 %v1673, 32
        %v1685 = vpop.permute.xlu0 %1684
        %1686 = vrot.lane.b32.xlu0 %v1675, 32
        %v1687 = vpop.permute.xlu0 %1686
        %1688 = vrot.lane.b32.xlu0 %v1677, 32
        %v1689 = vpop.permute.xlu0 %1688
        %1690 = vrot.lane.b32.xlu0 %v1679, 32
        %v1691 = vpop.permute.xlu0 %1690
        %1692 = vrot.lane.b32.xlu0 %v1678, 32
        %v1693 = vpop.permute.xlu0 %1692
        %v1694 = vrot.slane %v1379, 5
        %v1695 = vrot.slane %v1381, 6
        %v1696 = vor.u32 %v1694, %v1695
        %v1697 = vrot.slane %v1390, 5
        %v1698 = vrot.slane %v1386, 6
        %v1699 = vor.u32 %v1697, %v1698
        %v1700 = vsel %vm1564, %v1696, %v1699
        %v1701 = vrot.slane %v1398, 5
        %v1702 = vrot.slane %v1394, 6
        %v1703 = vor.u32 %v1701, %v1702
        %v1704 = vsel %vm1564, %v1699, %v1703
        %v1705 = vrot.slane %v1406, 5
        %v1706 = vrot.slane %v1402, 6
        %v1707 = vor.u32 %v1705, %v1706
        %v1708 = vsel %vm1564, %v1703, %v1707
        %v1709 = vrot.slane %v1414, 5
        %v1710 = vrot.slane %v1410, 6
        %v1711 = vor.u32 %v1709, %v1710
        %v1712 = vsel %vm1564, %v1707, %v1711
        %v1713 = vrot.slane %v1422, 5
        %v1714 = vrot.slane %v1418, 6
        %v1715 = vor.u32 %v1713, %v1714
        %v1716 = vsel %vm1564, %v1711, %v1715
        %v1717 = vrot.slane %v1430, 5
        %v1718 = vrot.slane %v1426, 6
        %v1719 = vor.u32 %v1717, %v1718
        %v1720 = vsel %vm1564, %v1715, %v1719
        %1721 = vrot.lane.b32.xlu0 %v1700, 64
        %v1722 = vpop.permute.xlu0 %1721
        %1723 = vrot.lane.b32.xlu0 %v1704, 64
        %v1724 = vpop.permute.xlu0 %1723
        %1725 = vrot.lane.b32.xlu0 %v1708, 64
        %v1726 = vpop.permute.xlu0 %1725
        %1727 = vrot.lane.b32.xlu0 %v1712, 64
        %v1728 = vpop.permute.xlu0 %1727
        %1729 = vrot.lane.b32.xlu0 %v1716, 64
        %v1730 = vpop.permute.xlu0 %1729
        %1731 = vrot.lane.b32.xlu0 %v1720, 64
        %v1732 = vpop.permute.xlu0 %1731
        %1733 = vrot.lane.b32.xlu0 %v1719, 64
        %v1734 = vpop.permute.xlu0 %1733
        %v1735 = vrot.slane %v1448, 5
        %v1736 = vrot.slane %v1450, 6
        %v1737 = vor.u32 %v1735, %v1736
        %v1738 = vrot.slane %v1459, 5
        %v1739 = vrot.slane %v1455, 6
        %v1740 = vor.u32 %v1738, %v1739
        %v1741 = vsel %vm1564, %v1737, %v1740
        %v1742 = vrot.slane %v1467, 5
        %v1743 = vrot.slane %v1463, 6
        %v1744 = vor.u32 %v1742, %v1743
        %v1745 = vsel %vm1564, %v1740, %v1744
        %v1746 = vrot.slane %v1475, 5
        %v1747 = vrot.slane %v1471, 6
        %v1748 = vor.u32 %v1746, %v1747
        %v1749 = vsel %vm1564, %v1744, %v1748
        %v1750 = vrot.slane %v1483, 5
        %v1751 = vrot.slane %v1479, 6
        %v1752 = vor.u32 %v1750, %v1751
        %v1753 = vsel %vm1564, %v1748, %v1752
        %v1754 = vrot.slane %v1491, 5
        %v1755 = vrot.slane %v1487, 6
        %v1756 = vor.u32 %v1754, %v1755
        %v1757 = vsel %vm1564, %v1752, %v1756
        %v1758 = vrot.slane %v1499, 5
        %v1759 = vrot.slane %v1495, 6
        %v1760 = vor.u32 %v1758, %v1759
        %v1761 = vsel %vm1564, %v1756, %v1760
        %1762 = vrot.lane.b32.xlu0 %v1741, 96
        %v1763 = vpop.permute.xlu0 %1762
        %1764 = vrot.lane.b32.xlu0 %v1745, 96
        %v1765 = vpop.permute.xlu0 %1764
        %1766 = vrot.lane.b32.xlu0 %v1749, 96
        %v1767 = vpop.permute.xlu0 %1766
        %1768 = vrot.lane.b32.xlu0 %v1753, 96
        %v1769 = vpop.permute.xlu0 %1768
        %1770 = vrot.lane.b32.xlu0 %v1757, 96
        %v1771 = vpop.permute.xlu0 %1770
        %1772 = vrot.lane.b32.xlu0 %v1761, 96
        %v1773 = vpop.permute.xlu0 %1772
        %1774 = vrot.lane.b32.xlu0 %v1760, 96
        %v1775 = vpop.permute.xlu0 %1774
        %vm1776 = vcmask 261120
        %v1778 = vsel %vm1776, %v1169, %v1205
        %v1780 = vsel %vm1776, %v1170, %v1207
        %v1782 = vsel %vm1776, %v1171, %v1209
        %v1784 = vsel %vm1776, %v1172, %v1211
        %v1786 = vsel %vm1776, %v1173, %v1213
        %v1788 = vsel %vm1776, %v1174, %v1215
        %v1790 = vsel %vm1776, %v1175, %v1217
        %vm1791 = vcmask 523264
        %v1793 = vsel %vm1791, %v1778, %v1275
        %v1795 = vsel %vm1791, %v1780, %v1277
        %v1797 = vsel %vm1791, %v1782, %v1279
        %v1799 = vsel %vm1791, %v1784, %v1281
        %v1801 = vsel %vm1791, %v1786, %v1283
        %v1803 = vsel %vm1791, %v1788, %v1285
        %v1805 = vsel %vm1791, %v1790, %v1287
        %vm1806 = vcmask 785408
        %v1808 = vsel %vm1806, %v1793, %v1344
        %v1811 = vsel %vm1806, %v1795, %v1346
        %v1814 = vsel %vm1806, %v1797, %v1348
        %v1817 = vsel %vm1806, %v1799, %v1350
        %v1820 = vsel %vm1806, %v1801, %v1352
        %v1823 = vsel %vm1806, %v1803, %v1354
        %v1826 = vsel %vm1806, %v1805, %v1356
        %v1829 = vsel %vm1776, %v1183, %v1365
        %v1831 = vsel %vm1776, %v1184, %v1367
        %v1833 = vsel %vm1776, %v1185, %v1369
        %v1835 = vsel %vm1776, %v1186, %v1371
        %v1837 = vsel %vm1776, %v1187, %v1373
        %v1839 = vsel %vm1776, %v1188, %v1375
        %v1841 = vsel %vm1776, %v1189, %v1377
        %v1843 = vsel %vm1791, %v1829, %v1434
        %v1845 = vsel %vm1791, %v1831, %v1436
        %v1847 = vsel %vm1791, %v1833, %v1438
        %v1849 = vsel %vm1791, %v1835, %v1440
        %v1851 = vsel %vm1791, %v1837, %v1442
        %v1853 = vsel %vm1791, %v1839, %v1444
        %v1855 = vsel %vm1791, %v1841, %v1446
        %v1857 = vsel %vm1806, %v1843, %v1503
        %v1860 = vsel %vm1806, %v1845, %v1505
        %v1863 = vsel %vm1806, %v1847, %v1507
        %v1866 = vsel %vm1806, %v1849, %v1509
        %v1869 = vsel %vm1806, %v1851, %v1511
        %v1872 = vsel %vm1806, %v1853, %v1513
        %v1875 = vsel %vm1806, %v1855, %v1515
        %v1879 = vsel %vm1776, %v1526, %v1551
        %v1882 = vsel %vm1776, %v1528, %v1553
        %v1885 = vsel %vm1776, %v1530, %v1555
        %v1888 = vsel %vm1776, %v1532, %v1557
        %v1891 = vsel %vm1776, %v1534, %v1559
        %v1894 = vsel %vm1776, %v1536, %v1561
        %v1897 = vsel %vm1776, %v1535, %v1563
        %v1899 = vsel %vm1791, %v1879, %v1593
        %v1901 = vsel %vm1791, %v1882, %v1595
        %v1903 = vsel %vm1791, %v1885, %v1597
        %v1905 = vsel %vm1791, %v1888, %v1599
        %v1907 = vsel %vm1791, %v1891, %v1601
        %v1909 = vsel %vm1791, %v1894, %v1603
        %v1911 = vsel %vm1791, %v1897, %v1605
        %v1913 = vsel %vm1806, %v1899, %v1634
        %v1916 = vsel %vm1806, %v1901, %v1636
        %v1919 = vsel %vm1806, %v1903, %v1638
        %v1922 = vsel %vm1806, %v1905, %v1640
        %v1925 = vsel %vm1806, %v1907, %v1642
        %v1928 = vsel %vm1806, %v1909, %v1644
        %v1931 = vsel %vm1806, %v1911, %v1646
        %v1935 = vsel %vm1776, %v1656, %v1681
        %v1938 = vsel %vm1776, %v1658, %v1683
        %v1941 = vsel %vm1776, %v1660, %v1685
        %v1944 = vsel %vm1776, %v1662, %v1687
        %v1947 = vsel %vm1776, %v1664, %v1689
        %v1950 = vsel %vm1776, %v1666, %v1691
        %v1953 = vsel %vm1776, %v1665, %v1693
        %v1955 = vsel %vm1791, %v1935, %v1722
        %v1957 = vsel %vm1791, %v1938, %v1724
        %v1959 = vsel %vm1791, %v1941, %v1726
        %v1961 = vsel %vm1791, %v1944, %v1728
        %v1963 = vsel %vm1791, %v1947, %v1730
        %v1965 = vsel %vm1791, %v1950, %v1732
        %v1967 = vsel %vm1791, %v1953, %v1734
        %v1969 = vsel %vm1806, %v1955, %v1763
        %v1972 = vsel %vm1806, %v1957, %v1765
        %v1975 = vsel %vm1806, %v1959, %v1767
        %v1978 = vsel %vm1806, %v1961, %v1769
        %v1981 = vsel %vm1806, %v1963, %v1771
        %v1984 = vsel %vm1806, %v1965, %v1773
        %v1987 = vsel %vm1806, %v1967, %v1775
        %v1989 = vld [vmem:[%s3] sm:$0xf]
        %v1990 = vld [vmem:[%s3 + $0x4] sm:$0xf]
        %v1991 = vld [vmem:[%s3 + $0x8] sm:$0xf]
        %v1992 = vld [vmem:[%s3 + $0xc] sm:$0xf]
        %v1993 = vld [vmem:[%s3 + $0x10] sm:$0xf]
        %v1994 = vld [vmem:[%s3 + $0x14] sm:$0xf]
        %v1995 = vld [vmem:[%s3 + $0x18] sm:$0xf]
        %v1996 = vld [vmem:[%s3 + $0x1c] sm:$0xf]
        %v1997 = vld [vmem:[%s3 + $0x20] sm:$0xf]
        %v1998 = vld [vmem:[%s3 + $0x24] sm:$0xf]
        %v1999 = vld [vmem:[%s3 + $0x28] sm:$0xf]
        %v2000 = vld [vmem:[%s3 + $0x2c] sm:$0xf]
        %v2001 = vld [vmem:[%s3 + $0x30] sm:$0xf]
        %v2002 = vld [vmem:[%s3 + $0x34] sm:$0xf]
        %v2003 = vld [vmem:[%s3 + $0x38] sm:$0xf]
        %v2004 = vld [vmem:[%s3 + $0x3c] sm:$0xf]
        %v2005 = vld [vmem:[%s3 + $0x40] sm:$0xf]
        %v2006 = vld [vmem:[%s3 + $0x44] sm:$0xf]
        %v2007 = vld [vmem:[%s3 + $0x48] sm:$0xf]
        %v2008 = vld [vmem:[%s3 + $0x4c] sm:$0xf]
        %v2009 = vld [vmem:[%s3 + $0x50] sm:$0xf]
        %v2010 = vld [vmem:[%s3 + $0x54] sm:$0xf]
        %v2011 = vld [vmem:[%s3 + $0x58] sm:$0xf]
        %v2012 = vld [vmem:[%s3 + $0x5c] sm:$0xf]
        %v2013 = vld [vmem:[%s3 + $0x60] sm:$0xf]
        %v2014 = vld [vmem:[%s3 + $0x64] sm:$0xf]
        %v2015 = vld [vmem:[%s3 + $0x68] sm:$0xf]
        %v2016 = vld [vmem:[%s3 + $0x6c] sm:$0xf]
        %v2017 = vld [vmem:[%s3 + $0x70] sm:$0xf]
        %v2018 = vld [vmem:[%s3 + $0x74] sm:$0xf]
        %v2019 = vld [vmem:[%s3 + $0x78] sm:$0xf]
        %v2020 = vld [vmem:[%s3 + $0x7c] sm:$0xf]
        %v2021 = vld [vmem:[%s3 + $0x80] sm:$0xf]
        %v2022 = vld [vmem:[%s3 + $0x84] sm:$0xf]
        %v2023 = vld [vmem:[%s3 + $0x88] sm:$0xf]
        %v2024 = vld [vmem:[%s3 + $0x8c] sm:$0xf]
        %v2025 = vld [vmem:[%s3 + $0x90] sm:$0xf]
        %v2026 = vld [vmem:[%s3 + $0x94] sm:$0xf]
        %v2027 = vld [vmem:[%s3 + $0x98] sm:$0xf]
        %v2028 = vld [vmem:[%s3 + $0x9c] sm:$0xf]
        %v2029 = vld [vmem:[%s3 + $0xa0] sm:$0xf]
        %v2030 = vld [vmem:[%s3 + $0xa4] sm:$0xf]
        %v2031 = vld [vmem:[%s3 + $0xa8] sm:$0xf]
        %v2032 = vld [vmem:[%s3 + $0xac] sm:$0xf]
        %v2033 = vld [vmem:[%s3 + $0xb0] sm:$0xf]
        %v2034 = vld [vmem:[%s3 + $0xb4] sm:$0xf]
        %v2035 = vld [vmem:[%s3 + $0xb8] sm:$0xf]
        %v2036 = vld [vmem:[%s3 + $0xbc] sm:$0xf]
        %v2037 = vld [vmem:[%s3 + $0xc0] sm:$0xf]
        %v2038 = vld [vmem:[%s3 + $0xc4] sm:$0xf]
        %v2039 = vld [vmem:[%s3 + $0xc8] sm:$0xf]
        %v2040 = vld [vmem:[%s3 + $0xcc] sm:$0xf]
        %v2041 = vld [vmem:[%s3 + $0xd0] sm:$0xf]
        %v2042 = vld [vmem:[%s3 + $0xd4] sm:$0xf]
        %v2043 = vld [vmem:[%s3 + $0xd8] sm:$0xf]
        %v2044 = vld [vmem:[%s3 + $0xdc] sm:$0xf]
        %v2045 = vld [vmem:[%s3 + $0xe0] sm:$0xf]
        %v2046 = vld [vmem:[%s3 + $0xe4] sm:$0xf]
        %v2047 = vld [vmem:[%s3 + $0xe8] sm:$0xf]
        %v2048 = vld [vmem:[%s3 + $0xec] sm:$0xf]
        %v2049 = vld [vmem:[%s3 + $0xf0] sm:$0xf]
        %v2050 = vld [vmem:[%s3 + $0xf4] sm:$0xf]
        %v2051 = vld [vmem:[%s3 + $0xf8] sm:$0xf]
        %v2052 = vld [vmem:[%s3 + $0xfc] sm:$0xf]
        %v2053 = vld [vmem:[%s4] sm:$0x1]
        %v2055 = vlaneseq
        %v2056 = vshrl.u32 %v2055, 7
        %v2057 = vsub.s32 0, %v2056
        %v2058 = vrot.slane %v2053, %v2057
        %v2124 = vunpack.c.l.b16 %v1989
        %v2125 = vunpack.c.l.b16 %v1990
        %v2126 = vunpack.c.l.b16 %v1991
        %v2127 = vunpack.c.l.b16 %v1992
        %v2128 = vunpack.c.l.b16 %v1993
        %v2129 = vunpack.c.l.b16 %v1994
        %v2130 = vunpack.c.l.b16 %v1995
        %v2131 = vunpack.c.l.b16 %v1996
        %v2132 = vunpack.c.l.b16 %v1997
        %v2133 = vunpack.c.l.b16 %v1998
        %v2134 = vunpack.c.l.b16 %v1999
        %v2135 = vunpack.c.l.b16 %v2000
        %v2136 = vunpack.c.l.b16 %v2001
        %v2137 = vunpack.c.l.b16 %v2002
        %v2138 = vunpack.c.l.b16 %v2003
        %v2139 = vunpack.c.l.b16 %v2004
        %v2140 = vunpack.c.l.b16 %v2005
        %v2141 = vunpack.c.l.b16 %v2006
        %v2142 = vunpack.c.l.b16 %v2007
        %v2143 = vunpack.c.l.b16 %v2008
        %v2144 = vunpack.c.l.b16 %v2009
        %v2145 = vunpack.c.l.b16 %v2010
        %v2146 = vunpack.c.l.b16 %v2011
        %v2147 = vunpack.c.l.b16 %v2012
        %v2148 = vunpack.c.l.b16 %v2013
        %v2149 = vunpack.c.l.b16 %v2014
        %v2150 = vunpack.c.l.b16 %v2015
        %v2151 = vunpack.c.l.b16 %v2016
        %v2152 = vunpack.c.l.b16 %v2017
        %v2153 = vunpack.c.l.b16 %v2018
        %v2154 = vunpack.c.l.b16 %v2019
        %v2155 = vunpack.c.l.b16 %v2020
        %v2156 = vunpack.c.l.b16 %v2021
        %v2157 = vunpack.c.l.b16 %v2022
        %v2158 = vunpack.c.l.b16 %v2023
        %v2159 = vunpack.c.l.b16 %v2024
        %v2160 = vunpack.c.l.b16 %v2025
        %v2161 = vunpack.c.l.b16 %v2026
        %v2162 = vunpack.c.l.b16 %v2027
        %v2163 = vunpack.c.l.b16 %v2028
        %v2164 = vunpack.c.l.b16 %v2029
        %v2165 = vunpack.c.l.b16 %v2030
        %v2166 = vunpack.c.l.b16 %v2031
        %v2167 = vunpack.c.l.b16 %v2032
        %v2168 = vunpack.c.l.b16 %v2033
        %v2169 = vunpack.c.l.b16 %v2034
        %v2170 = vunpack.c.l.b16 %v2035
        %v2171 = vunpack.c.l.b16 %v2036
        %v2172 = vunpack.c.l.b16 %v2037
        %v2173 = vunpack.c.l.b16 %v2038
        %v2174 = vunpack.c.l.b16 %v2039
        %v2175 = vunpack.c.l.b16 %v2040
        %v2176 = vunpack.c.l.b16 %v2041
        %v2177 = vunpack.c.l.b16 %v2042
        %v2178 = vunpack.c.l.b16 %v2043
        %v2179 = vunpack.c.l.b16 %v2044
        %v2180 = vunpack.c.l.b16 %v2045
        %v2181 = vunpack.c.l.b16 %v2046
        %v2182 = vunpack.c.l.b16 %v2047
        %v2183 = vunpack.c.l.b16 %v2048
        %v2184 = vunpack.c.l.b16 %v2049
        %v2185 = vunpack.c.l.b16 %v2050
        %v2186 = vunpack.c.l.b16 %v2051
        %v2187 = vunpack.c.l.b16 %v2052
        %v2188 = vpack.c.b16 %v2125, %v2124
        %v2189 = vpack.c.b16 %v2127, %v2126
        %v2190 = vpack.c.b16 %v2129, %v2128
        %v2191 = vpack.c.b16 %v2131, %v2130
        %v2192 = vpack.c.b16 %v2133, %v2132
        %v2193 = vpack.c.b16 %v2135, %v2134
        %v2194 = vpack.c.b16 %v2137, %v2136
        %v2195 = vpack.c.b16 %v2139, %v2138
        %v2196 = vpack.c.b16 %v2141, %v2140
        %v2197 = vpack.c.b16 %v2143, %v2142
        %v2198 = vpack.c.b16 %v2145, %v2144
        %v2199 = vpack.c.b16 %v2147, %v2146
        %v2200 = vpack.c.b16 %v2149, %v2148
        %v2201 = vpack.c.b16 %v2151, %v2150
        %v2202 = vpack.c.b16 %v2153, %v2152
        %v2203 = vpack.c.b16 %v2155, %v2154
        %v2204 = vpack.c.b16 %v2157, %v2156
        %v2205 = vpack.c.b16 %v2159, %v2158
        %v2206 = vpack.c.b16 %v2161, %v2160
        %v2207 = vpack.c.b16 %v2163, %v2162
        %v2208 = vpack.c.b16 %v2165, %v2164
        %v2209 = vpack.c.b16 %v2167, %v2166
        %v2210 = vpack.c.b16 %v2169, %v2168
        %v2211 = vpack.c.b16 %v2171, %v2170
        %v2212 = vpack.c.b16 %v2173, %v2172
        %v2213 = vpack.c.b16 %v2175, %v2174
        %v2214 = vpack.c.b16 %v2177, %v2176
        %v2215 = vpack.c.b16 %v2179, %v2178
        %v2216 = vpack.c.b16 %v2181, %v2180
        %v2217 = vpack.c.b16 %v2183, %v2182
        %v2218 = vpack.c.b16 %v2185, %v2184
        %v2219 = vpack.c.b16 %v2187, %v2186
        %2252 = vmatprep.subr.bf16.mxu0 0
        %2253 = vmatpush1.bf16.msra.mxu0 %v2188
        %2254 = vmatprep.subr.bf16.mxu0 0
        %2255 = vmatpush1.bf16.msra.mxu0 %v2189
        %2256 = vmatprep.subr.bf16.mxu0 0
        %2257 = vmatpush1.bf16.msra.mxu0 %v2190
        %2258 = vmatprep.subr.bf16.mxu0 0
        %2259 = vmatpush1.bf16.msra.mxu0 %v2191
        %2260 = vmatprep.subr.bf16.mxu0 0
        %2261 = vmatpush1.bf16.msra.mxu0 %v2192
        %2262 = vmatprep.subr.bf16.mxu0 0
        %2263 = vmatpush1.bf16.msra.mxu0 %v2193
        %2264 = vmatprep.subr.bf16.mxu0 0
        %2265 = vmatpush1.bf16.msra.mxu0 %v2194
        %2266 = vmatprep.subr.bf16.mxu0 0
        %2267 = vmatpush1.bf16.msra.mxu0 %v2195
        %2268 = vmatprep.subr.bf16.mxu0 0
        %2269 = vmatpush1.bf16.msra.mxu0 %v2196
        %2270 = vmatprep.subr.bf16.mxu0 0
        %2271 = vmatpush1.bf16.msra.mxu0 %v2197
        %2272 = vmatprep.subr.bf16.mxu0 0
        %2273 = vmatpush1.bf16.msra.mxu0 %v2198
        %2274 = vmatprep.subr.bf16.mxu0 0
        %2275 = vmatpush1.bf16.msra.mxu0 %v2199
        %2276 = vmatprep.subr.bf16.mxu0 0
        %2277 = vmatpush1.bf16.msra.mxu0 %v2200
        %2278 = vmatprep.subr.bf16.mxu0 0
        %2279 = vmatpush1.bf16.msra.mxu0 %v2201
        %2280 = vmatprep.subr.bf16.mxu0 0
        %2281 = vmatpush1.bf16.msra.mxu0 %v2202
        %2282 = vmatprep.subr.bf16.mxu0 0
        %2283 = vmatpush1.bf16.msra.mxu0 %v2203
        %2284 = vmatprep.mubr.bf16.mxu0 %v1857
        %2285 = vmatmul.mubr.bf16.gmra.mrb[0].mxu0 %v1808
        %v2286 = vpop.f32.mrb[0].mxu0
        %v2287 = vadd.f32 %v2058, %v2286
        %v2288 = vpop.f32.mrb[0].mxu0
        %v2289 = vpop.f32.mrb[0].mxu0
        %v2290 = vadd.f32 %v2058, %v2289
        %v2291 = vpop.f32.mrb[0].mxu0
        %2292 = vmatprep.mubr.bf16.mxu0 %v1860
        %2293 = vmatmul.mubr.bf16.gmra.mrb[0].mxu0 %v1811
        %v2294 = vpop.f32.mrb[0].mxu0
        %v2295 = vadd.f32 %v2058, %v2294
        %v2296 = vpop.f32.mrb[0].mxu0
        %v2297 = vpop.f32.mrb[0].mxu0
        %v2298 = vadd.f32 %v2058, %v2297
        %v2299 = vpop.f32.mrb[0].mxu0
        %2300 = vmatprep.mubr.bf16.mxu0 %v1863
        %2301 = vmatmul.mubr.bf16.gmra.mrb[0].mxu0 %v1814
        %v2302 = vpop.f32.mrb[0].mxu0
        %v2303 = vadd.f32 %v2058, %v2302
        %v2304 = vpop.f32.mrb[0].mxu0
        %v2305 = vpop.f32.mrb[0].mxu0
        %v2306 = vadd.f32 %v2058, %v2305
        %v2307 = vpop.f32.mrb[0].mxu0
        %2308 = vmatprep.mubr.bf16.mxu0 %v1866
        %2309 = vmatmul.mubr.bf16.gmra.mrb[0].mxu0 %v1817
        %v2310 = vpop.f32.mrb[0].mxu0
        %v2311 = vadd.f32 %v2058, %v2310
        %v2312 = vpop.f32.mrb[0].mxu0
        %v2313 = vpop.f32.mrb[0].mxu0
        %v2314 = vadd.f32 %v2058, %v2313
        %v2315 = vpop.f32.mrb[0].mxu0
        %2316 = vmatprep.mubr.bf16.mxu0 %v1869
        %2317 = vmatmul.mubr.bf16.gmra.mrb[0].mxu0 %v1820
        %v2318 = vpop.f32.mrb[0].mxu0
        %v2319 = vadd.f32 %v2058, %v2318
        %v2320 = vpop.f32.mrb[0].mxu0
        %v2321 = vpop.f32.mrb[0].mxu0
        %v2322 = vadd.f32 %v2058, %v2321
        %v2323 = vpop.f32.mrb[0].mxu0
        %2324 = vmatprep.mubr.bf16.mxu0 %v1872
        %2325 = vmatmul.mubr.bf16.gmra.mrb[0].mxu0 %v1823
        %v2326 = vpop.f32.mrb[0].mxu0
        %v2327 = vadd.f32 %v2058, %v2326
        %v2328 = vpop.f32.mrb[0].mxu0
        %v2329 = vpop.f32.mrb[0].mxu0
        %v2330 = vadd.f32 %v2058, %v2329
        %v2331 = vpop.f32.mrb[0].mxu0
        %2332 = vmatprep.mubr.bf16.mxu0 %v1875
        %2333 = vmatmul.mubr.bf16.gmra.mrb[0].mxu0 %v1826
        %v2334 = vpop.f32.mrb[0].mxu0
        %v2335 = vpop.f32.mrb[0].mxu0
        %v2336 = vpop.f32.mrb[0].mxu0
        %v2337 = vpop.f32.mrb[0].mxu0
        %2338 = vdwg.mxu0
        %2339 = vmatprep.subr.bf16.mxu0 0
        %2340 = vmatpush1.bf16.msra.mxu0 %v2204
        %2341 = vmatprep.subr.bf16.mxu0 0
        %2342 = vmatpush1.bf16.msra.mxu0 %v2205
        %2343 = vmatprep.subr.bf16.mxu0 0
        %2344 = vmatpush1.bf16.msra.mxu0 %v2206
        %2345 = vmatprep.subr.bf16.mxu0 0
        %2346 = vmatpush1.bf16.msra.mxu0 %v2207
        %2347 = vmatprep.subr.bf16.mxu0 0
        %2348 = vmatpush1.bf16.msra.mxu0 %v2208
        %2349 = vmatprep.subr.bf16.mxu0 0
        %2350 = vmatpush1.bf16.msra.mxu0 %v2209
        %2351 = vmatprep.subr.bf16.mxu0 0
        %2352 = vmatpush1.bf16.msra.mxu0 %v2210
        %2353 = vmatprep.subr.bf16.mxu0 0
        %2354 = vmatpush1.bf16.msra.mxu0 %v2211
        %2355 = vmatprep.subr.bf16.mxu0 0
        %2356 = vmatpush1.bf16.msra.mxu0 %v2212
        %2357 = vmatprep.subr.bf16.mxu0 0
        %2358 = vmatpush1.bf16.msra.mxu0 %v2213
        %2359 = vmatprep.subr.bf16.mxu0 0
        %2360 = vmatpush1.bf16.msra.mxu0 %v2214
        %2361 = vmatprep.subr.bf16.mxu0 0
        %2362 = vmatpush1.bf16.msra.mxu0 %v2215
        %2363 = vmatprep.subr.bf16.mxu0 0
        %2364 = vmatpush1.bf16.msra.mxu0 %v2216
        %2365 = vmatprep.subr.bf16.mxu0 0
        %2366 = vmatpush1.bf16.msra.mxu0 %v2217
        %2367 = vmatprep.subr.bf16.mxu0 0
        %2368 = vmatpush1.bf16.msra.mxu0 %v2218
        %2369 = vmatprep.subr.bf16.mxu0 0
        %2370 = vmatpush1.bf16.msra.mxu0 %v2219
        %2371 = vmatprep.mubr.bf16.mxu0 %v1969
        %2372 = vmatmul.mubr.bf16.gmra.mrb[0].mxu0 %v1913
        %v2373 = vpop.f32.mrb[0].mxu0
        %v2374 = vadd.f32 %v2287, %v2373
        %v2375 = vpop.f32.mrb[0].mxu0
        %v2376 = vpop.f32.mrb[0].mxu0
        %v2377 = vadd.f32 %v2290, %v2376
        %v2378 = vpop.f32.mrb[0].mxu0
        %2379 = vmatprep.mubr.bf16.mxu0 %v1972
        %2380 = vmatmul.mubr.bf16.gmra.mrb[0].mxu0 %v1916
        %v2381 = vpop.f32.mrb[0].mxu0
        %v2382 = vadd.f32 %v2295, %v2381
        %v2383 = vpop.f32.mrb[0].mxu0
        %v2384 = vpop.f32.mrb[0].mxu0
        %v2385 = vadd.f32 %v2298, %v2384
        %v2386 = vpop.f32.mrb[0].mxu0
        %2387 = vmatprep.mubr.bf16.mxu0 %v1975
        %2388 = vmatmul.mubr.bf16.gmra.mrb[0].mxu0 %v1919
        %v2389 = vpop.f32.mrb[0].mxu0
        %v2390 = vadd.f32 %v2303, %v2389
        %v2391 = vpop.f32.mrb[0].mxu0
        %v2392 = vpop.f32.mrb[0].mxu0
        %v2393 = vadd.f32 %v2306, %v2392
        %v2394 = vpop.f32.mrb[0].mxu0
        %2395 = vmatprep.mubr.bf16.mxu0 %v1978
        %2396 = vmatmul.mubr.bf16.gmra.mrb[0].mxu0 %v1922
        %v2397 = vpop.f32.mrb[0].mxu0
        %v2398 = vadd.f32 %v2311, %v2397
        %v2399 = vpop.f32.mrb[0].mxu0
        %v2400 = vpop.f32.mrb[0].mxu0
        %v2401 = vadd.f32 %v2314, %v2400
        %v2402 = vpop.f32.mrb[0].mxu0
        %2403 = vmatprep.mubr.bf16.mxu0 %v1981
        %2404 = vmatmul.mubr.bf16.gmra.mrb[0].mxu0 %v1925
        %v2405 = vpop.f32.mrb[0].mxu0
        %v2406 = vadd.f32 %v2319, %v2405
        %v2407 = vpop.f32.mrb[0].mxu0
        %v2408 = vpop.f32.mrb[0].mxu0
        %v2409 = vadd.f32 %v2322, %v2408
        %v2410 = vpop.f32.mrb[0].mxu0
        %2411 = vmatprep.mubr.bf16.mxu0 %v1984
        %2412 = vmatmul.mubr.bf16.gmra.mrb[0].mxu0 %v1928
        %v2413 = vpop.f32.mrb[0].mxu0
        %v2414 = vadd.f32 %v2327, %v2413
        %v2415 = vpop.f32.mrb[0].mxu0
        %v2416 = vpop.f32.mrb[0].mxu0
        %v2417 = vadd.f32 %v2330, %v2416
        %v2418 = vpop.f32.mrb[0].mxu0
        %2419 = vmatprep.mubr.bf16.mxu0 %v1987
        %2420 = vmatmul.mubr.bf16.gmra.mrb[0].mxu0 %v1931
        %v2421 = vpop.f32.mrb[0].mxu0
        %v2422 = vpop.f32.mrb[0].mxu0
        %v2423 = vpop.f32.mrb[0].mxu0
        %v2424 = vpop.f32.mrb[0].mxu0
        %2425 = vdwg.mxu0
        %v2426 = vmax.f32 %v2374, 0.0
        %v2427 = vmax.f32 %v2377, 0.0
        %v2428 = vmax.f32 %v2382, 0.0
        %v2429 = vmax.f32 %v2385, 0.0
        %v2430 = vmax.f32 %v2390, 0.0
        %v2431 = vmax.f32 %v2393, 0.0
        %v2432 = vmax.f32 %v2398, 0.0
        %v2433 = vmax.f32 %v2401, 0.0
        %v2434 = vmax.f32 %v2406, 0.0
        %v2435 = vmax.f32 %v2409, 0.0
        %v2436 = vmax.f32 %v2414, 0.0
        %v2437 = vmax.f32 %v2417, 0.0
        %v2438 = vpack.c.bf16 %v2427, %v2426
        %v2439 = vpack.c.bf16 %v2429, %v2428
        %v2440 = vpack.c.bf16 %v2431, %v2430
        %v2441 = vpack.c.bf16 %v2433, %v2432
        %v2442 = vpack.c.bf16 %v2435, %v2434
        %v2443 = vpack.c.bf16 %v2437, %v2436
        %v2445 = vshrl.u32 %v2438, 16
        %v2447 = vshll.u32 %v2438, 16
        %v2449 = vrot.slane %v2447, 1
        %v2450 = vor.u32 %v2445, %v2449
        %v2452 = vshll.u32 %v2439, 16
        %v2454 = vrot.slane %v2452, 1
        %v2455 = vsel %vm1218, %v2450, %v2454
        %v2456 = vshrl.u32 %v2439, 16
        %v2458 = vor.u32 %v2456, %v2454
        %v2460 = vshll.u32 %v2440, 16
        %v2462 = vrot.slane %v2460, 1
        %v2463 = vsel %vm1218, %v2458, %v2462
        %v2464 = vshrl.u32 %v2440, 16
        %v2466 = vor.u32 %v2464, %v2462
        %v2468 = vshll.u32 %v2441, 16
        %v2470 = vrot.slane %v2468, 1
        %v2471 = vsel %vm1218, %v2466, %v2470
        %v2472 = vshrl.u32 %v2441, 16
        %v2474 = vor.u32 %v2472, %v2470
        %v2476 = vshll.u32 %v2442, 16
        %v2478 = vrot.slane %v2476, 1
        %v2479 = vsel %vm1218, %v2474, %v2478
        %v2480 = vshrl.u32 %v2442, 16
        %v2482 = vor.u32 %v2480, %v2478
        %2483 = vrot.lane.b32.xlu0 %v2455, 64
        %v2484 = vpop.permute.xlu0 %2483
        %2485 = vrot.lane.b32.xlu0 %v2463, 64
        %v2486 = vpop.permute.xlu0 %2485
        %2487 = vrot.lane.b32.xlu0 %v2471, 64
        %v2488 = vpop.permute.xlu0 %2487
        %2489 = vrot.lane.b32.xlu0 %v2479, 64
        %v2490 = vpop.permute.xlu0 %2489
        %2491 = vrot.lane.b32.xlu0 %v2482, 64
        %v2492 = vpop.permute.xlu0 %2491
        %vm2498 = vcmask 1046528
        %v2499 = vrot.slane %v2438, 1
        %v2500 = vrot.slane %v2439, 1
        %v2501 = vsel %vm2498, %v2499, %v2500
        %v2502 = vrot.slane %v2440, 1
        %v2503 = vsel %vm2498, %v2500, %v2502
        %v2504 = vrot.slane %v2441, 1
        %v2505 = vsel %vm2498, %v2502, %v2504
        %v2506 = vrot.slane %v2442, 1
        %v2507 = vsel %vm2498, %v2504, %v2506
        %v2508 = vrot.slane %v2438, 5
        %v2509 = vrot.slane %v2439, 5
        %v2510 = vsel %vm1523, %v2508, %v2509
        %v2511 = vrot.slane %v2440, 5
        %v2512 = vsel %vm1523, %v2509, %v2511
        %v2513 = vrot.slane %v2441, 5
        %v2514 = vsel %vm1523, %v2511, %v2513
        %v2515 = vrot.slane %v2442, 5
        %v2516 = vsel %vm1523, %v2513, %v2515
        %2517 = vrot.lane.b32.xlu0 %v2510, 64
        %v2518 = vpop.permute.xlu0 %2517
        %2519 = vrot.lane.b32.xlu0 %v2512, 64
        %v2520 = vpop.permute.xlu0 %2519
        %2521 = vrot.lane.b32.xlu0 %v2514, 64
        %v2522 = vpop.permute.xlu0 %2521
        %2523 = vrot.lane.b32.xlu0 %v2516, 64
        %v2524 = vpop.permute.xlu0 %2523
        %2525 = vrot.lane.b32.xlu0 %v2515, 64
        %v2526 = vpop.permute.xlu0 %2525
        %v2527 = vrot.slane %v2445, 5
        %v2528 = vrot.slane %v2447, 6
        %v2529 = vor.u32 %v2527, %v2528
        %v2530 = vrot.slane %v2456, 5
        %v2531 = vrot.slane %v2452, 6
        %v2532 = vor.u32 %v2530, %v2531
        %v2533 = vsel %vm1564, %v2529, %v2532
        %v2534 = vrot.slane %v2464, 5
        %v2535 = vrot.slane %v2460, 6
        %v2536 = vor.u32 %v2534, %v2535
        %v2537 = vsel %vm1564, %v2532, %v2536
        %v2538 = vrot.slane %v2472, 5
        %v2539 = vrot.slane %v2468, 6
        %v2540 = vor.u32 %v2538, %v2539
        %v2541 = vsel %vm1564, %v2536, %v2540
        %v2542 = vrot.slane %v2480, 5
        %v2543 = vrot.slane %v2476, 6
        %v2544 = vor.u32 %v2542, %v2543
        %v2545 = vsel %vm1564, %v2540, %v2544
        %vm2546 = vcmask 1041408
        %v2547 = vrot.slane %v2438, 6
        %v2548 = vrot.slane %v2439, 6
        %v2549 = vsel %vm2546, %v2547, %v2548
        %v2550 = vrot.slane %v2440, 6
        %v2551 = vsel %vm2546, %v2548, %v2550
        %v2552 = vrot.slane %v2441, 6
        %v2553 = vsel %vm2546, %v2550, %v2552
        %v2554 = vrot.slane %v2442, 6
        %v2555 = vsel %vm2546, %v2552, %v2554
        %2556 = vrot.lane.b32.xlu0 %v2549, 64
        %v2557 = vpop.permute.xlu0 %2556
        %2558 = vrot.lane.b32.xlu0 %v2551, 64
        %v2559 = vpop.permute.xlu0 %2558
        %2560 = vrot.lane.b32.xlu0 %v2553, 64
        %v2561 = vpop.permute.xlu0 %2560
        %2562 = vrot.lane.b32.xlu0 %v2555, 64
        %v2563 = vpop.permute.xlu0 %2562
        %2564 = vrot.lane.b32.xlu0 %v2554, 64
        %v2565 = vpop.permute.xlu0 %2564
        %vm2567 = vcmask 1045504
        %v2568 = vrot.slane %v2439, 2
        %v2569 = vrot.slane %v2440, 2
        %v2570 = vsel %vm2567, %v2568, %v2569
        %v2571 = vrot.slane %v2441, 2
        %v2572 = vsel %vm2567, %v2569, %v2571
        %v2573 = vrot.slane %v2442, 2
        %v2574 = vsel %vm2567, %v2571, %v2573
        %v2575 = vrot.slane %v2443, 2
        %v2576 = vsel %vm2567, %v2573, %v2575
        %vm2577 = vsmask.f32 5376
        %v2578 = vrot.slane %v2456, 2
        %v2579 = vrot.slane %v2452, 3
        %v2580 = vor.u32 %v2578, %v2579
        %v2581 = vrot.slane %v2464, 2
        %v2582 = vrot.slane %v2460, 3
        %v2583 = vor.u32 %v2581, %v2582
        %v2584 = vsel %vm2577, %v2580, %v2583
        %v2585 = vrot.slane %v2472, 2
        %v2586 = vrot.slane %v2468, 3
        %v2587 = vor.u32 %v2585, %v2586
        %v2588 = vsel %vm2577, %v2583, %v2587
        %v2589 = vrot.slane %v2480, 2
        %v2590 = vrot.slane %v2476, 3
        %v2591 = vor.u32 %v2589, %v2590
        %v2592 = vsel %vm2577, %v2587, %v2591
        %v2594 = vshrl.u32 %v2443, 16
        %v2596 = vrot.slane %v2594, 2
        %v2597 = vshll.u32 %v2443, 16
        %v2599 = vrot.slane %v2597, 3
        %v2600 = vor.u32 %v2596, %v2599
        %v2601 = vsel %vm2577, %v2591, %v2600
        %2602 = vrot.lane.b32.xlu0 %v2584, 64
        %v2603 = vpop.permute.xlu0 %2602
        %2604 = vrot.lane.b32.xlu0 %v2588, 64
        %v2605 = vpop.permute.xlu0 %2604
        %2606 = vrot.lane.b32.xlu0 %v2592, 64
        %v2607 = vpop.permute.xlu0 %2606
        %2608 = vrot.lane.b32.xlu0 %v2601, 64
        %v2609 = vpop.permute.xlu0 %2608
        %2610 = vrot.lane.b32.xlu0 %v2600, 64
        %v2611 = vpop.permute.xlu0 %2610
        %vm2612 = vcmask 1044480
        %v2613 = vrot.slane %v2439, 3
        %v2614 = vrot.slane %v2440, 3
        %v2615 = vsel %vm2612, %v2613, %v2614
        %v2616 = vrot.slane %v2441, 3
        %v2617 = vsel %vm2612, %v2614, %v2616
        %v2618 = vrot.slane %v2442, 3
        %v2619 = vsel %vm2612, %v2616, %v2618
        %v2620 = vrot.slane %v2443, 3
        %v2621 = vsel %vm2612, %v2618, %v2620
        %v2623 = vsel %vm1791, %v2438, %v2484
        %v2626 = vsel %vm1791, %v2439, %v2486
        %v2629 = vsel %vm1791, %v2440, %v2488
        %v2632 = vsel %vm1791, %v2441, %v2490
        %v2635 = vsel %vm1791, %v2442, %v2492
        %v2639 = vsel %vm1791, %v2501, %v2518
        %v2643 = vsel %vm1791, %v2503, %v2520
        %v2647 = vsel %vm1791, %v2505, %v2522
        %v2651 = vsel %vm1791, %v2507, %v2524
        %v2655 = vsel %vm1791, %v2506, %v2526
        %v2659 = vsel %vm1791, %v2533, %v2557
        %v2663 = vsel %vm1791, %v2537, %v2559
        %v2667 = vsel %vm1791, %v2541, %v2561
        %v2671 = vsel %vm1791, %v2545, %v2563
        %v2675 = vsel %vm1791, %v2544, %v2565
        %v2679 = vsel %vm1791, %v2570, %v2603
        %v2683 = vsel %vm1791, %v2572, %v2605
        %v2687 = vsel %vm1791, %v2574, %v2607
        %v2691 = vsel %vm1791, %v2576, %v2609
        %v2695 = vsel %vm1791, %v2575, %v2611
        %v2697 = vld [vmem:[%s5] sm:$0xf]
        %v2698 = vld [vmem:[%s5 + $0x4] sm:$0xf]
        %v2699 = vld [vmem:[%s5 + $0x8] sm:$0xf]
        %v2700 = vld [vmem:[%s5 + $0xc] sm:$0xf]
        %v2701 = vld [vmem:[%s5 + $0x10] sm:$0xf]
        %v2702 = vld [vmem:[%s5 + $0x14] sm:$0xf]
        %v2703 = vld [vmem:[%s5 + $0x18] sm:$0xf]
        %v2704 = vld [vmem:[%s5 + $0x1c] sm:$0xf]
        %v2705 = vld [vmem:[%s5 + $0x20] sm:$0xf]
        %v2706 = vld [vmem:[%s5 + $0x24] sm:$0xf]
        %v2707 = vld [vmem:[%s5 + $0x28] sm:$0xf]
        %v2708 = vld [vmem:[%s5 + $0x2c] sm:$0xf]
        %v2709 = vld [vmem:[%s5 + $0x30] sm:$0xf]
        %v2710 = vld [vmem:[%s5 + $0x34] sm:$0xf]
        %v2711 = vld [vmem:[%s5 + $0x38] sm:$0xf]
        %v2712 = vld [vmem:[%s5 + $0x3c] sm:$0xf]
        %v2713 = vld [vmem:[%s5 + $0x40] sm:$0xf]
        %v2714 = vld [vmem:[%s5 + $0x44] sm:$0xf]
        %v2715 = vld [vmem:[%s5 + $0x48] sm:$0xf]
        %v2716 = vld [vmem:[%s5 + $0x4c] sm:$0xf]
        %v2717 = vld [vmem:[%s5 + $0x50] sm:$0xf]
        %v2718 = vld [vmem:[%s5 + $0x54] sm:$0xf]
        %v2719 = vld [vmem:[%s5 + $0x58] sm:$0xf]
        %v2720 = vld [vmem:[%s5 + $0x5c] sm:$0xf]
        %v2721 = vld [vmem:[%s5 + $0x60] sm:$0xf]
        %v2722 = vld [vmem:[%s5 + $0x64] sm:$0xf]
        %v2723 = vld [vmem:[%s5 + $0x68] sm:$0xf]
        %v2724 = vld [vmem:[%s5 + $0x6c] sm:$0xf]
        %v2725 = vld [vmem:[%s5 + $0x70] sm:$0xf]
        %v2726 = vld [vmem:[%s5 + $0x74] sm:$0xf]
        %v2727 = vld [vmem:[%s5 + $0x78] sm:$0xf]
        %v2728 = vld [vmem:[%s5 + $0x7c] sm:$0xf]
        %v2729 = vld [vmem:[%s5 + $0x80] sm:$0xf]
        %v2730 = vld [vmem:[%s5 + $0x84] sm:$0xf]
        %v2731 = vld [vmem:[%s5 + $0x88] sm:$0xf]
        %v2732 = vld [vmem:[%s5 + $0x8c] sm:$0xf]
        %v2733 = vld [vmem:[%s5 + $0x90] sm:$0xf]
        %v2734 = vld [vmem:[%s5 + $0x94] sm:$0xf]
        %v2735 = vld [vmem:[%s5 + $0x98] sm:$0xf]
        %v2736 = vld [vmem:[%s5 + $0x9c] sm:$0xf]
        %v2737 = vld [vmem:[%s5 + $0xa0] sm:$0xf]
        %v2738 = vld [vmem:[%s5 + $0xa4] sm:$0xf]
        %v2739 = vld [vmem:[%s5 + $0xa8] sm:$0xf]
        %v2740 = vld [vmem:[%s5 + $0xac] sm:$0xf]
        %v2741 = vld [vmem:[%s5 + $0xb0] sm:$0xf]
        %v2742 = vld [vmem:[%s5 + $0xb4] sm:$0xf]
        %v2743 = vld [vmem:[%s5 + $0xb8] sm:$0xf]
        %v2744 = vld [vmem:[%s5 + $0xbc] sm:$0xf]
        %v2745 = vld [vmem:[%s5 + $0xc0] sm:$0xf]
        %v2746 = vld [vmem:[%s5 + $0xc4] sm:$0xf]
        %v2747 = vld [vmem:[%s5 + $0xc8] sm:$0xf]
        %v2748 = vld [vmem:[%s5 + $0xcc] sm:$0xf]
        %v2749 = vld [vmem:[%s5 + $0xd0] sm:$0xf]
        %v2750 = vld [vmem:[%s5 + $0xd4] sm:$0xf]
        %v2751 = vld [vmem:[%s5 + $0xd8] sm:$0xf]
        %v2752 = vld [vmem:[%s5 + $0xdc] sm:$0xf]
        %v2753 = vld [vmem:[%s5 + $0xe0] sm:$0xf]
        %v2754 = vld [vmem:[%s5 + $0xe4] sm:$0xf]
        %v2755 = vld [vmem:[%s5 + $0xe8] sm:$0xf]
        %v2756 = vld [vmem:[%s5 + $0xec] sm:$0xf]
        %v2757 = vld [vmem:[%s5 + $0xf0] sm:$0xf]
        %v2758 = vld [vmem:[%s5 + $0xf4] sm:$0xf]
        %v2759 = vld [vmem:[%s5 + $0xf8] sm:$0xf]
        %v2760 = vld [vmem:[%s5 + $0xfc] sm:$0xf]
        %v2761 = vld [vmem:[%s5 + $0x100] sm:$0xf]
        %v2762 = vld [vmem:[%s5 + $0x104] sm:$0xf]
        %v2763 = vld [vmem:[%s5 + $0x108] sm:$0xf]
        %v2764 = vld [vmem:[%s5 + $0x10c] sm:$0xf]
        %v2765 = vld [vmem:[%s5 + $0x110] sm:$0xf]
        %v2766 = vld [vmem:[%s5 + $0x114] sm:$0xf]
        %v2767 = vld [vmem:[%s5 + $0x118] sm:$0xf]
        %v2768 = vld [vmem:[%s5 + $0x11c] sm:$0xf]
        %v2769 = vld [vmem:[%s6] sm:$0x1]
        %v2771 = vlaneseq
        %v2772 = vshrl.u32 %v2771, 7
        %v2773 = vsub.s32 0, %v2772
        %v2774 = vrot.slane %v2769, %v2773
        %v2848 = vunpack.c.l.b16 %v2697
        %v2849 = vunpack.c.l.b16 %v2698
        %v2850 = vunpack.c.l.b16 %v2699
        %v2851 = vunpack.c.l.b16 %v2700
        %v2852 = vunpack.c.l.b16 %v2701
        %v2853 = vunpack.c.l.b16 %v2702
        %v2854 = vunpack.c.l.b16 %v2703
        %v2855 = vunpack.c.l.b16 %v2704
        %v2856 = vunpack.c.l.b16 %v2705
        %v2857 = vunpack.c.l.b16 %v2706
        %v2858 = vunpack.c.l.b16 %v2707
        %v2859 = vunpack.c.l.b16 %v2708
        %v2860 = vunpack.c.l.b16 %v2709
        %v2861 = vunpack.c.l.b16 %v2710
        %v2862 = vunpack.c.l.b16 %v2711
        %v2863 = vunpack.c.l.b16 %v2712
        %v2864 = vunpack.c.l.b16 %v2713
        %v2865 = vunpack.c.l.b16 %v2714
        %v2866 = vunpack.c.l.b16 %v2715
        %v2867 = vunpack.c.l.b16 %v2716
        %v2868 = vunpack.c.l.b16 %v2717
        %v2869 = vunpack.c.l.b16 %v2718
        %v2870 = vunpack.c.l.b16 %v2719
        %v2871 = vunpack.c.l.b16 %v2720
        %v2872 = vunpack.c.l.b16 %v2721
        %v2873 = vunpack.c.l.b16 %v2722
        %v2874 = vunpack.c.l.b16 %v2723
        %v2875 = vunpack.c.l.b16 %v2724
        %v2876 = vunpack.c.l.b16 %v2725
        %v2877 = vunpack.c.l.b16 %v2726
        %v2878 = vunpack.c.l.b16 %v2727
        %v2879 = vunpack.c.l.b16 %v2728
        %v2880 = vunpack.c.l.b16 %v2729
        %v2881 = vunpack.c.l.b16 %v2730
        %v2882 = vunpack.c.l.b16 %v2731
        %v2883 = vunpack.c.l.b16 %v2732
        %v2884 = vunpack.c.l.b16 %v2733
        %v2885 = vunpack.c.l.b16 %v2734
        %v2886 = vunpack.c.l.b16 %v2735
        %v2887 = vunpack.c.l.b16 %v2736
        %v2888 = vunpack.c.l.b16 %v2737
        %v2889 = vunpack.c.l.b16 %v2738
        %v2890 = vunpack.c.l.b16 %v2739
        %v2891 = vunpack.c.l.b16 %v2740
        %v2892 = vunpack.c.l.b16 %v2741
        %v2893 = vunpack.c.l.b16 %v2742
        %v2894 = vunpack.c.l.b16 %v2743
        %v2895 = vunpack.c.l.b16 %v2744
        %v2896 = vunpack.c.l.b16 %v2745
        %v2897 = vunpack.c.l.b16 %v2746
        %v2898 = vunpack.c.l.b16 %v2747
        %v2899 = vunpack.c.l.b16 %v2748
        %v2900 = vunpack.c.l.b16 %v2749
        %v2901 = vunpack.c.l.b16 %v2750
        %v2902 = vunpack.c.l.b16 %v2751
        %v2903 = vunpack.c.l.b16 %v2752
        %v2904 = vunpack.c.l.b16 %v2753
        %v2905 = vunpack.c.l.b16 %v2754
        %v2906 = vunpack.c.l.b16 %v2755
        %v2907 = vunpack.c.l.b16 %v2756
        %v2908 = vunpack.c.l.b16 %v2757
        %v2909 = vunpack.c.l.b16 %v2758
        %v2910 = vunpack.c.l.b16 %v2759
        %v2911 = vunpack.c.l.b16 %v2760
        %v2912 = vunpack.c.l.b16 %v2761
        %v2913 = vunpack.c.l.b16 %v2762
        %v2914 = vunpack.c.l.b16 %v2763
        %v2915 = vunpack.c.l.b16 %v2764
        %v2916 = vunpack.c.l.b16 %v2765
        %v2917 = vunpack.c.l.b16 %v2766
        %v2918 = vunpack.c.l.b16 %v2767
        %v2919 = vunpack.c.l.b16 %v2768
        %v2920 = vpack.c.b16 %v2849, %v2848
        %v2921 = vpack.c.b16 %v2851, %v2850
        %v2922 = vpack.c.b16 %v2853, %v2852
        %v2923 = vpack.c.b16 %v2855, %v2854
        %v2924 = vpack.c.b16 %v2857, %v2856
        %v2925 = vpack.c.b16 %v2859, %v2858
        %v2926 = vpack.c.b16 %v2861, %v2860
        %v2927 = vpack.c.b16 %v2863, %v2862
        %v2928 = vpack.c.b16 %v2865, %v2864
        %v2929 = vpack.c.b16 %v2867, %v2866
        %v2930 = vpack.c.b16 %v2869, %v2868
        %v2931 = vpack.c.b16 %v2871, %v2870
        %v2932 = vpack.c.b16 %v2873, %v2872
        %v2933 = vpack.c.b16 %v2875, %v2874
        %v2934 = vpack.c.b16 %v2877, %v2876
        %v2935 = vpack.c.b16 %v2879, %v2878
        %v2936 = vpack.c.b16 %v2881, %v2880
        %v2937 = vpack.c.b16 %v2883, %v2882
        %v2938 = vpack.c.b16 %v2885, %v2884
        %v2939 = vpack.c.b16 %v2887, %v2886
        %v2940 = vpack.c.b16 %v2889, %v2888
        %v2941 = vpack.c.b16 %v2891, %v2890
        %v2942 = vpack.c.b16 %v2893, %v2892
        %v2943 = vpack.c.b16 %v2895, %v2894
        %v2944 = vpack.c.b16 %v2897, %v2896
        %v2945 = vpack.c.b16 %v2899, %v2898
        %v2946 = vpack.c.b16 %v2901, %v2900
        %v2947 = vpack.c.b16 %v2903, %v2902
        %v2948 = vpack.c.b16 %v2905, %v2904
        %v2949 = vpack.c.b16 %v2907, %v2906
        %v2950 = vpack.c.b16 %v2909, %v2908
        %v2951 = vpack.c.b16 %v2911, %v2910
        %v2952 = vpack.c.b16 %v2913, %v2912
        %v2953 = vpack.c.b16 %v2915, %v2914
        %v2954 = vpack.c.b16 %v2917, %v2916
        %v2955 = vpack.c.b16 %v2919, %v2918
        %v2993 = vsel %vm1791, %v2615, 0
        %v2996 = vsel %vm1791, %v2617, 0
        %v2999 = vsel %vm1791, %v2619, 0
        %v3002 = vsel %vm1791, %v2621, 0
        %v3005 = vsel %vm1791, %v2620, 0
        %3007 = vmatprep.subr.bf16.mxu0 0
        %3008 = vmatpush1.bf16.msra.mxu0 %v2920
        %3009 = vmatprep.subr.bf16.mxu0 0
        %3010 = vmatpush1.bf16.msra.mxu0 %v2921
        %3011 = vmatprep.subr.bf16.mxu0 0
        %3012 = vmatpush1.bf16.msra.mxu0 %v2922
        %3013 = vmatprep.subr.bf16.mxu0 0
        %3014 = vmatpush1.bf16.msra.mxu0 %v2923
        %3015 = vmatprep.subr.bf16.mxu0 0
        %3016 = vmatpush1.bf16.msra.mxu0 %v2924
        %3017 = vmatprep.subr.bf16.mxu0 0
        %3018 = vmatpush1.bf16.msra.mxu0 %v2925
        %3019 = vmatprep.subr.bf16.mxu0 0
        %3020 = vmatpush1.bf16.msra.mxu0 %v2926
        %3021 = vmatprep.subr.bf16.mxu0 0
        %3022 = vmatpush1.bf16.msra.mxu0 %v2927
        %3023 = vmatprep.subr.bf16.mxu0 0
        %3024 = vmatpush1.bf16.msra.mxu0 %v2928
        %3025 = vmatprep.subr.bf16.mxu0 0
        %3026 = vmatpush1.bf16.msra.mxu0 %v2929
        %3027 = vmatprep.subr.bf16.mxu0 0
        %3028 = vmatpush1.bf16.msra.mxu0 %v2930
        %3029 = vmatprep.subr.bf16.mxu0 0
        %3030 = vmatpush1.bf16.msra.mxu0 %v2931
        %3031 = vmatprep.subr.bf16.mxu0 0
        %3032 = vmatpush1.bf16.msra.mxu0 %v2932
        %3033 = vmatprep.subr.bf16.mxu0 0
        %3034 = vmatpush1.bf16.msra.mxu0 %v2933
        %3035 = vmatprep.subr.bf16.mxu0 0
        %3036 = vmatpush1.bf16.msra.mxu0 %v2934
        %3037 = vmatprep.subr.bf16.mxu0 0
        %3038 = vmatpush1.bf16.msra.mxu0 %v2935
        %3039 = vmatprep.mubr.bf16.mxu0 %v2639
        %3040 = vmatmul.mubr.bf16.gmra.mrb[0].mxu0 %v2623
        %v3041 = vpop.f32.mrb[0].mxu0
        %v3042 = vadd.f32 %v2774, %v3041
        %v3043 = vpop.f32.mrb[0].mxu0
        %v3044 = vpop.f32.mrb[0].mxu0
        %v3045 = vadd.f32 %v2774, %v3044
        %v3046 = vpop.f32.mrb[0].mxu0
        %3047 = vmatprep.mubr.bf16.mxu0 %v2643
        %3048 = vmatmul.mubr.bf16.gmra.mrb[0].mxu0 %v2626
        %v3049 = vpop.f32.mrb[0].mxu0
        %v3050 = vadd.f32 %v2774, %v3049
        %v3051 = vpop.f32.mrb[0].mxu0
        %v3052 = vpop.f32.mrb[0].mxu0
        %v3053 = vadd.f32 %v2774, %v3052
        %v3054 = vpop.f32.mrb[0].mxu0
        %3055 = vmatprep.mubr.bf16.mxu0 %v2647
        %3056 = vmatmul.mubr.bf16.gmra.mrb[0].mxu0 %v2629
        %v3057 = vpop.f32.mrb[0].mxu0
        %v3058 = vadd.f32 %v2774, %v3057
        %v3059 = vpop.f32.mrb[0].mxu0
        %v3060 = vpop.f32.mrb[0].mxu0
        %v3061 = vadd.f32 %v2774, %v3060
        %v3062 = vpop.f32.mrb[0].mxu0
        %3063 = vmatprep.mubr.bf16.mxu0 %v2651
        %3064 = vmatmul.mubr.bf16.gmra.mrb[0].mxu0 %v2632
        %v3065 = vpop.f32.mrb[0].mxu0
        %v3066 = vadd.f32 %v2774, %v3065
        %v3067 = vpop.f32.mrb[0].mxu0
        %v3068 = vpop.f32.mrb[0].mxu0
        %v3069 = vadd.f32 %v2774, %v3068
        %v3070 = vpop.f32.mrb[0].mxu0
        %3071 = vmatprep.mubr.bf16.mxu0 %v2655
        %3072 = vmatmul.mubr.bf16.gmra.mrb[0].mxu0 %v2635
        %v3073 = vpop.f32.mrb[0].mxu0
        %v3074 = vadd.f32 %v2774, %v3073
        %v3075 = vpop.f32.mrb[0].mxu0
        %v3076 = vpop.f32.mrb[0].mxu0
        %v3077 = vpop.f32.mrb[0].mxu0
        %3078 = vdwg.mxu0
        %3079 = vmatprep.subr.bf16.mxu0 0
        %3080 = vmatpush1.bf16.msra.mxu0 %v2936
        %3081 = vmatprep.subr.bf16.mxu0 0
        %3082 = vmatpush1.bf16.msra.mxu0 %v2937
        %3083 = vmatprep.subr.bf16.mxu0 0
        %3084 = vmatpush1.bf16.msra.mxu0 %v2938
        %3085 = vmatprep.subr.bf16.mxu0 0
        %3086 = vmatpush1.bf16.msra.mxu0 %v2939
        %3087 = vmatprep.subr.bf16.mxu0 0
        %3088 = vmatpush1.bf16.msra.mxu0 %v2940
        %3089 = vmatprep.subr.bf16.mxu0 0
        %3090 = vmatpush1.bf16.msra.mxu0 %v2941
        %3091 = vmatprep.subr.bf16.mxu0 0
        %3092 = vmatpush1.bf16.msra.mxu0 %v2942
        %3093 = vmatprep.subr.bf16.mxu0 0
        %3094 = vmatpush1.bf16.msra.mxu0 %v2943
        %3095 = vmatprep.subr.bf16.mxu0 0
        %3096 = vmatpush1.bf16.msra.mxu0 %v2944
        %3097 = vmatprep.subr.bf16.mxu0 0
        %3098 = vmatpush1.bf16.msra.mxu0 %v2945
        %3099 = vmatprep.subr.bf16.mxu0 0
        %3100 = vmatpush1.bf16.msra.mxu0 %v2946
        %3101 = vmatprep.subr.bf16.mxu0 0
        %3102 = vmatpush1.bf16.msra.mxu0 %v2947
        %3103 = vmatprep.subr.bf16.mxu0 0
        %3104 = vmatpush1.bf16.msra.mxu0 %v2948
        %3105 = vmatprep.subr.bf16.mxu0 0
        %3106 = vmatpush1.bf16.msra.mxu0 %v2949
        %3107 = vmatprep.subr.bf16.mxu0 0
        %3108 = vmatpush1.bf16.msra.mxu0 %v2950
        %3109 = vmatprep.subr.bf16.mxu0 0
        %3110 = vmatpush1.bf16.msra.mxu0 %v2951
        %3111 = vmatprep.mubr.bf16.mxu0 %v2679
        %3112 = vmatmul.mubr.bf16.gmra.mrb[0].mxu0 %v2659
        %v3113 = vpop.f32.mrb[0].mxu0
        %v3114 = vadd.f32 %v3042, %v3113
        %v3115 = vpop.f32.mrb[0].mxu0
        %v3116 = vpop.f32.mrb[0].mxu0
        %v3117 = vadd.f32 %v3045, %v3116
        %v3118 = vpop.f32.mrb[0].mxu0
        %3119 = vmatprep.mubr.bf16.mxu0 %v2683
        %3120 = vmatmul.mubr.bf16.gmra.mrb[0].mxu0 %v2663
        %v3121 = vpop.f32.mrb[0].mxu0
        %v3122 = vadd.f32 %v3050, %v3121
        %v3123 = vpop.f32.mrb[0].mxu0
        %v3124 = vpop.f32.mrb[0].mxu0
        %v3125 = vadd.f32 %v3053, %v3124
        %v3126 = vpop.f32.mrb[0].mxu0
        %3127 = vmatprep.mubr.bf16.mxu0 %v2687
        %3128 = vmatmul.mubr.bf16.gmra.mrb[0].mxu0 %v2667
        %v3129 = vpop.f32.mrb[0].mxu0
        %v3130 = vadd.f32 %v3058, %v3129
        %v3131 = vpop.f32.mrb[0].mxu0
        %v3132 = vpop.f32.mrb[0].mxu0
        %v3133 = vadd.f32 %v3061, %v3132
        %v3134 = vpop.f32.mrb[0].mxu0
        %3135 = vmatprep.mubr.bf16.mxu0 %v2691
        %3136 = vmatmul.mubr.bf16.gmra.mrb[0].mxu0 %v2671
        %v3137 = vpop.f32.mrb[0].mxu0
        %v3138 = vadd.f32 %v3066, %v3137
        %v3139 = vpop.f32.mrb[0].mxu0
        %v3140 = vpop.f32.mrb[0].mxu0
        %v3141 = vadd.f32 %v3069, %v3140
        %v3142 = vpop.f32.mrb[0].mxu0
        %3143 = vmatprep.mubr.bf16.mxu0 %v2695
        %3144 = vmatmul.mubr.bf16.gmra.mrb[0].mxu0 %v2675
        %v3145 = vpop.f32.mrb[0].mxu0
        %v3146 = vadd.f32 %v3074, %v3145
        %v3147 = vpop.f32.mrb[0].mxu0
        %v3148 = vpop.f32.mrb[0].mxu0
        %v3149 = vpop.f32.mrb[0].mxu0
        %3150 = vdwg.mxu0
        %3151 = vmatprep.subr.bf16.mxu0 0
        %3152 = vmatpush1.bf16.msra.mxu0 %v2952
        %3153 = vmatprep.subr.bf16.mxu0 0
        %3154 = vmatpush1.bf16.msra.mxu0 %v2953
        %3155 = vmatprep.subr.bf16.mxu0 0
        %3156 = vmatpush1.bf16.msra.mxu0 %v2954
        %3157 = vmatprep.subr.bf16.mxu0 0
        %3158 = vmatpush1.bf16.msra.mxu0 %v2955
        %3159 = vmatprep.subr.bf16.mxu0 0
        %3160 = vmatpush1.bf16.msra.mxu0 0
        %3161 = vmatprep.subr.bf16.mxu0 0
        %3162 = vmatpush1.bf16.msra.mxu0 0
        %3163 = vmatprep.subr.bf16.mxu0 0
        %3164 = vmatpush1.bf16.msra.mxu0 0
        %3165 = vmatprep.subr.bf16.mxu0 0
        %3166 = vmatpush1.bf16.msra.mxu0 0
        %3167 = vmatprep.subr.bf16.mxu0 0
        %3168 = vmatpush1.bf16.msra.mxu0 0
        %3169 = vmatprep.subr.bf16.mxu0 0
        %3170 = vmatpush1.bf16.msra.mxu0 0
        %3171 = vmatprep.subr.bf16.mxu0 0
        %3172 = vmatpush1.bf16.msra.mxu0 0
        %3173 = vmatprep.subr.bf16.mxu0 0
        %3174 = vmatpush1.bf16.msra.mxu0 0
        %3175 = vmatprep.subr.bf16.mxu0 0
        %3176 = vmatpush1.bf16.msra.mxu0 0
        %3177 = vmatprep.subr.bf16.mxu0 0
        %3178 = vmatpush1.bf16.msra.mxu0 0
        %3179 = vmatprep.subr.bf16.mxu0 0
        %3180 = vmatpush1.bf16.msra.mxu0 0
        %3181 = vmatprep.subr.bf16.mxu0 0
        %3182 = vmatpush1.bf16.msra.mxu0 0
        %3183 = vmatprep.mubr.bf16.mxu0 0
        %3184 = vmatmul.mubr.bf16.gmra.mrb[0].mxu0 %v2993
        %v3185 = vpop.f32.mrb[0].mxu0
        %v3186 = vadd.f32 %v3114, %v3185
        %v3187 = vpop.f32.mrb[0].mxu0
        %v3188 = vpop.f32.mrb[0].mxu0
        %v3189 = vadd.f32 %v3117, %v3188
        %v3190 = vpop.f32.mrb[0].mxu0
        %3191 = vmatprep.mubr.bf16.mxu0 0
        %3192 = vmatmul.mubr.bf16.gmra.mrb[0].mxu0 %v2996
        %v3193 = vpop.f32.mrb[0].mxu0
        %v3194 = vadd.f32 %v3122, %v3193
        %v3195 = vpop.f32.mrb[0].mxu0
        %v3196 = vpop.f32.mrb[0].mxu0
        %v3197 = vadd.f32 %v3125, %v3196
        %v3198 = vpop.f32.mrb[0].mxu0
        %3199 = vmatprep.mubr.bf16.mxu0 0
        %3200 = vmatmul.mubr.bf16.gmra.mrb[0].mxu0 %v2999
        %v3201 = vpop.f32.mrb[0].mxu0
        %v3202 = vadd.f32 %v3130, %v3201
        %v3203 = vpop.f32.mrb[0].mxu0
        %v3204 = vpop.f32.mrb[0].mxu0
        %v3205 = vadd.f32 %v3133, %v3204
        %v3206 = vpop.f32.mrb[0].mxu0
        %3207 = vmatprep.mubr.bf16.mxu0 0
        %3208 = vmatmul.mubr.bf16.gmra.mrb[0].mxu0 %v3002
        %v3209 = vpop.f32.mrb[0].mxu0
        %v3210 = vadd.f32 %v3138, %v3209
        %v3211 = vpop.f32.mrb[0].mxu0
        %v3212 = vpop.f32.mrb[0].mxu0
        %v3213 = vadd.f32 %v3141, %v3212
        %v3214 = vpop.f32.mrb[0].mxu0
        %3215 = vmatprep.mubr.bf16.mxu0 0
        %3216 = vmatmul.mubr.bf16.gmra.mrb[0].mxu0 %v3005
        %v3217 = vpop.f32.mrb[0].mxu0
        %v3218 = vadd.f32 %v3146, %v3217
        %v3219 = vpop.f32.mrb[0].mxu0
        %v3220 = vpop.f32.mrb[0].mxu0
        %v3221 = vpop.f32.mrb[0].mxu0
        %3222 = vdwg.mxu0
        %v3223 = vmax.f32 %v3186, 0.0
        %v3224 = vmax.f32 %v3189, 0.0
        %v3225 = vmax.f32 %v3194, 0.0
        %v3226 = vmax.f32 %v3197, 0.0
        %v3227 = vmax.f32 %v3202, 0.0
        %v3228 = vmax.f32 %v3205, 0.0
        %v3229 = vmax.f32 %v3210, 0.0
        %v3230 = vmax.f32 %v3213, 0.0
        %v3231 = vmax.f32 %v3218, 0.0
        %v3232 = vpack.c.bf16 %v3224, %v3223
        %v3233 = vpack.c.bf16 %v3226, %v3225
        %v3234 = vpack.c.bf16 %v3228, %v3227
        %v3235 = vpack.c.bf16 %v3230, %v3229
        %v3236 = vpack.c.bf16 %v3231, %v3231
        %v3238 = vshrl.u32 %v3232, 16
        %3240 = vrot.lane.b32.xlu0 %v3238, 64
        %v3241 = vpop.permute.xlu0 %3240
        %v3243 = vrot.slane %v3232, 1
        %v3244 = vrot.slane %v3238, 1
        %3245 = vrot.lane.b32.xlu0 %v3244, 64
        %v3246 = vpop.permute.xlu0 %3245
        %v3247 = vrot.slane %v3232, 2
        %v3248 = vrot.slane %v3238, 2
        %3249 = vrot.lane.b32.xlu0 %v3248, 64
        %v3250 = vpop.permute.xlu0 %3249
        %v3251 = vrot.slane %v3232, 3
        %v3252 = vrot.slane %v3232, 5
        %3253 = vrot.lane.b32.xlu0 %v3252, 64
        %v3254 = vpop.permute.xlu0 %3253
        %v3255 = vrot.slane %v3238, 5
        %v3256 = vrot.slane %v3232, 6
        %3257 = vrot.lane.b32.xlu0 %v3256, 64
        %v3258 = vpop.permute.xlu0 %3257
        %v3259 = vrot.slane %v3238, 6
        %v3260 = vrot.slane %v3232, 7
        %3261 = vrot.lane.b32.xlu0 %v3260, 64
        %v3262 = vpop.permute.xlu0 %3261
        %v3263 = vrot.slane %v3238, 7
        %3265 = vrot.lane.b32.xlu0 %v3233, 64
        %v3266 = vpop.permute.xlu0 %3265
        %v3267 = vrot.slane %v3233, 2
        %v3269 = vshrl.u32 %v3233, 16
        %v3271 = vrot.slane %v3269, 2
        %3272 = vrot.lane.b32.xlu0 %v3271, 64
        %v3273 = vpop.permute.xlu0 %3272
        %v3275 = vsel %vm1791, %v3232, %v3241
        %v3279 = vsel %vm1791, %v3243, %v3246
        %v3283 = vsel %vm1791, %v3247, %v3250
        %v3287 = vsel %vm1791, %v3251, %v3254
        %v3291 = vsel %vm1791, %v3255, %v3258
        %v3295 = vsel %vm1791, %v3259, %v3262
        %v3299 = vsel %vm1791, %v3263, %v3266
        %v3303 = vsel %vm1791, %v3267, %v3273
        %3305 = vrot.lane.b32.xlu0 %v3269, 64
        %v3306 = vpop.permute.xlu0 %3305
        %v3307 = vrot.slane %v3233, 1
        %v3308 = vrot.slane %v3269, 1
        %3309 = vrot.lane.b32.xlu0 %v3308, 64
        %v3310 = vpop.permute.xlu0 %3309
        %v3311 = vrot.slane %v3233, 4
        %3312 = vrot.lane.b32.xlu0 %v3311, 64
        %v3313 = vpop.permute.xlu0 %3312
        %v3314 = vrot.slane %v3269, 4
        %v3316 = vrot.slane %v3234, 5
        %3317 = vrot.lane.b32.xlu0 %v3316, 64
        %v3318 = vpop.permute.xlu0 %3317
        %v3320 = vshrl.u32 %v3234, 16
        %v3322 = vrot.slane %v3320, 5
        %v3323 = vrot.slane %v3234, 6
        %3324 = vrot.lane.b32.xlu0 %v3323, 64
        %v3325 = vpop.permute.xlu0 %3324
        %v3326 = vrot.slane %v3320, 6
        %v3327 = vrot.slane %v3234, 7
        %3328 = vrot.lane.b32.xlu0 %v3327, 64
        %v3329 = vpop.permute.xlu0 %3328
        %v3330 = vrot.slane %v3234, 1
        %v3331 = vrot.slane %v3320, 1
        %3332 = vrot.lane.b32.xlu0 %v3331, 64
        %v3333 = vpop.permute.xlu0 %3332
        %v3334 = vrot.slane %v3234, 2
        %v3335 = vrot.slane %v3320, 2
        %3336 = vrot.lane.b32.xlu0 %v3335, 64
        %v3337 = vpop.permute.xlu0 %3336
        %v3339 = vsel %vm1791, %v3233, %v3306
        %v3342 = vsel %vm1791, %v3307, %v3310
        %v3344 = vsel %vm1791, %v3267, %v3313
        %v3347 = vsel %vm1791, %v3314, %v3318
        %v3350 = vsel %vm1791, %v3322, %v3325
        %v3353 = vsel %vm1791, %v3326, %v3329
        %v3356 = vsel %vm1791, %v3330, %v3333
        %v3359 = vsel %vm1791, %v3334, %v3337
        %3360 = vrot.lane.b32.xlu0 %v3320, 64
        %v3361 = vpop.permute.xlu0 %3360
        %v3363 = vrot.slane %v3235, 3
        %3364 = vrot.lane.b32.xlu0 %v3363, 64
        %v3365 = vpop.permute.xlu0 %3364
        %v3367 = vshrl.u32 %v3235, 16
        %v3369 = vrot.slane %v3367, 3
        %v3370 = vrot.slane %v3235, 4
        %3371 = vrot.lane.b32.xlu0 %v3370, 64
        %v3372 = vpop.permute.xlu0 %3371
        %v3373 = vrot.slane %v3367, 4
        %v3374 = vrot.slane %v3235, 5
        %3375 = vrot.lane.b32.xlu0 %v3374, 64
        %v3376 = vpop.permute.xlu0 %3375
        %v3377 = vrot.slane %v3367, 5
        %v3378 = vrot.slane %v3235, 6
        %3379 = vrot.lane.b32.xlu0 %v3378, 64
        %v3380 = vpop.permute.xlu0 %3379
        %3381 = vrot.lane.b32.xlu0 %v3367, 64
        %v3382 = vpop.permute.xlu0 %3381
        %v3383 = vrot.slane %v3235, 1
        %v3384 = vrot.slane %v3367, 1
        %3385 = vrot.lane.b32.xlu0 %v3384, 64
        %v3386 = vpop.permute.xlu0 %3385
        %v3388 = vrot.slane %v3236, 2
        %v3390 = vshrl.u32 %v3236, 16
        %v3392 = vrot.slane %v3390, 2
        %3393 = vrot.lane.b32.xlu0 %v3392, 64
        %v3394 = vpop.permute.xlu0 %3393
        %v3396 = vsel %vm1791, %v3234, %v3361
        %v3398 = vsel %vm1791, %v3330, %v3365
        %v3401 = vsel %vm1791, %v3369, %v3372
        %v3404 = vsel %vm1791, %v3373, %v3376
        %v3407 = vsel %vm1791, %v3377, %v3380
        %v3409 = vsel %vm1791, %v3235, %v3382
        %v3412 = vsel %vm1791, %v3383, %v3386
        %v3415 = vsel %vm1791, %v3388, %v3394
        %v3424 = vrot.slane %v3339, 3
        %v3425 = vrot.slane %v3342, 3
        %v3426 = vrot.slane %v3344, 3
        %v3427 = vrot.slane %v3347, 3
        %v3428 = vrot.slane %v3350, 3
        %v3429 = vrot.slane %v3353, 3
        %v3430 = vrot.slane %v3356, 3
        %v3431 = vrot.slane %v3359, 3
        %v3448 = vrot.slane %v3396, 6
        %v3449 = vrot.slane %v3398, 6
        %v3450 = vrot.slane %v3401, 6
        %v3451 = vrot.slane %v3404, 6
        %v3452 = vrot.slane %v3407, 6
        %v3453 = vrot.slane %v3409, 6
        %v3454 = vrot.slane %v3412, 6
        %v3455 = vrot.slane %v3415, 6
        %v3464 = vrot.slane %v3236, 1
        %v3465 = vld [vmem:[%s7] sm:$0xf]
        %v3466 = vld [vmem:[%s7 + $0x4] sm:$0xf]
        %v3467 = vld [vmem:[%s7 + $0x8] sm:$0xf]
        %v3468 = vld [vmem:[%s7 + $0xc] sm:$0xf]
        %v3469 = vld [vmem:[%s7 + $0x10] sm:$0xf]
        %v3470 = vld [vmem:[%s7 + $0x14] sm:$0xf]
        %v3471 = vld [vmem:[%s7 + $0x18] sm:$0xf]
        %v3472 = vld [vmem:[%s7 + $0x1c] sm:$0xf]
        %v3473 = vld [vmem:[%s7 + $0x20] sm:$0xf]
        %v3474 = vld [vmem:[%s7 + $0x24] sm:$0xf]
        %v3475 = vld [vmem:[%s7 + $0x28] sm:$0xf]
        %v3476 = vld [vmem:[%s7 + $0x2c] sm:$0xf]
        %v3477 = vld [vmem:[%s7 + $0x30] sm:$0xf]
        %v3478 = vld [vmem:[%s7 + $0x34] sm:$0xf]
        %v3479 = vld [vmem:[%s7 + $0x38] sm:$0xf]
        %v3480 = vld [vmem:[%s7 + $0x3c] sm:$0xf]
        %v3481 = vld [vmem:[%s7 + $0x40] sm:$0xf]
        %v3482 = vld [vmem:[%s7 + $0x44] sm:$0xf]
        %v3483 = vld [vmem:[%s7 + $0x48] sm:$0xf]
        %v3484 = vld [vmem:[%s7 + $0x4c] sm:$0xf]
        %v3485 = vld [vmem:[%s7 + $0x50] sm:$0xf]
        %v3486 = vld [vmem:[%s7 + $0x54] sm:$0xf]
        %v3487 = vld [vmem:[%s7 + $0x58] sm:$0xf]
        %v3488 = vld [vmem:[%s7 + $0x5c] sm:$0xf]
        %v3489 = vld [vmem:[%s7 + $0x60] sm:$0xf]
        %v3490 = vld [vmem:[%s7 + $0x64] sm:$0xf]
        %v3491 = vld [vmem:[%s7 + $0x68] sm:$0xf]
        %v3492 = vld [vmem:[%s7 + $0x6c] sm:$0xf]
        %v3493 = vld [vmem:[%s7 + $0x70] sm:$0xf]
        %v3494 = vld [vmem:[%s7 + $0x74] sm:$0xf]
        %v3495 = vld [vmem:[%s7 + $0x78] sm:$0xf]
        %v3496 = vld [vmem:[%s7 + $0x7c] sm:$0xf]
        %v3497 = vld [vmem:[%s7 + $0x80] sm:$0xf]
        %v3498 = vld [vmem:[%s7 + $0x84] sm:$0xf]
        %v3499 = vld [vmem:[%s7 + $0x88] sm:$0xf]
        %v3500 = vld [vmem:[%s7 + $0x8c] sm:$0xf]
        %v3501 = vld [vmem:[%s7 + $0x90] sm:$0xf]
        %v3502 = vld [vmem:[%s7 + $0x94] sm:$0xf]
        %v3503 = vld [vmem:[%s7 + $0x98] sm:$0xf]
        %v3504 = vld [vmem:[%s7 + $0x9c] sm:$0xf]
        %v3505 = vld [vmem:[%s7 + $0xa0] sm:$0xf]
        %v3506 = vld [vmem:[%s7 + $0xa4] sm:$0xf]
        %v3507 = vld [vmem:[%s7 + $0xa8] sm:$0xf]
        %v3508 = vld [vmem:[%s7 + $0xac] sm:$0xf]
        %v3509 = vld [vmem:[%s7 + $0xb0] sm:$0xf]
        %v3510 = vld [vmem:[%s7 + $0xb4] sm:$0xf]
        %v3511 = vld [vmem:[%s7 + $0xb8] sm:$0xf]
        %v3512 = vld [vmem:[%s7 + $0xbc] sm:$0xf]
        %v3513 = vld [vmem:[%s7 + $0xc0] sm:$0xf]
        %v3514 = vld [vmem:[%s7 + $0xc4] sm:$0xf]
        %v3515 = vld [vmem:[%s7 + $0xc8] sm:$0xf]
        %v3516 = vld [vmem:[%s7 + $0xcc] sm:$0xf]
        %v3517 = vld [vmem:[%s7 + $0xd0] sm:$0xf]
        %v3518 = vld [vmem:[%s7 + $0xd4] sm:$0xf]
        %v3519 = vld [vmem:[%s7 + $0xd8] sm:$0xf]
        %v3520 = vld [vmem:[%s7 + $0xdc] sm:$0xf]
        %v3521 = vld [vmem:[%s7 + $0xe0] sm:$0xf]
        %v3522 = vld [vmem:[%s7 + $0xe4] sm:$0xf]
        %v3523 = vld [vmem:[%s7 + $0xe8] sm:$0xf]
        %v3524 = vld [vmem:[%s7 + $0xec] sm:$0xf]
        %v3525 = vld [vmem:[%s7 + $0xf0] sm:$0xf]
        %v3526 = vld [vmem:[%s7 + $0xf4] sm:$0xf]
        %v3527 = vld [vmem:[%s7 + $0xf8] sm:$0xf]
        %v3528 = vld [vmem:[%s7 + $0xfc] sm:$0xf]
        %v3529 = vld [vmem:[%s7 + $0x100] sm:$0xf]
        %v3530 = vld [vmem:[%s7 + $0x104] sm:$0xf]
        %v3531 = vld [vmem:[%s7 + $0x108] sm:$0xf]
        %v3532 = vld [vmem:[%s7 + $0x10c] sm:$0xf]
        %v3533 = vld [vmem:[%s7 + $0x110] sm:$0xf]
        %v3534 = vld [vmem:[%s7 + $0x114] sm:$0xf]
        %v3535 = vld [vmem:[%s7 + $0x118] sm:$0xf]
        %v3536 = vld [vmem:[%s7 + $0x11c] sm:$0xf]
        %v3537 = vld [vmem:[%s7 + $0x120] sm:$0xf]
        %v3538 = vld [vmem:[%s7 + $0x124] sm:$0xf]
        %v3539 = vld [vmem:[%s7 + $0x128] sm:$0xf]
        %v3540 = vld [vmem:[%s7 + $0x12c] sm:$0xf]
        %v3541 = vld [vmem:[%s7 + $0x130] sm:$0xf]
        %v3542 = vld [vmem:[%s7 + $0x134] sm:$0xf]
        %v3543 = vld [vmem:[%s7 + $0x138] sm:$0xf]
        %v3544 = vld [vmem:[%s7 + $0x13c] sm:$0xf]
        %v3545 = vld [vmem:[%s7 + $0x140] sm:$0xf]
        %v3546 = vld [vmem:[%s7 + $0x144] sm:$0xf]
        %v3547 = vld [vmem:[%s7 + $0x148] sm:$0xf]
        %v3548 = vld [vmem:[%s7 + $0x14c] sm:$0xf]
        %v3549 = vld [vmem:[%s7 + $0x150] sm:$0xf]
        %v3550 = vld [vmem:[%s7 + $0x154] sm:$0xf]
        %v3551 = vld [vmem:[%s7 + $0x158] sm:$0xf]
        %v3552 = vld [vmem:[%s7 + $0x15c] sm:$0xf]
        %v3553 = vld [vmem:[%s7 + $0x160] sm:$0xf]
        %v3554 = vld [vmem:[%s7 + $0x164] sm:$0xf]
        %v3555 = vld [vmem:[%s7 + $0x168] sm:$0xf]
        %v3556 = vld [vmem:[%s7 + $0x16c] sm:$0xf]
        %v3557 = vld [vmem:[%s7 + $0x170] sm:$0xf]
        %v3558 = vld [vmem:[%s7 + $0x174] sm:$0xf]
        %v3559 = vld [vmem:[%s7 + $0x178] sm:$0xf]
        %v3560 = vld [vmem:[%s7 + $0x17c] sm:$0xf]
        %v3561 = vld [vmem:[%s7 + $0x180] sm:$0xf]
        %v3562 = vld [vmem:[%s7 + $0x184] sm:$0xf]
        %v3563 = vld [vmem:[%s7 + $0x188] sm:$0xf]
        %v3564 = vld [vmem:[%s7 + $0x18c] sm:$0xf]
        %v3565 = vld [vmem:[%s7 + $0x190] sm:$0xf]
        %v3566 = vld [vmem:[%s7 + $0x194] sm:$0xf]
        %v3567 = vld [vmem:[%s7 + $0x198] sm:$0xf]
        %v3568 = vld [vmem:[%s7 + $0x19c] sm:$0xf]
        %v3569 = vld [vmem:[%s7 + $0x1a0] sm:$0xf]
        %v3570 = vld [vmem:[%s7 + $0x1a4] sm:$0xf]
        %v3571 = vld [vmem:[%s7 + $0x1a8] sm:$0xf]
        %v3572 = vld [vmem:[%s7 + $0x1ac] sm:$0xf]
        %v3573 = vld [vmem:[%s7 + $0x1b0] sm:$0xf]
        %v3574 = vld [vmem:[%s7 + $0x1b4] sm:$0xf]
        %v3575 = vld [vmem:[%s7 + $0x1b8] sm:$0xf]
        %v3576 = vld [vmem:[%s7 + $0x1bc] sm:$0xf]
        %v3577 = vld [vmem:[%s7 + $0x1c0] sm:$0xf]
        %v3578 = vld [vmem:[%s7 + $0x1c4] sm:$0xf]
        %v3579 = vld [vmem:[%s7 + $0x1c8] sm:$0xf]
        %v3580 = vld [vmem:[%s7 + $0x1cc] sm:$0xf]
        %v3581 = vld [vmem:[%s7 + $0x1d0] sm:$0xf]
        %v3582 = vld [vmem:[%s7 + $0x1d4] sm:$0xf]
        %v3583 = vld [vmem:[%s7 + $0x1d8] sm:$0xf]
        %v3584 = vld [vmem:[%s7 + $0x1dc] sm:$0xf]
        %v3585 = vld [vmem:[%s7 + $0x1e0] sm:$0xf]
        %v3586 = vld [vmem:[%s7 + $0x1e4] sm:$0xf]
        %v3587 = vld [vmem:[%s7 + $0x1e8] sm:$0xf]
        %v3588 = vld [vmem:[%s7 + $0x1ec] sm:$0xf]
        %v3589 = vld [vmem:[%s7 + $0x1f0] sm:$0xf]
        %v3590 = vld [vmem:[%s7 + $0x1f4] sm:$0xf]
        %v3591 = vld [vmem:[%s7 + $0x1f8] sm:$0xf]
        %v3592 = vld [vmem:[%s7 + $0x1fc] sm:$0xf]
        %v3593 = vld [vmem:[%s7 + $0x200] sm:$0xf]
        %v3594 = vld [vmem:[%s7 + $0x204] sm:$0xf]
        %v3595 = vld [vmem:[%s7 + $0x208] sm:$0xf]
        %v3596 = vld [vmem:[%s7 + $0x20c] sm:$0xf]
        %v3597 = vld [vmem:[%s7 + $0x210] sm:$0xf]
        %v3598 = vld [vmem:[%s7 + $0x214] sm:$0xf]
        %v3599 = vld [vmem:[%s7 + $0x218] sm:$0xf]
        %v3600 = vld [vmem:[%s7 + $0x21c] sm:$0xf]
        %v3601 = vld [vmem:[%s7 + $0x220] sm:$0xf]
        %v3602 = vld [vmem:[%s7 + $0x224] sm:$0xf]
        %v3603 = vld [vmem:[%s7 + $0x228] sm:$0xf]
        %v3604 = vld [vmem:[%s7 + $0x22c] sm:$0xf]
        %v3605 = vld [vmem:[%s7 + $0x230] sm:$0xf]
        %v3606 = vld [vmem:[%s7 + $0x234] sm:$0xf]
        %v3607 = vld [vmem:[%s7 + $0x238] sm:$0xf]
        %v3608 = vld [vmem:[%s7 + $0x23c] sm:$0xf]
        %v3609 = vld [vmem:[%s7 + $0x240] sm:$0xf]
        %v3610 = vld [vmem:[%s7 + $0x244] sm:$0xf]
        %v3611 = vld [vmem:[%s7 + $0x248] sm:$0xf]
        %v3612 = vld [vmem:[%s7 + $0x24c] sm:$0xf]
        %v3613 = vld [vmem:[%s7 + $0x250] sm:$0xf]
        %v3614 = vld [vmem:[%s7 + $0x254] sm:$0xf]
        %v3615 = vld [vmem:[%s7 + $0x258] sm:$0xf]
        %v3616 = vld [vmem:[%s7 + $0x25c] sm:$0xf]
        %v3617 = vld [vmem:[%s7 + $0x260] sm:$0xf]
        %v3618 = vld [vmem:[%s7 + $0x264] sm:$0xf]
        %v3619 = vld [vmem:[%s7 + $0x268] sm:$0xf]
        %v3620 = vld [vmem:[%s7 + $0x26c] sm:$0xf]
        %v3621 = vld [vmem:[%s7 + $0x270] sm:$0xf]
        %v3622 = vld [vmem:[%s7 + $0x274] sm:$0xf]
        %v3623 = vld [vmem:[%s7 + $0x278] sm:$0xf]
        %v3624 = vld [vmem:[%s7 + $0x27c] sm:$0xf]
        %v3625 = vld [vmem:[%s7 + $0x280] sm:$0xf]
        %v3626 = vld [vmem:[%s7 + $0x284] sm:$0xf]
        %v3627 = vld [vmem:[%s7 + $0x288] sm:$0xf]
        %v3628 = vld [vmem:[%s7 + $0x28c] sm:$0xf]
        %v3629 = vld [vmem:[%s7 + $0x290] sm:$0xf]
        %v3630 = vld [vmem:[%s7 + $0x294] sm:$0xf]
        %v3631 = vld [vmem:[%s7 + $0x298] sm:$0xf]
        %v3632 = vld [vmem:[%s7 + $0x29c] sm:$0xf]
        %v3633 = vld [vmem:[%s7 + $0x2a0] sm:$0xf]
        %v3634 = vld [vmem:[%s7 + $0x2a4] sm:$0xf]
        %v3635 = vld [vmem:[%s7 + $0x2a8] sm:$0xf]
        %v3636 = vld [vmem:[%s7 + $0x2ac] sm:$0xf]
        %v3637 = vld [vmem:[%s7 + $0x2b0] sm:$0xf]
        %v3638 = vld [vmem:[%s7 + $0x2b4] sm:$0xf]
        %v3639 = vld [vmem:[%s7 + $0x2b8] sm:$0xf]
        %v3640 = vld [vmem:[%s7 + $0x2bc] sm:$0xf]
        %v3641 = vld [vmem:[%s7 + $0x2c0] sm:$0xf]
        %v3642 = vld [vmem:[%s7 + $0x2c4] sm:$0xf]
        %v3643 = vld [vmem:[%s7 + $0x2c8] sm:$0xf]
        %v3644 = vld [vmem:[%s7 + $0x2cc] sm:$0xf]
        %v3645 = vld [vmem:[%s7 + $0x2d0] sm:$0xf]
        %v3646 = vld [vmem:[%s7 + $0x2d4] sm:$0xf]
        %v3647 = vld [vmem:[%s7 + $0x2d8] sm:$0xf]
        %v3648 = vld [vmem:[%s7 + $0x2dc] sm:$0xf]
        %v3649 = vld [vmem:[%s7 + $0x2e0] sm:$0xf]
        %v3650 = vld [vmem:[%s7 + $0x2e4] sm:$0xf]
        %v3651 = vld [vmem:[%s7 + $0x2e8] sm:$0xf]
        %v3652 = vld [vmem:[%s7 + $0x2ec] sm:$0xf]
        %v3653 = vld [vmem:[%s7 + $0x2f0] sm:$0xf]
        %v3654 = vld [vmem:[%s7 + $0x2f4] sm:$0xf]
        %v3655 = vld [vmem:[%s7 + $0x2f8] sm:$0xf]
        %v3656 = vld [vmem:[%s7 + $0x2fc] sm:$0xf]
        %v3657 = vld [vmem:[%s7 + $0x300] sm:$0xf]
        %v3658 = vld [vmem:[%s7 + $0x304] sm:$0xf]
        %v3659 = vld [vmem:[%s7 + $0x308] sm:$0xf]
        %v3660 = vld [vmem:[%s7 + $0x30c] sm:$0xf]
        %v3661 = vld [vmem:[%s7 + $0x310] sm:$0xf]
        %v3662 = vld [vmem:[%s7 + $0x314] sm:$0xf]
        %v3663 = vld [vmem:[%s7 + $0x318] sm:$0xf]
        %v3664 = vld [vmem:[%s7 + $0x31c] sm:$0xf]
        %v3665 = vld [vmem:[%s7 + $0x320] sm:$0xf]
        %v3666 = vld [vmem:[%s7 + $0x324] sm:$0xf]
        %v3667 = vld [vmem:[%s7 + $0x328] sm:$0xf]
        %v3668 = vld [vmem:[%s7 + $0x32c] sm:$0xf]
        %v3669 = vld [vmem:[%s7 + $0x330] sm:$0xf]
        %v3670 = vld [vmem:[%s7 + $0x334] sm:$0xf]
        %v3671 = vld [vmem:[%s7 + $0x338] sm:$0xf]
        %v3672 = vld [vmem:[%s7 + $0x33c] sm:$0xf]
        %v3673 = vld [vmem:[%s7 + $0x340] sm:$0xf]
        %v3674 = vld [vmem:[%s7 + $0x344] sm:$0xf]
        %v3675 = vld [vmem:[%s7 + $0x348] sm:$0xf]
        %v3676 = vld [vmem:[%s7 + $0x34c] sm:$0xf]
        %v3677 = vld [vmem:[%s7 + $0x350] sm:$0xf]
        %v3678 = vld [vmem:[%s7 + $0x354] sm:$0xf]
        %v3679 = vld [vmem:[%s7 + $0x358] sm:$0xf]
        %v3680 = vld [vmem:[%s7 + $0x35c] sm:$0xf]
        %v3681 = vld [vmem:[%s7 + $0x360] sm:$0xf]
        %v3682 = vld [vmem:[%s7 + $0x364] sm:$0xf]
        %v3683 = vld [vmem:[%s7 + $0x368] sm:$0xf]
        %v3684 = vld [vmem:[%s7 + $0x36c] sm:$0xf]
        %v3685 = vld [vmem:[%s7 + $0x370] sm:$0xf]
        %v3686 = vld [vmem:[%s7 + $0x374] sm:$0xf]
        %v3687 = vld [vmem:[%s7 + $0x378] sm:$0xf]
        %v3688 = vld [vmem:[%s7 + $0x37c] sm:$0xf]
        %v3689 = vld [vmem:[%s7 + $0x380] sm:$0xf]
        %v3690 = vld [vmem:[%s7 + $0x384] sm:$0xf]
        %v3691 = vld [vmem:[%s7 + $0x388] sm:$0xf]
        %v3692 = vld [vmem:[%s7 + $0x38c] sm:$0xf]
        %v3693 = vld [vmem:[%s7 + $0x390] sm:$0xf]
        %v3694 = vld [vmem:[%s7 + $0x394] sm:$0xf]
        %v3695 = vld [vmem:[%s7 + $0x398] sm:$0xf]
        %v3696 = vld [vmem:[%s7 + $0x39c] sm:$0xf]
        %v3697 = vld [vmem:[%s7 + $0x3a0] sm:$0xf]
        %v3698 = vld [vmem:[%s7 + $0x3a4] sm:$0xf]
        %v3699 = vld [vmem:[%s7 + $0x3a8] sm:$0xf]
        %v3700 = vld [vmem:[%s7 + $0x3ac] sm:$0xf]
        %v3701 = vld [vmem:[%s7 + $0x3b0] sm:$0xf]
        %v3702 = vld [vmem:[%s7 + $0x3b4] sm:$0xf]
        %v3703 = vld [vmem:[%s7 + $0x3b8] sm:$0xf]
        %v3704 = vld [vmem:[%s7 + $0x3bc] sm:$0xf]
        %v3705 = vld [vmem:[%s7 + $0x3c0] sm:$0xf]
        %v3706 = vld [vmem:[%s7 + $0x3c4] sm:$0xf]
        %v3707 = vld [vmem:[%s7 + $0x3c8] sm:$0xf]
        %v3708 = vld [vmem:[%s7 + $0x3cc] sm:$0xf]
        %v3709 = vld [vmem:[%s7 + $0x3d0] sm:$0xf]
        %v3710 = vld [vmem:[%s7 + $0x3d4] sm:$0xf]
        %v3711 = vld [vmem:[%s7 + $0x3d8] sm:$0xf]
        %v3712 = vld [vmem:[%s7 + $0x3dc] sm:$0xf]
        %v3713 = vld [vmem:[%s7 + $0x3e0] sm:$0xf]
        %v3714 = vld [vmem:[%s7 + $0x3e4] sm:$0xf]
        %v3715 = vld [vmem:[%s7 + $0x3e8] sm:$0xf]
        %v3716 = vld [vmem:[%s7 + $0x3ec] sm:$0xf]
        %v3717 = vld [vmem:[%s7 + $0x3f0] sm:$0xf]
        %v3718 = vld [vmem:[%s7 + $0x3f4] sm:$0xf]
        %v3719 = vld [vmem:[%s7 + $0x3f8] sm:$0xf]
        %v3720 = vld [vmem:[%s7 + $0x3fc] sm:$0xf]
        %v3721 = vld [vmem:[%s7 + $0x400] sm:$0xf]
        %v3722 = vld [vmem:[%s7 + $0x404] sm:$0xf]
        %v3723 = vld [vmem:[%s7 + $0x408] sm:$0xf]
        %v3724 = vld [vmem:[%s7 + $0x40c] sm:$0xf]
        %v3725 = vld [vmem:[%s7 + $0x410] sm:$0xf]
        %v3726 = vld [vmem:[%s7 + $0x414] sm:$0xf]
        %v3727 = vld [vmem:[%s7 + $0x418] sm:$0xf]
        %v3728 = vld [vmem:[%s7 + $0x41c] sm:$0xf]
        %v3729 = vld [vmem:[%s7 + $0x420] sm:$0xf]
        %v3730 = vld [vmem:[%s7 + $0x424] sm:$0xf]
        %v3731 = vld [vmem:[%s7 + $0x428] sm:$0xf]
        %v3732 = vld [vmem:[%s7 + $0x42c] sm:$0xf]
        %v3733 = vld [vmem:[%s7 + $0x430] sm:$0xf]
        %v3734 = vld [vmem:[%s7 + $0x434] sm:$0xf]
        %v3735 = vld [vmem:[%s7 + $0x438] sm:$0xf]
        %v3736 = vld [vmem:[%s7 + $0x43c] sm:$0xf]
        %v3737 = vld [vmem:[%s7 + $0x440] sm:$0xf]
        %v3738 = vld [vmem:[%s7 + $0x444] sm:$0xf]
        %v3739 = vld [vmem:[%s7 + $0x448] sm:$0xf]
        %v3740 = vld [vmem:[%s7 + $0x44c] sm:$0xf]
        %v3741 = vld [vmem:[%s7 + $0x450] sm:$0xf]
        %v3742 = vld [vmem:[%s7 + $0x454] sm:$0xf]
        %v3743 = vld [vmem:[%s7 + $0x458] sm:$0xf]
        %v3744 = vld [vmem:[%s7 + $0x45c] sm:$0xf]
        %v3745 = vld [vmem:[%s7 + $0x460] sm:$0xf]
        %v3746 = vld [vmem:[%s7 + $0x464] sm:$0xf]
        %v3747 = vld [vmem:[%s7 + $0x468] sm:$0xf]
        %v3748 = vld [vmem:[%s7 + $0x46c] sm:$0xf]
        %v3749 = vld [vmem:[%s7 + $0x470] sm:$0xf]
        %v3750 = vld [vmem:[%s7 + $0x474] sm:$0xf]
        %v3751 = vld [vmem:[%s7 + $0x478] sm:$0xf]
        %v3752 = vld [vmem:[%s7 + $0x47c] sm:$0xf]
        %v3753 = vld [vmem:[%s7 + $0x480] sm:$0xf]
        %v3754 = vld [vmem:[%s7 + $0x484] sm:$0xf]
        %v3755 = vld [vmem:[%s7 + $0x488] sm:$0xf]
        %v3756 = vld [vmem:[%s7 + $0x48c] sm:$0xf]
        %v3757 = vld [vmem:[%s7 + $0x490] sm:$0xf]
        %v3758 = vld [vmem:[%s7 + $0x494] sm:$0xf]
        %v3759 = vld [vmem:[%s7 + $0x498] sm:$0xf]
        %v3760 = vld [vmem:[%s7 + $0x49c] sm:$0xf]
        %v3761 = vld [vmem:[%s7 + $0x4a0] sm:$0xf]
        %v3762 = vld [vmem:[%s7 + $0x4a4] sm:$0xf]
        %v3763 = vld [vmem:[%s7 + $0x4a8] sm:$0xf]
        %v3764 = vld [vmem:[%s7 + $0x4ac] sm:$0xf]
        %v3765 = vld [vmem:[%s7 + $0x4b0] sm:$0xf]
        %v3766 = vld [vmem:[%s7 + $0x4b4] sm:$0xf]
        %v3767 = vld [vmem:[%s7 + $0x4b8] sm:$0xf]
        %v3768 = vld [vmem:[%s7 + $0x4bc] sm:$0xf]
        %v3769 = vld [vmem:[%s7 + $0x4c0] sm:$0xf]
        %v3770 = vld [vmem:[%s7 + $0x4c4] sm:$0xf]
        %v3771 = vld [vmem:[%s7 + $0x4c8] sm:$0xf]
        %v3772 = vld [vmem:[%s7 + $0x4cc] sm:$0xf]
        %v3773 = vld [vmem:[%s7 + $0x4d0] sm:$0xf]
        %v3774 = vld [vmem:[%s7 + $0x4d4] sm:$0xf]
        %v3775 = vld [vmem:[%s7 + $0x4d8] sm:$0xf]
        %v3776 = vld [vmem:[%s7 + $0x4dc] sm:$0xf]
        %v3777 = vld [vmem:[%s7 + $0x4e0] sm:$0xf]
        %v3778 = vld [vmem:[%s7 + $0x4e4] sm:$0xf]
        %v3779 = vld [vmem:[%s7 + $0x4e8] sm:$0xf]
        %v3780 = vld [vmem:[%s7 + $0x4ec] sm:$0xf]
        %v3781 = vld [vmem:[%s7 + $0x4f0] sm:$0xf]
        %v3782 = vld [vmem:[%s7 + $0x4f4] sm:$0xf]
        %v3783 = vld [vmem:[%s7 + $0x4f8] sm:$0xf]
        %v3784 = vld [vmem:[%s7 + $0x4fc] sm:$0xf]
        %v3785 = vld [vmem:[%s7 + $0x500] sm:$0xf]
        %v3786 = vld [vmem:[%s7 + $0x504] sm:$0xf]
        %v3787 = vld [vmem:[%s7 + $0x508] sm:$0xf]
        %v3788 = vld [vmem:[%s7 + $0x50c] sm:$0xf]
        %v3789 = vld [vmem:[%s7 + $0x510] sm:$0xf]
        %v3790 = vld [vmem:[%s7 + $0x514] sm:$0xf]
        %v3791 = vld [vmem:[%s7 + $0x518] sm:$0xf]
        %v3792 = vld [vmem:[%s7 + $0x51c] sm:$0xf]
        %v3793 = vld [vmem:[%s7 + $0x520] sm:$0xf]
        %v3794 = vld [vmem:[%s7 + $0x524] sm:$0xf]
        %v3795 = vld [vmem:[%s7 + $0x528] sm:$0xf]
        %v3796 = vld [vmem:[%s7 + $0x52c] sm:$0xf]
        %v3797 = vld [vmem:[%s7 + $0x530] sm:$0xf]
        %v3798 = vld [vmem:[%s7 + $0x534] sm:$0xf]
        %v3799 = vld [vmem:[%s7 + $0x538] sm:$0xf]
        %v3800 = vld [vmem:[%s7 + $0x53c] sm:$0xf]
        %v3801 = vld [vmem:[%s7 + $0x540] sm:$0xf]
        %v3802 = vld [vmem:[%s7 + $0x544] sm:$0xf]
        %v3803 = vld [vmem:[%s7 + $0x548] sm:$0xf]
        %v3804 = vld [vmem:[%s7 + $0x54c] sm:$0xf]
        %v3805 = vld [vmem:[%s7 + $0x550] sm:$0xf]
        %v3806 = vld [vmem:[%s7 + $0x554] sm:$0xf]
        %v3807 = vld [vmem:[%s7 + $0x558] sm:$0xf]
        %v3808 = vld [vmem:[%s7 + $0x55c] sm:$0xf]
        %v3809 = vld [vmem:[%s7 + $0x560] sm:$0xf]
        %v3810 = vld [vmem:[%s7 + $0x564] sm:$0xf]
        %v3811 = vld [vmem:[%s7 + $0x568] sm:$0xf]
        %v3812 = vld [vmem:[%s7 + $0x56c] sm:$0xf]
        %v3813 = vld [vmem:[%s7 + $0x570] sm:$0xf]
        %v3814 = vld [vmem:[%s7 + $0x574] sm:$0xf]
        %v3815 = vld [vmem:[%s7 + $0x578] sm:$0xf]
        %v3816 = vld [vmem:[%s7 + $0x57c] sm:$0xf]
        %v3817 = vld [vmem:[%s7 + $0x580] sm:$0xf]
        %v3818 = vld [vmem:[%s7 + $0x584] sm:$0xf]
        %v3819 = vld [vmem:[%s7 + $0x588] sm:$0xf]
        %v3820 = vld [vmem:[%s7 + $0x58c] sm:$0xf]
        %v3821 = vld [vmem:[%s7 + $0x590] sm:$0xf]
        %v3822 = vld [vmem:[%s7 + $0x594] sm:$0xf]
        %v3823 = vld [vmem:[%s7 + $0x598] sm:$0xf]
        %v3824 = vld [vmem:[%s7 + $0x59c] sm:$0xf]
        %v3825 = vld [vmem:[%s7 + $0x5a0] sm:$0xf]
        %v3826 = vld [vmem:[%s7 + $0x5a4] sm:$0xf]
        %v3827 = vld [vmem:[%s7 + $0x5a8] sm:$0xf]
        %v3828 = vld [vmem:[%s7 + $0x5ac] sm:$0xf]
        %v3829 = vld [vmem:[%s7 + $0x5b0] sm:$0xf]
        %v3830 = vld [vmem:[%s7 + $0x5b4] sm:$0xf]
        %v3831 = vld [vmem:[%s7 + $0x5b8] sm:$0xf]
        %v3832 = vld [vmem:[%s7 + $0x5bc] sm:$0xf]
        %v3833 = vld [vmem:[%s7 + $0x5c0] sm:$0xf]
        %v3834 = vld [vmem:[%s7 + $0x5c4] sm:$0xf]
        %v3835 = vld [vmem:[%s7 + $0x5c8] sm:$0xf]
        %v3836 = vld [vmem:[%s7 + $0x5cc] sm:$0xf]
        %v3837 = vld [vmem:[%s7 + $0x5d0] sm:$0xf]
        %v3838 = vld [vmem:[%s7 + $0x5d4] sm:$0xf]
        %v3839 = vld [vmem:[%s7 + $0x5d8] sm:$0xf]
        %v3840 = vld [vmem:[%s7 + $0x5dc] sm:$0xf]
        %v3841 = vld [vmem:[%s7 + $0x5e0] sm:$0xf]
        %v3842 = vld [vmem:[%s7 + $0x5e4] sm:$0xf]
        %v3843 = vld [vmem:[%s7 + $0x5e8] sm:$0xf]
        %v3844 = vld [vmem:[%s7 + $0x5ec] sm:$0xf]
        %v3845 = vld [vmem:[%s7 + $0x5f0] sm:$0xf]
        %v3846 = vld [vmem:[%s7 + $0x5f4] sm:$0xf]
        %v3847 = vld [vmem:[%s7 + $0x5f8] sm:$0xf]
        %v3848 = vld [vmem:[%s7 + $0x5fc] sm:$0xf]
        %v3849 = vld [vmem:[%s7 + $0x600] sm:$0xf]
        %v3850 = vld [vmem:[%s7 + $0x604] sm:$0xf]
        %v3851 = vld [vmem:[%s7 + $0x608] sm:$0xf]
        %v3852 = vld [vmem:[%s7 + $0x60c] sm:$0xf]
        %v3853 = vld [vmem:[%s7 + $0x610] sm:$0xf]
        %v3854 = vld [vmem:[%s7 + $0x614] sm:$0xf]
        %v3855 = vld [vmem:[%s7 + $0x618] sm:$0xf]
        %v3856 = vld [vmem:[%s7 + $0x61c] sm:$0xf]
        %v3857 = vld [vmem:[%s8] sm:$0x1]
        %v4250 = vunpack.c.l.b16 %v3465
        %v4251 = vunpack.c.l.b16 %v3466
        %v4252 = vunpack.c.l.b16 %v3467
        %v4253 = vunpack.c.l.b16 %v3468
        %v4254 = vunpack.c.l.b16 %v3469
        %v4255 = vunpack.c.l.b16 %v3470
        %v4256 = vunpack.c.l.b16 %v3471
        %v4257 = vunpack.c.l.b16 %v3472
        %v4258 = vunpack.c.l.b16 %v3473
        %v4259 = vunpack.c.l.b16 %v3474
        %v4260 = vunpack.c.l.b16 %v3475
        %v4261 = vunpack.c.l.b16 %v3476
        %v4262 = vunpack.c.l.b16 %v3477
        %v4263 = vunpack.c.l.b16 %v3478
        %v4264 = vunpack.c.l.b16 %v3479
        %v4265 = vunpack.c.l.b16 %v3480
        %v4266 = vunpack.c.l.b16 %v3481
        %v4267 = vunpack.c.l.b16 %v3482
        %v4268 = vunpack.c.l.b16 %v3483
        %v4269 = vunpack.c.l.b16 %v3484
        %v4270 = vunpack.c.l.b16 %v3485
        %v4271 = vunpack.c.l.b16 %v3486
        %v4272 = vunpack.c.l.b16 %v3487
        %v4273 = vunpack.c.l.b16 %v3488
        %v4274 = vunpack.c.l.b16 %v3489
        %v4275 = vunpack.c.l.b16 %v3490
        %v4276 = vunpack.c.l.b16 %v3491
        %v4277 = vunpack.c.l.b16 %v3492
        %v4278 = vunpack.c.l.b16 %v3493
        %v4279 = vunpack.c.l.b16 %v3494
        %v4280 = vunpack.c.l.b16 %v3495
        %v4281 = vunpack.c.l.b16 %v3496
        %v4282 = vunpack.c.l.b16 %v3497
        %v4283 = vunpack.c.l.b16 %v3498
        %v4284 = vunpack.c.l.b16 %v3499
        %v4285 = vunpack.c.l.b16 %v3500
        %v4286 = vunpack.c.l.b16 %v3501
        %v4287 = vunpack.c.l.b16 %v3502
        %v4288 = vunpack.c.l.b16 %v3503
        %v4289 = vunpack.c.l.b16 %v3504
        %v4290 = vunpack.c.l.b16 %v3505
        %v4291 = vunpack.c.l.b16 %v3506
        %v4292 = vunpack.c.l.b16 %v3507
        %v4293 = vunpack.c.l.b16 %v3508
        %v4294 = vunpack.c.l.b16 %v3509
        %v4295 = vunpack.c.l.b16 %v3510
        %v4296 = vunpack.c.l.b16 %v3511
        %v4297 = vunpack.c.l.b16 %v3512
        %v4298 = vunpack.c.l.b16 %v3513
        %v4299 = vunpack.c.l.b16 %v3514
        %v4300 = vunpack.c.l.b16 %v3515
        %v4301 = vunpack.c.l.b16 %v3516
        %v4302 = vunpack.c.l.b16 %v3517
        %v4303 = vunpack.c.l.b16 %v3518
        %v4304 = vunpack.c.l.b16 %v3519
        %v4305 = vunpack.c.l.b16 %v3520
        %v4306 = vunpack.c.l.b16 %v3521
        %v4307 = vunpack.c.l.b16 %v3522
        %v4308 = vunpack.c.l.b16 %v3523
        %v4309 = vunpack.c.l.b16 %v3524
        %v4310 = vunpack.c.l.b16 %v3525
        %v4311 = vunpack.c.l.b16 %v3526
        %v4312 = vunpack.c.l.b16 %v3527
        %v4313 = vunpack.c.l.b16 %v3528
        %v4314 = vunpack.c.l.b16 %v3529
        %v4315 = vunpack.c.l.b16 %v3530
        %v4316 = vunpack.c.l.b16 %v3531
        %v4317 = vunpack.c.l.b16 %v3532
        %v4318 = vunpack.c.l.b16 %v3533
        %v4319 = vunpack.c.l.b16 %v3534
        %v4320 = vunpack.c.l.b16 %v3535
        %v4321 = vunpack.c.l.b16 %v3536
        %v4322 = vunpack.c.l.b16 %v3537
        %v4323 = vunpack.c.l.b16 %v3538
        %v4324 = vunpack.c.l.b16 %v3539
        %v4325 = vunpack.c.l.b16 %v3540
        %v4326 = vunpack.c.l.b16 %v3541
        %v4327 = vunpack.c.l.b16 %v3542
        %v4328 = vunpack.c.l.b16 %v3543
        %v4329 = vunpack.c.l.b16 %v3544
        %v4330 = vunpack.c.l.b16 %v3545
        %v4331 = vunpack.c.l.b16 %v3546
        %v4332 = vunpack.c.l.b16 %v3547
        %v4333 = vunpack.c.l.b16 %v3548
        %v4334 = vunpack.c.l.b16 %v3549
        %v4335 = vunpack.c.l.b16 %v3550
        %v4336 = vunpack.c.l.b16 %v3551
        %v4337 = vunpack.c.l.b16 %v3552
        %v4338 = vunpack.c.l.b16 %v3553
        %v4339 = vunpack.c.l.b16 %v3554
        %v4340 = vunpack.c.l.b16 %v3555
        %v4341 = vunpack.c.l.b16 %v3556
        %v4342 = vunpack.c.l.b16 %v3557
        %v4343 = vunpack.c.l.b16 %v3558
        %v4344 = vunpack.c.l.b16 %v3559
        %v4345 = vunpack.c.l.b16 %v3560
        %v4346 = vunpack.c.l.b16 %v3561
        %v4347 = vunpack.c.l.b16 %v3562
        %v4348 = vunpack.c.l.b16 %v3563
        %v4349 = vunpack.c.l.b16 %v3564
        %v4350 = vunpack.c.l.b16 %v3565
        %v4351 = vunpack.c.l.b16 %v3566
        %v4352 = vunpack.c.l.b16 %v3567
        %v4353 = vunpack.c.l.b16 %v3568
        %v4354 = vunpack.c.l.b16 %v3569
        %v4355 = vunpack.c.l.b16 %v3570
        %v4356 = vunpack.c.l.b16 %v3571
        %v4357 = vunpack.c.l.b16 %v3572
        %v4358 = vunpack.c.l.b16 %v3573
        %v4359 = vunpack.c.l.b16 %v3574
        %v4360 = vunpack.c.l.b16 %v3575
        %v4361 = vunpack.c.l.b16 %v3576
        %v4362 = vunpack.c.l.b16 %v3577
        %v4363 = vunpack.c.l.b16 %v3578
        %v4364 = vunpack.c.l.b16 %v3579
        %v4365 = vunpack.c.l.b16 %v3580
        %v4366 = vunpack.c.l.b16 %v3581
        %v4367 = vunpack.c.l.b16 %v3582
        %v4368 = vunpack.c.l.b16 %v3583
        %v4369 = vunpack.c.l.b16 %v3584
        %v4370 = vunpack.c.l.b16 %v3585
        %v4371 = vunpack.c.l.b16 %v3586
        %v4372 = vunpack.c.l.b16 %v3587
        %v4373 = vunpack.c.l.b16 %v3588
        %v4374 = vunpack.c.l.b16 %v3589
        %v4375 = vunpack.c.l.b16 %v3590
        %v4376 = vunpack.c.l.b16 %v3591
        %v4377 = vunpack.c.l.b16 %v3592
        %v4378 = vunpack.c.l.b16 %v3593
        %v4379 = vunpack.c.l.b16 %v3594
        %v4380 = vunpack.c.l.b16 %v3595
        %v4381 = vunpack.c.l.b16 %v3596
        %v4382 = vunpack.c.l.b16 %v3597
        %v4383 = vunpack.c.l.b16 %v3598
        %v4384 = vunpack.c.l.b16 %v3599
        %v4385 = vunpack.c.l.b16 %v3600
        %v4386 = vunpack.c.l.b16 %v3601
        %v4387 = vunpack.c.l.b16 %v3602
        %v4388 = vunpack.c.l.b16 %v3603
        %v4389 = vunpack.c.l.b16 %v3604
        %v4390 = vunpack.c.l.b16 %v3605
        %v4391 = vunpack.c.l.b16 %v3606
        %v4392 = vunpack.c.l.b16 %v3607
        %v4393 = vunpack.c.l.b16 %v3608
        %v4394 = vunpack.c.l.b16 %v3609
        %v4395 = vunpack.c.l.b16 %v3610
        %v4396 = vunpack.c.l.b16 %v3611
        %v4397 = vunpack.c.l.b16 %v3612
        %v4398 = vunpack.c.l.b16 %v3613
        %v4399 = vunpack.c.l.b16 %v3614
        %v4400 = vunpack.c.l.b16 %v3615
        %v4401 = vunpack.c.l.b16 %v3616
        %v4402 = vunpack.c.l.b16 %v3617
        %v4403 = vunpack.c.l.b16 %v3618
        %v4404 = vunpack.c.l.b16 %v3619
        %v4405 = vunpack.c.l.b16 %v3620
        %v4406 = vunpack.c.l.b16 %v3621
        %v4407 = vunpack.c.l.b16 %v3622
        %v4408 = vunpack.c.l.b16 %v3623
        %v4409 = vunpack.c.l.b16 %v3624
        %v4410 = vunpack.c.l.b16 %v3625
        %v4411 = vunpack.c.l.b16 %v3626
        %v4412 = vunpack.c.l.b16 %v3627
        %v4413 = vunpack.c.l.b16 %v3628
        %v4414 = vunpack.c.l.b16 %v3629
        %v4415 = vunpack.c.l.b16 %v3630
        %v4416 = vunpack.c.l.b16 %v3631
        %v4417 = vunpack.c.l.b16 %v3632
        %v4418 = vunpack.c.l.b16 %v3633
        %v4419 = vunpack.c.l.b16 %v3634
        %v4420 = vunpack.c.l.b16 %v3635
        %v4421 = vunpack.c.l.b16 %v3636
        %v4422 = vunpack.c.l.b16 %v3637
        %v4423 = vunpack.c.l.b16 %v3638
        %v4424 = vunpack.c.l.b16 %v3639
        %v4425 = vunpack.c.l.b16 %v3640
        %v4426 = vunpack.c.l.b16 %v3641
        %v4427 = vunpack.c.l.b16 %v3642
        %v4428 = vunpack.c.l.b16 %v3643
        %v4429 = vunpack.c.l.b16 %v3644
        %v4430 = vunpack.c.l.b16 %v3645
        %v4431 = vunpack.c.l.b16 %v3646
        %v4432 = vunpack.c.l.b16 %v3647
        %v4433 = vunpack.c.l.b16 %v3648
        %v4434 = vunpack.c.l.b16 %v3649
        %v4435 = vunpack.c.l.b16 %v3650
        %v4436 = vunpack.c.l.b16 %v3651
        %v4437 = vunpack.c.l.b16 %v3652
        %v4438 = vunpack.c.l.b16 %v3653
        %v4439 = vunpack.c.l.b16 %v3654
        %v4440 = vunpack.c.l.b16 %v3655
        %v4441 = vunpack.c.l.b16 %v3656
        %v4442 = vunpack.c.l.b16 %v3657
        %v4443 = vunpack.c.l.b16 %v3658
        %v4444 = vunpack.c.l.b16 %v3659
        %v4445 = vunpack.c.l.b16 %v3660
        %v4446 = vunpack.c.l.b16 %v3661
        %v4447 = vunpack.c.l.b16 %v3662
        %v4448 = vunpack.c.l.b16 %v3663
        %v4449 = vunpack.c.l.b16 %v3664
        %v4450 = vunpack.c.l.b16 %v3665
        %v4451 = vunpack.c.l.b16 %v3666
        %v4452 = vunpack.c.l.b16 %v3667
        %v4453 = vunpack.c.l.b16 %v3668
        %v4454 = vunpack.c.l.b16 %v3669
        %v4455 = vunpack.c.l.b16 %v3670
        %v4456 = vunpack.c.l.b16 %v3671
        %v4457 = vunpack.c.l.b16 %v3672
        %v4458 = vunpack.c.l.b16 %v3673
        %v4459 = vunpack.c.l.b16 %v3674
        %v4460 = vunpack.c.l.b16 %v3675
        %v4461 = vunpack.c.l.b16 %v3676
        %v4462 = vunpack.c.l.b16 %v3677
        %v4463 = vunpack.c.l.b16 %v3678
        %v4464 = vunpack.c.l.b16 %v3679
        %v4465 = vunpack.c.l.b16 %v3680
        %v4466 = vunpack.c.l.b16 %v3681
        %v4467 = vunpack.c.l.b16 %v3682
        %v4468 = vunpack.c.l.b16 %v3683
        %v4469 = vunpack.c.l.b16 %v3684
        %v4470 = vunpack.c.l.b16 %v3685
        %v4471 = vunpack.c.l.b16 %v3686
        %v4472 = vunpack.c.l.b16 %v3687
        %v4473 = vunpack.c.l.b16 %v3688
        %v4474 = vunpack.c.l.b16 %v3689
        %v4475 = vunpack.c.l.b16 %v3690
        %v4476 = vunpack.c.l.b16 %v3691
        %v4477 = vunpack.c.l.b16 %v3692
        %v4478 = vunpack.c.l.b16 %v3693
        %v4479 = vunpack.c.l.b16 %v3694
        %v4480 = vunpack.c.l.b16 %v3695
        %v4481 = vunpack.c.l.b16 %v3696
        %v4482 = vunpack.c.l.b16 %v3697
        %v4483 = vunpack.c.l.b16 %v3698
        %v4484 = vunpack.c.l.b16 %v3699
        %v4485 = vunpack.c.l.b16 %v3700
        %v4486 = vunpack.c.l.b16 %v3701
        %v4487 = vunpack.c.l.b16 %v3702
        %v4488 = vunpack.c.l.b16 %v3703
        %v4489 = vunpack.c.l.b16 %v3704
        %v4490 = vunpack.c.l.b16 %v3705
        %v4491 = vunpack.c.l.b16 %v3706
        %v4492 = vunpack.c.l.b16 %v3707
        %v4493 = vunpack.c.l.b16 %v3708
        %v4494 = vunpack.c.l.b16 %v3709
        %v4495 = vunpack.c.l.b16 %v3710
        %v4496 = vunpack.c.l.b16 %v3711
        %v4497 = vunpack.c.l.b16 %v3712
        %v4498 = vunpack.c.l.b16 %v3713
        %v4499 = vunpack.c.l.b16 %v3714
        %v4500 = vunpack.c.l.b16 %v3715
        %v4501 = vunpack.c.l.b16 %v3716
        %v4502 = vunpack.c.l.b16 %v3717
        %v4503 = vunpack.c.l.b16 %v3718
        %v4504 = vunpack.c.l.b16 %v3719
        %v4505 = vunpack.c.l.b16 %v3720
        %v4506 = vunpack.c.l.b16 %v3721
        %v4507 = vunpack.c.l.b16 %v3722
        %v4508 = vunpack.c.l.b16 %v3723
        %v4509 = vunpack.c.l.b16 %v3724
        %v4510 = vunpack.c.l.b16 %v3725
        %v4511 = vunpack.c.l.b16 %v3726
        %v4512 = vunpack.c.l.b16 %v3727
        %v4513 = vunpack.c.l.b16 %v3728
        %v4514 = vunpack.c.l.b16 %v3729
        %v4515 = vunpack.c.l.b16 %v3730
        %v4516 = vunpack.c.l.b16 %v3731
        %v4517 = vunpack.c.l.b16 %v3732
        %v4518 = vunpack.c.l.b16 %v3733
        %v4519 = vunpack.c.l.b16 %v3734
        %v4520 = vunpack.c.l.b16 %v3735
        %v4521 = vunpack.c.l.b16 %v3736
        %v4522 = vunpack.c.l.b16 %v3737
        %v4523 = vunpack.c.l.b16 %v3738
        %v4524 = vunpack.c.l.b16 %v3739
        %v4525 = vunpack.c.l.b16 %v3740
        %v4526 = vunpack.c.l.b16 %v3741
        %v4527 = vunpack.c.l.b16 %v3742
        %v4528 = vunpack.c.l.b16 %v3743
        %v4529 = vunpack.c.l.b16 %v3744
        %v4530 = vunpack.c.l.b16 %v3745
        %v4531 = vunpack.c.l.b16 %v3746
        %v4532 = vunpack.c.l.b16 %v3747
        %v4533 = vunpack.c.l.b16 %v3748
        %v4534 = vunpack.c.l.b16 %v3749
        %v4535 = vunpack.c.l.b16 %v3750
        %v4536 = vunpack.c.l.b16 %v3751
        %v4537 = vunpack.c.l.b16 %v3752
        %v4538 = vunpack.c.l.b16 %v3753
        %v4539 = vunpack.c.l.b16 %v3754
        %v4540 = vunpack.c.l.b16 %v3755
        %v4541 = vunpack.c.l.b16 %v3756
        %v4542 = vunpack.c.l.b16 %v3757
        %v4543 = vunpack.c.l.b16 %v3758
        %v4544 = vunpack.c.l.b16 %v3759
        %v4545 = vunpack.c.l.b16 %v3760
        %v4546 = vunpack.c.l.b16 %v3761
        %v4547 = vunpack.c.l.b16 %v3762
        %v4548 = vunpack.c.l.b16 %v3763
        %v4549 = vunpack.c.l.b16 %v3764
        %v4550 = vunpack.c.l.b16 %v3765
        %v4551 = vunpack.c.l.b16 %v3766
        %v4552 = vunpack.c.l.b16 %v3767
        %v4553 = vunpack.c.l.b16 %v3768
        %v4554 = vunpack.c.l.b16 %v3769
        %v4555 = vunpack.c.l.b16 %v3770
        %v4556 = vunpack.c.l.b16 %v3771
        %v4557 = vunpack.c.l.b16 %v3772
        %v4558 = vunpack.c.l.b16 %v3773
        %v4559 = vunpack.c.l.b16 %v3774
        %v4560 = vunpack.c.l.b16 %v3775
        %v4561 = vunpack.c.l.b16 %v3776
        %v4562 = vunpack.c.l.b16 %v3777
        %v4563 = vunpack.c.l.b16 %v3778
        %v4564 = vunpack.c.l.b16 %v3779
        %v4565 = vunpack.c.l.b16 %v3780
        %v4566 = vunpack.c.l.b16 %v3781
        %v4567 = vunpack.c.l.b16 %v3782
        %v4568 = vunpack.c.l.b16 %v3783
        %v4569 = vunpack.c.l.b16 %v3784
        %v4570 = vunpack.c.l.b16 %v3785
        %v4571 = vunpack.c.l.b16 %v3786
        %v4572 = vunpack.c.l.b16 %v3787
        %v4573 = vunpack.c.l.b16 %v3788
        %v4574 = vunpack.c.l.b16 %v3789
        %v4575 = vunpack.c.l.b16 %v3790
        %v4576 = vunpack.c.l.b16 %v3791
        %v4577 = vunpack.c.l.b16 %v3792
        %v4578 = vunpack.c.l.b16 %v3793
        %v4579 = vunpack.c.l.b16 %v3794
        %v4580 = vunpack.c.l.b16 %v3795
        %v4581 = vunpack.c.l.b16 %v3796
        %v4582 = vunpack.c.l.b16 %v3797
        %v4583 = vunpack.c.l.b16 %v3798
        %v4584 = vunpack.c.l.b16 %v3799
        %v4585 = vunpack.c.l.b16 %v3800
        %v4586 = vunpack.c.l.b16 %v3801
        %v4587 = vunpack.c.l.b16 %v3802
        %v4588 = vunpack.c.l.b16 %v3803
        %v4589 = vunpack.c.l.b16 %v3804
        %v4590 = vunpack.c.l.b16 %v3805
        %v4591 = vunpack.c.l.b16 %v3806
        %v4592 = vunpack.c.l.b16 %v3807
        %v4593 = vunpack.c.l.b16 %v3808
        %v4594 = vunpack.c.l.b16 %v3809
        %v4595 = vunpack.c.l.b16 %v3810
        %v4596 = vunpack.c.l.b16 %v3811
        %v4597 = vunpack.c.l.b16 %v3812
        %v4598 = vunpack.c.l.b16 %v3813
        %v4599 = vunpack.c.l.b16 %v3814
        %v4600 = vunpack.c.l.b16 %v3815
        %v4601 = vunpack.c.l.b16 %v3816
        %v4602 = vunpack.c.l.b16 %v3817
        %v4603 = vunpack.c.l.b16 %v3818
        %v4604 = vunpack.c.l.b16 %v3819
        %v4605 = vunpack.c.l.b16 %v3820
        %v4606 = vunpack.c.l.b16 %v3821
        %v4607 = vunpack.c.l.b16 %v3822
        %v4608 = vunpack.c.l.b16 %v3823
        %v4609 = vunpack.c.l.b16 %v3824
        %v4610 = vunpack.c.l.b16 %v3825
        %v4611 = vunpack.c.l.b16 %v3826
        %v4612 = vunpack.c.l.b16 %v3827
        %v4613 = vunpack.c.l.b16 %v3828
        %v4614 = vunpack.c.l.b16 %v3829
        %v4615 = vunpack.c.l.b16 %v3830
        %v4616 = vunpack.c.l.b16 %v3831
        %v4617 = vunpack.c.l.b16 %v3832
        %v4618 = vunpack.c.l.b16 %v3833
        %v4619 = vunpack.c.l.b16 %v3834
        %v4620 = vunpack.c.l.b16 %v3835
        %v4621 = vunpack.c.l.b16 %v3836
        %v4622 = vunpack.c.l.b16 %v3837
        %v4623 = vunpack.c.l.b16 %v3838
        %v4624 = vunpack.c.l.b16 %v3839
        %v4625 = vunpack.c.l.b16 %v3840
        %v4626 = vunpack.c.l.b16 %v3841
        %v4627 = vunpack.c.l.b16 %v3842
        %v4628 = vunpack.c.l.b16 %v3843
        %v4629 = vunpack.c.l.b16 %v3844
        %v4630 = vunpack.c.l.b16 %v3845
        %v4631 = vunpack.c.l.b16 %v3846
        %v4632 = vunpack.c.l.b16 %v3847
        %v4633 = vunpack.c.l.b16 %v3848
        %v4634 = vunpack.c.l.b16 %v3849
        %v4635 = vunpack.c.l.b16 %v3850
        %v4636 = vunpack.c.l.b16 %v3851
        %v4637 = vunpack.c.l.b16 %v3852
        %v4638 = vunpack.c.l.b16 %v3853
        %v4639 = vunpack.c.l.b16 %v3854
        %v4640 = vunpack.c.l.b16 %v3855
        %v4641 = vunpack.c.l.b16 %v3856
        %v4642 = vpack.c.b16 %v4251, %v4250
        %v4643 = vpack.c.b16 %v4253, %v4252
        %v4644 = vpack.c.b16 %v4255, %v4254
        %v4645 = vpack.c.b16 %v4257, %v4256
        %v4646 = vpack.c.b16 %v4259, %v4258
        %v4647 = vpack.c.b16 %v4261, %v4260
        %v4648 = vpack.c.b16 %v4263, %v4262
        %v4649 = vpack.c.b16 %v4265, %v4264
        %v4650 = vpack.c.b16 %v4267, %v4266
        %v4651 = vpack.c.b16 %v4269, %v4268
        %v4652 = vpack.c.b16 %v4271, %v4270
        %v4653 = vpack.c.b16 %v4273, %v4272
        %v4654 = vpack.c.b16 %v4275, %v4274
        %v4655 = vpack.c.b16 %v4277, %v4276
        %v4656 = vpack.c.b16 %v4279, %v4278
        %v4657 = vpack.c.b16 %v4281, %v4280
        %v4658 = vpack.c.b16 %v4283, %v4282
        %v4659 = vpack.c.b16 %v4285, %v4284
        %v4660 = vpack.c.b16 %v4287, %v4286
        %v4661 = vpack.c.b16 %v4289, %v4288
        %v4662 = vpack.c.b16 %v4291, %v4290
        %v4663 = vpack.c.b16 %v4293, %v4292
        %v4664 = vpack.c.b16 %v4295, %v4294
        %v4665 = vpack.c.b16 %v4297, %v4296
        %v4666 = vpack.c.b16 %v4299, %v4298
        %v4667 = vpack.c.b16 %v4301, %v4300
        %v4668 = vpack.c.b16 %v4303, %v4302
        %v4669 = vpack.c.b16 %v4305, %v4304
        %v4670 = vpack.c.b16 %v4307, %v4306
        %v4671 = vpack.c.b16 %v4309, %v4308
        %v4672 = vpack.c.b16 %v4311, %v4310
        %v4673 = vpack.c.b16 %v4313, %v4312
        %v4674 = vpack.c.b16 %v4315, %v4314
        %v4675 = vpack.c.b16 %v4317, %v4316
        %v4676 = vpack.c.b16 %v4319, %v4318
        %v4677 = vpack.c.b16 %v4321, %v4320
        %v4678 = vpack.c.b16 %v4323, %v4322
        %v4679 = vpack.c.b16 %v4325, %v4324
        %v4680 = vpack.c.b16 %v4327, %v4326
        %v4681 = vpack.c.b16 %v4329, %v4328
        %v4682 = vpack.c.b16 %v4331, %v4330
        %v4683 = vpack.c.b16 %v4333, %v4332
        %v4684 = vpack.c.b16 %v4335, %v4334
        %v4685 = vpack.c.b16 %v4337, %v4336
        %v4686 = vpack.c.b16 %v4339, %v4338
        %v4687 = vpack.c.b16 %v4341, %v4340
        %v4688 = vpack.c.b16 %v4343, %v4342
        %v4689 = vpack.c.b16 %v4345, %v4344
        %v4690 = vpack.c.b16 %v4347, %v4346
        %v4691 = vpack.c.b16 %v4349, %v4348
        %v4692 = vpack.c.b16 %v4351, %v4350
        %v4693 = vpack.c.b16 %v4353, %v4352
        %v4694 = vpack.c.b16 %v4355, %v4354
        %v4695 = vpack.c.b16 %v4357, %v4356
        %v4696 = vpack.c.b16 %v4359, %v4358
        %v4697 = vpack.c.b16 %v4361, %v4360
        %v4698 = vpack.c.b16 %v4363, %v4362
        %v4699 = vpack.c.b16 %v4365, %v4364
        %v4700 = vpack.c.b16 %v4367, %v4366
        %v4701 = vpack.c.b16 %v4369, %v4368
        %v4702 = vpack.c.b16 %v4371, %v4370
        %v4703 = vpack.c.b16 %v4373, %v4372
        %v4704 = vpack.c.b16 %v4375, %v4374
        %v4705 = vpack.c.b16 %v4377, %v4376
        %v4706 = vpack.c.b16 %v4379, %v4378
        %v4707 = vpack.c.b16 %v4381, %v4380
        %v4708 = vpack.c.b16 %v4383, %v4382
        %v4709 = vpack.c.b16 %v4385, %v4384
        %v4710 = vpack.c.b16 %v4387, %v4386
        %v4711 = vpack.c.b16 %v4389, %v4388
        %v4712 = vpack.c.b16 %v4391, %v4390
        %v4713 = vpack.c.b16 %v4393, %v4392
        %v4714 = vpack.c.b16 %v4395, %v4394
        %v4715 = vpack.c.b16 %v4397, %v4396
        %v4716 = vpack.c.b16 %v4399, %v4398
        %v4717 = vpack.c.b16 %v4401, %v4400
        %v4718 = vpack.c.b16 %v4403, %v4402
        %v4719 = vpack.c.b16 %v4405, %v4404
        %v4720 = vpack.c.b16 %v4407, %v4406
        %v4721 = vpack.c.b16 %v4409, %v4408
        %v4722 = vpack.c.b16 %v4411, %v4410
        %v4723 = vpack.c.b16 %v4413, %v4412
        %v4724 = vpack.c.b16 %v4415, %v4414
        %v4725 = vpack.c.b16 %v4417, %v4416
        %v4726 = vpack.c.b16 %v4419, %v4418
        %v4727 = vpack.c.b16 %v4421, %v4420
        %v4728 = vpack.c.b16 %v4423, %v4422
        %v4729 = vpack.c.b16 %v4425, %v4424
        %v4730 = vpack.c.b16 %v4427, %v4426
        %v4731 = vpack.c.b16 %v4429, %v4428
        %v4732 = vpack.c.b16 %v4431, %v4430
        %v4733 = vpack.c.b16 %v4433, %v4432
        %v4734 = vpack.c.b16 %v4435, %v4434
        %v4735 = vpack.c.b16 %v4437, %v4436
        %v4736 = vpack.c.b16 %v4439, %v4438
        %v4737 = vpack.c.b16 %v4441, %v4440
        %v4738 = vpack.c.b16 %v4443, %v4442
        %v4739 = vpack.c.b16 %v4445, %v4444
        %v4740 = vpack.c.b16 %v4447, %v4446
        %v4741 = vpack.c.b16 %v4449, %v4448
        %v4742 = vpack.c.b16 %v4451, %v4450
        %v4743 = vpack.c.b16 %v4453, %v4452
        %v4744 = vpack.c.b16 %v4455, %v4454
        %v4745 = vpack.c.b16 %v4457, %v4456
        %v4746 = vpack.c.b16 %v4459, %v4458
        %v4747 = vpack.c.b16 %v4461, %v4460
        %v4748 = vpack.c.b16 %v4463, %v4462
        %v4749 = vpack.c.b16 %v4465, %v4464
        %v4750 = vpack.c.b16 %v4467, %v4466
        %v4751 = vpack.c.b16 %v4469, %v4468
        %v4752 = vpack.c.b16 %v4471, %v4470
        %v4753 = vpack.c.b16 %v4473, %v4472
        %v4754 = vpack.c.b16 %v4475, %v4474
        %v4755 = vpack.c.b16 %v4477, %v4476
        %v4756 = vpack.c.b16 %v4479, %v4478
        %v4757 = vpack.c.b16 %v4481, %v4480
        %v4758 = vpack.c.b16 %v4483, %v4482
        %v4759 = vpack.c.b16 %v4485, %v4484
        %v4760 = vpack.c.b16 %v4487, %v4486
        %v4761 = vpack.c.b16 %v4489, %v4488
        %v4762 = vpack.c.b16 %v4491, %v4490
        %v4763 = vpack.c.b16 %v4493, %v4492
        %v4764 = vpack.c.b16 %v4495, %v4494
        %v4765 = vpack.c.b16 %v4497, %v4496
        %v4766 = vpack.c.b16 %v4499, %v4498
        %v4767 = vpack.c.b16 %v4501, %v4500
        %v4768 = vpack.c.b16 %v4503, %v4502
        %v4769 = vpack.c.b16 %v4505, %v4504
        %v4770 = vpack.c.b16 %v4507, %v4506
        %v4771 = vpack.c.b16 %v4509, %v4508
        %v4772 = vpack.c.b16 %v4511, %v4510
        %v4773 = vpack.c.b16 %v4513, %v4512
        %v4774 = vpack.c.b16 %v4515, %v4514
        %v4775 = vpack.c.b16 %v4517, %v4516
        %v4776 = vpack.c.b16 %v4519, %v4518
        %v4777 = vpack.c.b16 %v4521, %v4520
        %v4778 = vpack.c.b16 %v4523, %v4522
        %v4779 = vpack.c.b16 %v4525, %v4524
        %v4780 = vpack.c.b16 %v4527, %v4526
        %v4781 = vpack.c.b16 %v4529, %v4528
        %v4782 = vpack.c.b16 %v4531, %v4530
        %v4783 = vpack.c.b16 %v4533, %v4532
        %v4784 = vpack.c.b16 %v4535, %v4534
        %v4785 = vpack.c.b16 %v4537, %v4536
        %v4786 = vpack.c.b16 %v4539, %v4538
        %v4787 = vpack.c.b16 %v4541, %v4540
        %v4788 = vpack.c.b16 %v4543, %v4542
        %v4789 = vpack.c.b16 %v4545, %v4544
        %v4790 = vpack.c.b16 %v4547, %v4546
        %v4791 = vpack.c.b16 %v4549, %v4548
        %v4792 = vpack.c.b16 %v4551, %v4550
        %v4793 = vpack.c.b16 %v4553, %v4552
        %v4794 = vpack.c.b16 %v4555, %v4554
        %v4795 = vpack.c.b16 %v4557, %v4556
        %v4796 = vpack.c.b16 %v4559, %v4558
        %v4797 = vpack.c.b16 %v4561, %v4560
        %v4798 = vpack.c.b16 %v4563, %v4562
        %v4799 = vpack.c.b16 %v4565, %v4564
        %v4800 = vpack.c.b16 %v4567, %v4566
        %v4801 = vpack.c.b16 %v4569, %v4568
        %v4802 = vpack.c.b16 %v4571, %v4570
        %v4803 = vpack.c.b16 %v4573, %v4572
        %v4804 = vpack.c.b16 %v4575, %v4574
        %v4805 = vpack.c.b16 %v4577, %v4576
        %v4806 = vpack.c.b16 %v4579, %v4578
        %v4807 = vpack.c.b16 %v4581, %v4580
        %v4808 = vpack.c.b16 %v4583, %v4582
        %v4809 = vpack.c.b16 %v4585, %v4584
        %v4810 = vpack.c.b16 %v4587, %v4586
        %v4811 = vpack.c.b16 %v4589, %v4588
        %v4812 = vpack.c.b16 %v4591, %v4590
        %v4813 = vpack.c.b16 %v4593, %v4592
        %v4814 = vpack.c.b16 %v4595, %v4594
        %v4815 = vpack.c.b16 %v4597, %v4596
        %v4816 = vpack.c.b16 %v4599, %v4598
        %v4817 = vpack.c.b16 %v4601, %v4600
        %v4818 = vpack.c.b16 %v4603, %v4602
        %v4819 = vpack.c.b16 %v4605, %v4604
        %v4820 = vpack.c.b16 %v4607, %v4606
        %v4821 = vpack.c.b16 %v4609, %v4608
        %v4822 = vpack.c.b16 %v4611, %v4610
        %v4823 = vpack.c.b16 %v4613, %v4612
        %v4824 = vpack.c.b16 %v4615, %v4614
        %v4825 = vpack.c.b16 %v4617, %v4616
        %v4826 = vpack.c.b16 %v4619, %v4618
        %v4827 = vpack.c.b16 %v4621, %v4620
        %v4828 = vpack.c.b16 %v4623, %v4622
        %v4829 = vpack.c.b16 %v4625, %v4624
        %v4830 = vpack.c.b16 %v4627, %v4626
        %v4831 = vpack.c.b16 %v4629, %v4628
        %v4832 = vpack.c.b16 %v4631, %v4630
        %v4833 = vpack.c.b16 %v4633, %v4632
        %v4834 = vpack.c.b16 %v4635, %v4634
        %v4835 = vpack.c.b16 %v4637, %v4636
        %v4836 = vpack.c.b16 %v4639, %v4638
        %v4837 = vpack.c.b16 %v4641, %v4640
        %v5035 = vsel %vm1791, %v3464, 0
        %5037 = vmatprep.subr.bf16.mxu0 0
        %5038 = vmatpush1.bf16.msra.mxu0 %v4642
        %5039 = vmatprep.subr.bf16.mxu0 0
        %5040 = vmatpush1.bf16.msra.mxu0 %v4643
        %5041 = vmatprep.subr.bf16.mxu0 0
        %5042 = vmatpush1.bf16.msra.mxu0 %v4644
        %5043 = vmatprep.subr.bf16.mxu0 0
        %5044 = vmatpush1.bf16.msra.mxu0 %v4645
        %5045 = vmatprep.subr.bf16.mxu0 0
        %5046 = vmatpush1.bf16.msra.mxu0 %v4646
        %5047 = vmatprep.subr.bf16.mxu0 0
        %5048 = vmatpush1.bf16.msra.mxu0 %v4647
        %5049 = vmatprep.subr.bf16.mxu0 0
        %5050 = vmatpush1.bf16.msra.mxu0 %v4648
        %5051 = vmatprep.subr.bf16.mxu0 0
        %5052 = vmatpush1.bf16.msra.mxu0 %v4649
        %5053 = vmatprep.subr.bf16.mxu0 0
        %5054 = vmatpush1.bf16.msra.mxu0 %v4650
        %5055 = vmatprep.subr.bf16.mxu0 0
        %5056 = vmatpush1.bf16.msra.mxu0 %v4651
        %5057 = vmatprep.subr.bf16.mxu0 0
        %5058 = vmatpush1.bf16.msra.mxu0 %v4652
        %5059 = vmatprep.subr.bf16.mxu0 0
        %5060 = vmatpush1.bf16.msra.mxu0 %v4653
        %5061 = vmatprep.subr.bf16.mxu0 0
        %5062 = vmatpush1.bf16.msra.mxu0 %v4654
        %5063 = vmatprep.subr.bf16.mxu0 0
        %5064 = vmatpush1.bf16.msra.mxu0 %v4655
        %5065 = vmatprep.subr.bf16.mxu0 0
        %5066 = vmatpush1.bf16.msra.mxu0 %v4656
        %5067 = vmatprep.subr.bf16.mxu0 0
        %5068 = vmatpush1.bf16.msra.mxu0 %v4657
        %5069 = vmatprep.mubr.bf16.mxu0 %v3279
        %5070 = vmatmul.mubr.bf16.gmra.mrb[0].mxu0 %v3275
        %v5071 = vpop.f32.mrb[0].mxu0
        %v5072 = vadd.f32 %v3857, %v5071
        %v5073 = vpop.f32.mrb[0].mxu0
        %v5074 = vpop.f32.mrb[0].mxu0
        %v5075 = vpop.f32.mrb[0].mxu0
        %5076 = vdwg.mxu0
        %5077 = vmatprep.subr.bf16.mxu0 0
        %5078 = vmatpush1.bf16.msra.mxu0 %v4658
        %5079 = vmatprep.subr.bf16.mxu0 0
        %5080 = vmatpush1.bf16.msra.mxu0 %v4659
        %5081 = vmatprep.subr.bf16.mxu0 0
        %5082 = vmatpush1.bf16.msra.mxu0 %v4660
        %5083 = vmatprep.subr.bf16.mxu0 0
        %5084 = vmatpush1.bf16.msra.mxu0 %v4661
        %5085 = vmatprep.subr.bf16.mxu0 0
        %5086 = vmatpush1.bf16.msra.mxu0 %v4662
        %5087 = vmatprep.subr.bf16.mxu0 0
        %5088 = vmatpush1.bf16.msra.mxu0 %v4663
        %5089 = vmatprep.subr.bf16.mxu0 0
        %5090 = vmatpush1.bf16.msra.mxu0 %v4664
        %5091 = vmatprep.subr.bf16.mxu0 0
        %5092 = vmatpush1.bf16.msra.mxu0 %v4665
        %5093 = vmatprep.subr.bf16.mxu0 0
        %5094 = vmatpush1.bf16.msra.mxu0 %v4666
        %5095 = vmatprep.subr.bf16.mxu0 0
        %5096 = vmatpush1.bf16.msra.mxu0 %v4667
        %5097 = vmatprep.subr.bf16.mxu0 0
        %5098 = vmatpush1.bf16.msra.mxu0 %v4668
        %5099 = vmatprep.subr.bf16.mxu0 0
        %5100 = vmatpush1.bf16.msra.mxu0 %v4669
        %5101 = vmatprep.subr.bf16.mxu0 0
        %5102 = vmatpush1.bf16.msra.mxu0 %v4670
        %5103 = vmatprep.subr.bf16.mxu0 0
        %5104 = vmatpush1.bf16.msra.mxu0 %v4671
        %5105 = vmatprep.subr.bf16.mxu0 0
        %5106 = vmatpush1.bf16.msra.mxu0 %v4672
        %5107 = vmatprep.subr.bf16.mxu0 0
        %5108 = vmatpush1.bf16.msra.mxu0 %v4673
        %5109 = vmatprep.mubr.bf16.mxu0 %v3287
        %5110 = vmatmul.mubr.bf16.gmra.mrb[0].mxu0 %v3283
        %v5111 = vpop.f32.mrb[0].mxu0
        %v5112 = vadd.f32 %v5072, %v5111
        %v5113 = vpop.f32.mrb[0].mxu0
        %v5114 = vpop.f32.mrb[0].mxu0
        %v5115 = vpop.f32.mrb[0].mxu0
        %5116 = vdwg.mxu0
        %5117 = vmatprep.subr.bf16.mxu0 0
        %5118 = vmatpush1.bf16.msra.mxu0 %v4674
        %5119 = vmatprep.subr.bf16.mxu0 0
        %5120 = vmatpush1.bf16.msra.mxu0 %v4675
        %5121 = vmatprep.subr.bf16.mxu0 0
        %5122 = vmatpush1.bf16.msra.mxu0 %v4676
        %5123 = vmatprep.subr.bf16.mxu0 0
        %5124 = vmatpush1.bf16.msra.mxu0 %v4677
        %5125 = vmatprep.subr.bf16.mxu0 0
        %5126 = vmatpush1.bf16.msra.mxu0 %v4678
        %5127 = vmatprep.subr.bf16.mxu0 0
        %5128 = vmatpush1.bf16.msra.mxu0 %v4679
        %5129 = vmatprep.subr.bf16.mxu0 0
        %5130 = vmatpush1.bf16.msra.mxu0 %v4680
        %5131 = vmatprep.subr.bf16.mxu0 0
        %5132 = vmatpush1.bf16.msra.mxu0 %v4681
        %5133 = vmatprep.subr.bf16.mxu0 0
        %5134 = vmatpush1.bf16.msra.mxu0 %v4682
        %5135 = vmatprep.subr.bf16.mxu0 0
        %5136 = vmatpush1.bf16.msra.mxu0 %v4683
        %5137 = vmatprep.subr.bf16.mxu0 0
        %5138 = vmatpush1.bf16.msra.mxu0 %v4684
        %5139 = vmatprep.subr.bf16.mxu0 0
        %5140 = vmatpush1.bf16.msra.mxu0 %v4685
        %5141 = vmatprep.subr.bf16.mxu0 0
        %5142 = vmatpush1.bf16.msra.mxu0 %v4686
        %5143 = vmatprep.subr.bf16.mxu0 0
        %5144 = vmatpush1.bf16.msra.mxu0 %v4687
        %5145 = vmatprep.subr.bf16.mxu0 0
        %5146 = vmatpush1.bf16.msra.mxu0 %v4688
        %5147 = vmatprep.subr.bf16.mxu0 0
        %5148 = vmatpush1.bf16.msra.mxu0 %v4689
        %5149 = vmatprep.mubr.bf16.mxu0 %v3295
        %5150 = vmatmul.mubr.bf16.gmra.mrb[0].mxu0 %v3291
        %v5151 = vpop.f32.mrb[0].mxu0
        %v5152 = vadd.f32 %v5112, %v5151
        %v5153 = vpop.f32.mrb[0].mxu0
        %v5154 = vpop.f32.mrb[0].mxu0
        %v5155 = vpop.f32.mrb[0].mxu0
        %5156 = vdwg.mxu0
        %5157 = vmatprep.subr.bf16.mxu0 0
        %5158 = vmatpush1.bf16.msra.mxu0 %v4690
        %5159 = vmatprep.subr.bf16.mxu0 0
        %5160 = vmatpush1.bf16.msra.mxu0 %v4691
        %5161 = vmatprep.subr.bf16.mxu0 0
        %5162 = vmatpush1.bf16.msra.mxu0 %v4692
        %5163 = vmatprep.subr.bf16.mxu0 0
        %5164 = vmatpush1.bf16.msra.mxu0 %v4693
        %5165 = vmatprep.subr.bf16.mxu0 0
        %5166 = vmatpush1.bf16.msra.mxu0 %v4694
        %5167 = vmatprep.subr.bf16.mxu0 0
        %5168 = vmatpush1.bf16.msra.mxu0 %v4695
        %5169 = vmatprep.subr.bf16.mxu0 0
        %5170 = vmatpush1.bf16.msra.mxu0 %v4696
        %5171 = vmatprep.subr.bf16.mxu0 0
        %5172 = vmatpush1.bf16.msra.mxu0 %v4697
        %5173 = vmatprep.subr.bf16.mxu0 0
        %5174 = vmatpush1.bf16.msra.mxu0 %v4698
        %5175 = vmatprep.subr.bf16.mxu0 0
        %5176 = vmatpush1.bf16.msra.mxu0 %v4699
        %5177 = vmatprep.subr.bf16.mxu0 0
        %5178 = vmatpush1.bf16.msra.mxu0 %v4700
        %5179 = vmatprep.subr.bf16.mxu0 0
        %5180 = vmatpush1.bf16.msra.mxu0 %v4701
        %5181 = vmatprep.subr.bf16.mxu0 0
        %5182 = vmatpush1.bf16.msra.mxu0 %v4702
        %5183 = vmatprep.subr.bf16.mxu0 0
        %5184 = vmatpush1.bf16.msra.mxu0 %v4703
        %5185 = vmatprep.subr.bf16.mxu0 0
        %5186 = vmatpush1.bf16.msra.mxu0 %v4704
        %5187 = vmatprep.subr.bf16.mxu0 0
        %5188 = vmatpush1.bf16.msra.mxu0 %v4705
        %5189 = vmatprep.mubr.bf16.mxu0 %v3303
        %5190 = vmatmul.mubr.bf16.gmra.mrb[0].mxu0 %v3299
        %v5191 = vpop.f32.mrb[0].mxu0
        %v5192 = vadd.f32 %v5152, %v5191
        %v5193 = vpop.f32.mrb[0].mxu0
        %v5194 = vpop.f32.mrb[0].mxu0
        %v5195 = vpop.f32.mrb[0].mxu0
        %5196 = vdwg.mxu0
        %5197 = vmatprep.subr.bf16.mxu0 0
        %5198 = vmatpush1.bf16.msra.mxu0 %v4706
        %5199 = vmatprep.subr.bf16.mxu0 0
        %5200 = vmatpush1.bf16.msra.mxu0 %v4707
        %5201 = vmatprep.subr.bf16.mxu0 0
        %5202 = vmatpush1.bf16.msra.mxu0 %v4708
        %5203 = vmatprep.subr.bf16.mxu0 0
        %5204 = vmatpush1.bf16.msra.mxu0 %v4709
        %5205 = vmatprep.subr.bf16.mxu0 0
        %5206 = vmatpush1.bf16.msra.mxu0 %v4710
        %5207 = vmatprep.subr.bf16.mxu0 0
        %5208 = vmatpush1.bf16.msra.mxu0 %v4711
        %5209 = vmatprep.subr.bf16.mxu0 0
        %5210 = vmatpush1.bf16.msra.mxu0 %v4712
        %5211 = vmatprep.subr.bf16.mxu0 0
        %5212 = vmatpush1.bf16.msra.mxu0 %v4713
        %5213 = vmatprep.subr.bf16.mxu0 0
        %5214 = vmatpush1.bf16.msra.mxu0 %v4714
        %5215 = vmatprep.subr.bf16.mxu0 0
        %5216 = vmatpush1.bf16.msra.mxu0 %v4715
        %5217 = vmatprep.subr.bf16.mxu0 0
        %5218 = vmatpush1.bf16.msra.mxu0 %v4716
        %5219 = vmatprep.subr.bf16.mxu0 0
        %5220 = vmatpush1.bf16.msra.mxu0 %v4717
        %5221 = vmatprep.subr.bf16.mxu0 0
        %5222 = vmatpush1.bf16.msra.mxu0 %v4718
        %5223 = vmatprep.subr.bf16.mxu0 0
        %5224 = vmatpush1.bf16.msra.mxu0 %v4719
        %5225 = vmatprep.subr.bf16.mxu0 0
        %5226 = vmatpush1.bf16.msra.mxu0 %v4720
        %5227 = vmatprep.subr.bf16.mxu0 0
        %5228 = vmatpush1.bf16.msra.mxu0 %v4721
        %5229 = vmatprep.mubr.bf16.mxu0 %v3425
        %5230 = vmatmul.mubr.bf16.gmra.mrb[0].mxu0 %v3424
        %v5231 = vpop.f32.mrb[0].mxu0
        %v5232 = vadd.f32 %v5192, %v5231
        %v5233 = vpop.f32.mrb[0].mxu0
        %v5234 = vpop.f32.mrb[0].mxu0
        %v5235 = vpop.f32.mrb[0].mxu0
        %5236 = vdwg.mxu0
        %5237 = vmatprep.subr.bf16.mxu0 0
        %5238 = vmatpush1.bf16.msra.mxu0 %v4722
        %5239 = vmatprep.subr.bf16.mxu0 0
        %5240 = vmatpush1.bf16.msra.mxu0 %v4723
        %5241 = vmatprep.subr.bf16.mxu0 0
        %5242 = vmatpush1.bf16.msra.mxu0 %v4724
        %5243 = vmatprep.subr.bf16.mxu0 0
        %5244 = vmatpush1.bf16.msra.mxu0 %v4725
        %5245 = vmatprep.subr.bf16.mxu0 0
        %5246 = vmatpush1.bf16.msra.mxu0 %v4726
        %5247 = vmatprep.subr.bf16.mxu0 0
        %5248 = vmatpush1.bf16.msra.mxu0 %v4727
        %5249 = vmatprep.subr.bf16.mxu0 0
        %5250 = vmatpush1.bf16.msra.mxu0 %v4728
        %5251 = vmatprep.subr.bf16.mxu0 0
        %5252 = vmatpush1.bf16.msra.mxu0 %v4729
        %5253 = vmatprep.subr.bf16.mxu0 0
        %5254 = vmatpush1.bf16.msra.mxu0 %v4730
        %5255 = vmatprep.subr.bf16.mxu0 0
        %5256 = vmatpush1.bf16.msra.mxu0 %v4731
        %5257 = vmatprep.subr.bf16.mxu0 0
        %5258 = vmatpush1.bf16.msra.mxu0 %v4732
        %5259 = vmatprep.subr.bf16.mxu0 0
        %5260 = vmatpush1.bf16.msra.mxu0 %v4733
        %5261 = vmatprep.subr.bf16.mxu0 0
        %5262 = vmatpush1.bf16.msra.mxu0 %v4734
        %5263 = vmatprep.subr.bf16.mxu0 0
        %5264 = vmatpush1.bf16.msra.mxu0 %v4735
        %5265 = vmatprep.subr.bf16.mxu0 0
        %5266 = vmatpush1.bf16.msra.mxu0 %v4736
        %5267 = vmatprep.subr.bf16.mxu0 0
        %5268 = vmatpush1.bf16.msra.mxu0 %v4737
        %5269 = vmatprep.mubr.bf16.mxu0 %v3427
        %5270 = vmatmul.mubr.bf16.gmra.mrb[0].mxu0 %v3426
        %v5271 = vpop.f32.mrb[0].mxu0
        %v5272 = vadd.f32 %v5232, %v5271
        %v5273 = vpop.f32.mrb[0].mxu0
        %v5274 = vpop.f32.mrb[0].mxu0
        %v5275 = vpop.f32.mrb[0].mxu0
        %5276 = vdwg.mxu0
        %5277 = vmatprep.subr.bf16.mxu0 0
        %5278 = vmatpush1.bf16.msra.mxu0 %v4738
        %5279 = vmatprep.subr.bf16.mxu0 0
        %5280 = vmatpush1.bf16.msra.mxu0 %v4739
        %5281 = vmatprep.subr.bf16.mxu0 0
        %5282 = vmatpush1.bf16.msra.mxu0 %v4740
        %5283 = vmatprep.subr.bf16.mxu0 0
        %5284 = vmatpush1.bf16.msra.mxu0 %v4741
        %5285 = vmatprep.subr.bf16.mxu0 0
        %5286 = vmatpush1.bf16.msra.mxu0 %v4742
        %5287 = vmatprep.subr.bf16.mxu0 0
        %5288 = vmatpush1.bf16.msra.mxu0 %v4743
        %5289 = vmatprep.subr.bf16.mxu0 0
        %5290 = vmatpush1.bf16.msra.mxu0 %v4744
        %5291 = vmatprep.subr.bf16.mxu0 0
        %5292 = vmatpush1.bf16.msra.mxu0 %v4745
        %5293 = vmatprep.subr.bf16.mxu0 0
        %5294 = vmatpush1.bf16.msra.mxu0 %v4746
        %5295 = vmatprep.subr.bf16.mxu0 0
        %5296 = vmatpush1.bf16.msra.mxu0 %v4747
        %5297 = vmatprep.subr.bf16.mxu0 0
        %5298 = vmatpush1.bf16.msra.mxu0 %v4748
        %5299 = vmatprep.subr.bf16.mxu0 0
        %5300 = vmatpush1.bf16.msra.mxu0 %v4749
        %5301 = vmatprep.subr.bf16.mxu0 0
        %5302 = vmatpush1.bf16.msra.mxu0 %v4750
        %5303 = vmatprep.subr.bf16.mxu0 0
        %5304 = vmatpush1.bf16.msra.mxu0 %v4751
        %5305 = vmatprep.subr.bf16.mxu0 0
        %5306 = vmatpush1.bf16.msra.mxu0 %v4752
        %5307 = vmatprep.subr.bf16.mxu0 0
        %5308 = vmatpush1.bf16.msra.mxu0 %v4753
        %5309 = vmatprep.mubr.bf16.mxu0 %v3429
        %5310 = vmatmul.mubr.bf16.gmra.mrb[0].mxu0 %v3428
        %v5311 = vpop.f32.mrb[0].mxu0
        %v5312 = vadd.f32 %v5272, %v5311
        %v5313 = vpop.f32.mrb[0].mxu0
        %v5314 = vpop.f32.mrb[0].mxu0
        %v5315 = vpop.f32.mrb[0].mxu0
        %5316 = vdwg.mxu0
        %5317 = vmatprep.subr.bf16.mxu0 0
        %5318 = vmatpush1.bf16.msra.mxu0 %v4754
        %5319 = vmatprep.subr.bf16.mxu0 0
        %5320 = vmatpush1.bf16.msra.mxu0 %v4755
        %5321 = vmatprep.subr.bf16.mxu0 0
        %5322 = vmatpush1.bf16.msra.mxu0 %v4756
        %5323 = vmatprep.subr.bf16.mxu0 0
        %5324 = vmatpush1.bf16.msra.mxu0 %v4757
        %5325 = vmatprep.subr.bf16.mxu0 0
        %5326 = vmatpush1.bf16.msra.mxu0 %v4758
        %5327 = vmatprep.subr.bf16.mxu0 0
        %5328 = vmatpush1.bf16.msra.mxu0 %v4759
        %5329 = vmatprep.subr.bf16.mxu0 0
        %5330 = vmatpush1.bf16.msra.mxu0 %v4760
        %5331 = vmatprep.subr.bf16.mxu0 0
        %5332 = vmatpush1.bf16.msra.mxu0 %v4761
        %5333 = vmatprep.subr.bf16.mxu0 0
        %5334 = vmatpush1.bf16.msra.mxu0 %v4762
        %5335 = vmatprep.subr.bf16.mxu0 0
        %5336 = vmatpush1.bf16.msra.mxu0 %v4763
        %5337 = vmatprep.subr.bf16.mxu0 0
        %5338 = vmatpush1.bf16.msra.mxu0 %v4764
        %5339 = vmatprep.subr.bf16.mxu0 0
        %5340 = vmatpush1.bf16.msra.mxu0 %v4765
        %5341 = vmatprep.subr.bf16.mxu0 0
        %5342 = vmatpush1.bf16.msra.mxu0 %v4766
        %5343 = vmatprep.subr.bf16.mxu0 0
        %5344 = vmatpush1.bf16.msra.mxu0 %v4767
        %5345 = vmatprep.subr.bf16.mxu0 0
        %5346 = vmatpush1.bf16.msra.mxu0 %v4768
        %5347 = vmatprep.subr.bf16.mxu0 0
        %5348 = vmatpush1.bf16.msra.mxu0 %v4769
        %5349 = vmatprep.mubr.bf16.mxu0 %v3431
        %5350 = vmatmul.mubr.bf16.gmra.mrb[0].mxu0 %v3430
        %v5351 = vpop.f32.mrb[0].mxu0
        %v5352 = vadd.f32 %v5312, %v5351
        %v5353 = vpop.f32.mrb[0].mxu0
        %v5354 = vpop.f32.mrb[0].mxu0
        %v5355 = vpop.f32.mrb[0].mxu0
        %5356 = vdwg.mxu0
        %5357 = vmatprep.subr.bf16.mxu0 0
        %5358 = vmatpush1.bf16.msra.mxu0 %v4770
        %5359 = vmatprep.subr.bf16.mxu0 0
        %5360 = vmatpush1.bf16.msra.mxu0 %v4771
        %5361 = vmatprep.subr.bf16.mxu0 0
        %5362 = vmatpush1.bf16.msra.mxu0 %v4772
        %5363 = vmatprep.subr.bf16.mxu0 0
        %5364 = vmatpush1.bf16.msra.mxu0 %v4773
        %5365 = vmatprep.subr.bf16.mxu0 0
        %5366 = vmatpush1.bf16.msra.mxu0 %v4774
        %5367 = vmatprep.subr.bf16.mxu0 0
        %5368 = vmatpush1.bf16.msra.mxu0 %v4775
        %5369 = vmatprep.subr.bf16.mxu0 0
        %5370 = vmatpush1.bf16.msra.mxu0 %v4776
        %5371 = vmatprep.subr.bf16.mxu0 0
        %5372 = vmatpush1.bf16.msra.mxu0 %v4777
        %5373 = vmatprep.subr.bf16.mxu0 0
        %5374 = vmatpush1.bf16.msra.mxu0 %v4778
        %5375 = vmatprep.subr.bf16.mxu0 0
        %5376 = vmatpush1.bf16.msra.mxu0 %v4779
        %5377 = vmatprep.subr.bf16.mxu0 0
        %5378 = vmatpush1.bf16.msra.mxu0 %v4780
        %5379 = vmatprep.subr.bf16.mxu0 0
        %5380 = vmatpush1.bf16.msra.mxu0 %v4781
        %5381 = vmatprep.subr.bf16.mxu0 0
        %5382 = vmatpush1.bf16.msra.mxu0 %v4782
        %5383 = vmatprep.subr.bf16.mxu0 0
        %5384 = vmatpush1.bf16.msra.mxu0 %v4783
        %5385 = vmatprep.subr.bf16.mxu0 0
        %5386 = vmatpush1.bf16.msra.mxu0 %v4784
        %5387 = vmatprep.subr.bf16.mxu0 0
        %5388 = vmatpush1.bf16.msra.mxu0 %v4785
        %5389 = vmatprep.mubr.bf16.mxu0 %v3449
        %5390 = vmatmul.mubr.bf16.gmra.mrb[0].mxu0 %v3448
        %v5391 = vpop.f32.mrb[0].mxu0
        %v5392 = vadd.f32 %v5352, %v5391
        %v5393 = vpop.f32.mrb[0].mxu0
        %v5394 = vpop.f32.mrb[0].mxu0
        %v5395 = vpop.f32.mrb[0].mxu0
        %5396 = vdwg.mxu0
        %5397 = vmatprep.subr.bf16.mxu0 0
        %5398 = vmatpush1.bf16.msra.mxu0 %v4786
        %5399 = vmatprep.subr.bf16.mxu0 0
        %5400 = vmatpush1.bf16.msra.mxu0 %v4787
        %5401 = vmatprep.subr.bf16.mxu0 0
        %5402 = vmatpush1.bf16.msra.mxu0 %v4788
        %5403 = vmatprep.subr.bf16.mxu0 0
        %5404 = vmatpush1.bf16.msra.mxu0 %v4789
        %5405 = vmatprep.subr.bf16.mxu0 0
        %5406 = vmatpush1.bf16.msra.mxu0 %v4790
        %5407 = vmatprep.subr.bf16.mxu0 0
        %5408 = vmatpush1.bf16.msra.mxu0 %v4791
        %5409 = vmatprep.subr.bf16.mxu0 0
        %5410 = vmatpush1.bf16.msra.mxu0 %v4792
        %5411 = vmatprep.subr.bf16.mxu0 0
        %5412 = vmatpush1.bf16.msra.mxu0 %v4793
        %5413 = vmatprep.subr.bf16.mxu0 0
        %5414 = vmatpush1.bf16.msra.mxu0 %v4794
        %5415 = vmatprep.subr.bf16.mxu0 0
        %5416 = vmatpush1.bf16.msra.mxu0 %v4795
        %5417 = vmatprep.subr.bf16.mxu0 0
        %5418 = vmatpush1.bf16.msra.mxu0 %v4796
        %5419 = vmatprep.subr.bf16.mxu0 0
        %5420 = vmatpush1.bf16.msra.mxu0 %v4797
        %5421 = vmatprep.subr.bf16.mxu0 0
        %5422 = vmatpush1.bf16.msra.mxu0 %v4798
        %5423 = vmatprep.subr.bf16.mxu0 0
        %5424 = vmatpush1.bf16.msra.mxu0 %v4799
        %5425 = vmatprep.subr.bf16.mxu0 0
        %5426 = vmatpush1.bf16.msra.mxu0 %v4800
        %5427 = vmatprep.subr.bf16.mxu0 0
        %5428 = vmatpush1.bf16.msra.mxu0 %v4801
        %5429 = vmatprep.mubr.bf16.mxu0 %v3451
        %5430 = vmatmul.mubr.bf16.gmra.mrb[0].mxu0 %v3450
        %v5431 = vpop.f32.mrb[0].mxu0
        %v5432 = vadd.f32 %v5392, %v5431
        %v5433 = vpop.f32.mrb[0].mxu0
        %v5434 = vpop.f32.mrb[0].mxu0
        %v5435 = vpop.f32.mrb[0].mxu0
        %5436 = vdwg.mxu0
        %5437 = vmatprep.subr.bf16.mxu0 0
        %5438 = vmatpush1.bf16.msra.mxu0 %v4802
        %5439 = vmatprep.subr.bf16.mxu0 0
        %5440 = vmatpush1.bf16.msra.mxu0 %v4803
        %5441 = vmatprep.subr.bf16.mxu0 0
        %5442 = vmatpush1.bf16.msra.mxu0 %v4804
        %5443 = vmatprep.subr.bf16.mxu0 0
        %5444 = vmatpush1.bf16.msra.mxu0 %v4805
        %5445 = vmatprep.subr.bf16.mxu0 0
        %5446 = vmatpush1.bf16.msra.mxu0 %v4806
        %5447 = vmatprep.subr.bf16.mxu0 0
        %5448 = vmatpush1.bf16.msra.mxu0 %v4807
        %5449 = vmatprep.subr.bf16.mxu0 0
        %5450 = vmatpush1.bf16.msra.mxu0 %v4808
        %5451 = vmatprep.subr.bf16.mxu0 0
        %5452 = vmatpush1.bf16.msra.mxu0 %v4809
        %5453 = vmatprep.subr.bf16.mxu0 0
        %5454 = vmatpush1.bf16.msra.mxu0 %v4810
        %5455 = vmatprep.subr.bf16.mxu0 0
        %5456 = vmatpush1.bf16.msra.mxu0 %v4811
        %5457 = vmatprep.subr.bf16.mxu0 0
        %5458 = vmatpush1.bf16.msra.mxu0 %v4812
        %5459 = vmatprep.subr.bf16.mxu0 0
        %5460 = vmatpush1.bf16.msra.mxu0 %v4813
        %5461 = vmatprep.subr.bf16.mxu0 0
        %5462 = vmatpush1.bf16.msra.mxu0 %v4814
        %5463 = vmatprep.subr.bf16.mxu0 0
        %5464 = vmatpush1.bf16.msra.mxu0 %v4815
        %5465 = vmatprep.subr.bf16.mxu0 0
        %5466 = vmatpush1.bf16.msra.mxu0 %v4816
        %5467 = vmatprep.subr.bf16.mxu0 0
        %5468 = vmatpush1.bf16.msra.mxu0 %v4817
        %5469 = vmatprep.mubr.bf16.mxu0 %v3453
        %5470 = vmatmul.mubr.bf16.gmra.mrb[0].mxu0 %v3452
        %v5471 = vpop.f32.mrb[0].mxu0
        %v5472 = vadd.f32 %v5432, %v5471
        %v5473 = vpop.f32.mrb[0].mxu0
        %v5474 = vpop.f32.mrb[0].mxu0
        %v5475 = vpop.f32.mrb[0].mxu0
        %5476 = vdwg.mxu0
        %5477 = vmatprep.subr.bf16.mxu0 0
        %5478 = vmatpush1.bf16.msra.mxu0 %v4818
        %5479 = vmatprep.subr.bf16.mxu0 0
        %5480 = vmatpush1.bf16.msra.mxu0 %v4819
        %5481 = vmatprep.subr.bf16.mxu0 0
        %5482 = vmatpush1.bf16.msra.mxu0 %v4820
        %5483 = vmatprep.subr.bf16.mxu0 0
        %5484 = vmatpush1.bf16.msra.mxu0 %v4821
        %5485 = vmatprep.subr.bf16.mxu0 0
        %5486 = vmatpush1.bf16.msra.mxu0 %v4822
        %5487 = vmatprep.subr.bf16.mxu0 0
        %5488 = vmatpush1.bf16.msra.mxu0 %v4823
        %5489 = vmatprep.subr.bf16.mxu0 0
        %5490 = vmatpush1.bf16.msra.mxu0 %v4824
        %5491 = vmatprep.subr.bf16.mxu0 0
        %5492 = vmatpush1.bf16.msra.mxu0 %v4825
        %5493 = vmatprep.subr.bf16.mxu0 0
        %5494 = vmatpush1.bf16.msra.mxu0 %v4826
        %5495 = vmatprep.subr.bf16.mxu0 0
        %5496 = vmatpush1.bf16.msra.mxu0 %v4827
        %5497 = vmatprep.subr.bf16.mxu0 0
        %5498 = vmatpush1.bf16.msra.mxu0 %v4828
        %5499 = vmatprep.subr.bf16.mxu0 0
        %5500 = vmatpush1.bf16.msra.mxu0 %v4829
        %5501 = vmatprep.subr.bf16.mxu0 0
        %5502 = vmatpush1.bf16.msra.mxu0 %v4830
        %5503 = vmatprep.subr.bf16.mxu0 0
        %5504 = vmatpush1.bf16.msra.mxu0 %v4831
        %5505 = vmatprep.subr.bf16.mxu0 0
        %5506 = vmatpush1.bf16.msra.mxu0 %v4832
        %5507 = vmatprep.subr.bf16.mxu0 0
        %5508 = vmatpush1.bf16.msra.mxu0 %v4833
        %5509 = vmatprep.mubr.bf16.mxu0 %v3455
        %5510 = vmatmul.mubr.bf16.gmra.mrb[0].mxu0 %v3454
        %v5511 = vpop.f32.mrb[0].mxu0
        %v5512 = vadd.f32 %v5472, %v5511
        %v5513 = vpop.f32.mrb[0].mxu0
        %v5514 = vpop.f32.mrb[0].mxu0
        %v5515 = vpop.f32.mrb[0].mxu0
        %5516 = vdwg.mxu0
        %5517 = vmatprep.subr.bf16.mxu0 0
        %5518 = vmatpush1.bf16.msra.mxu0 %v4834
        %5519 = vmatprep.subr.bf16.mxu0 0
        %5520 = vmatpush1.bf16.msra.mxu0 %v4835
        %5521 = vmatprep.subr.bf16.mxu0 0
        %5522 = vmatpush1.bf16.msra.mxu0 %v4836
        %5523 = vmatprep.subr.bf16.mxu0 0
        %5524 = vmatpush1.bf16.msra.mxu0 %v4837
        %5525 = vmatprep.subr.bf16.mxu0 0
        %5526 = vmatpush1.bf16.msra.mxu0 0
        %5527 = vmatprep.subr.bf16.mxu0 0
        %5528 = vmatpush1.bf16.msra.mxu0 0
        %5529 = vmatprep.subr.bf16.mxu0 0
        %5530 = vmatpush1.bf16.msra.mxu0 0
        %5531 = vmatprep.subr.bf16.mxu0 0
        %5532 = vmatpush1.bf16.msra.mxu0 0
        %5533 = vmatprep.subr.bf16.mxu0 0
        %5534 = vmatpush1.bf16.msra.mxu0 0
        %5535 = vmatprep.subr.bf16.mxu0 0
        %5536 = vmatpush1.bf16.msra.mxu0 0
        %5537 = vmatprep.subr.bf16.mxu0 0
        %5538 = vmatpush1.bf16.msra.mxu0 0
        %5539 = vmatprep.subr.bf16.mxu0 0
        %5540 = vmatpush1.bf16.msra.mxu0 0
        %5541 = vmatprep.subr.bf16.mxu0 0
        %5542 = vmatpush1.bf16.msra.mxu0 0
        %5543 = vmatprep.subr.bf16.mxu0 0
        %5544 = vmatpush1.bf16.msra.mxu0 0
        %5545 = vmatprep.subr.bf16.mxu0 0
        %5546 = vmatpush1.bf16.msra.mxu0 0
        %5547 = vmatprep.subr.bf16.mxu0 0
        %5548 = vmatpush1.bf16.msra.mxu0 0
        %5549 = vmatprep.mubr.bf16.mxu0 0
        %5550 = vmatmul.mubr.bf16.gmra.mrb[0].mxu0 %v5035
        %v5551 = vpop.f32.mrb[0].mxu0
        %v5552 = vadd.f32 %v5512, %v5551
        %v5553 = vpop.f32.mrb[0].mxu0
        %v5554 = vpop.f32.mrb[0].mxu0
        %v5555 = vpop.f32.mrb[0].mxu0
        %5556 = vdwg.mxu0
        %v5557 = vmax.f32 %v5552, 0.0
        %v5558 = vpack.c.bf16 %v5557, %v5557
        %v5559 = vld [vmem:[%s9] sm:$0xf]
        %v5560 = vld [vmem:[%s9 + $0x4] sm:$0xf]
        %v5561 = vld [vmem:[%s9 + $0x8] sm:$0xf]
        %v5562 = vld [vmem:[%s9 + $0xc] sm:$0xf]
        %v5563 = vld [vmem:[%s9 + $0x10] sm:$0xf]
        %v5564 = vld [vmem:[%s9 + $0x14] sm:$0xf]
        %v5565 = vld [vmem:[%s9 + $0x18] sm:$0xf]
        %v5566 = vld [vmem:[%s9 + $0x1c] sm:$0xf]
        %v5567 = vld [vmem:[%s9 + $0x20] sm:$0xf]
        %v5568 = vld [vmem:[%s9 + $0x24] sm:$0xf]
        %v5569 = vld [vmem:[%s9 + $0x28] sm:$0xf]
        %v5570 = vld [vmem:[%s9 + $0x2c] sm:$0xf]
        %v5571 = vld [vmem:[%s9 + $0x30] sm:$0xf]
        %v5572 = vld [vmem:[%s9 + $0x34] sm:$0xf]
        %v5573 = vld [vmem:[%s9 + $0x38] sm:$0xf]
        %v5574 = vld [vmem:[%s9 + $0x3c] sm:$0xf]
        %v5575 = vld [vmem:[%s10] sm:$0x1]
        %v5592 = vunpack.c.l.b16 %v5559
        %v5593 = vunpack.c.l.b16 %v5560
        %v5594 = vunpack.c.l.b16 %v5561
        %v5595 = vunpack.c.l.b16 %v5562
        %v5596 = vunpack.c.l.b16 %v5563
        %v5597 = vunpack.c.l.b16 %v5564
        %v5598 = vunpack.c.l.b16 %v5565
        %v5599 = vunpack.c.l.b16 %v5566
        %v5600 = vunpack.c.l.b16 %v5567
        %v5601 = vunpack.c.l.b16 %v5568
        %v5602 = vunpack.c.l.b16 %v5569
        %v5603 = vunpack.c.l.b16 %v5570
        %v5604 = vunpack.c.l.b16 %v5571
        %v5605 = vunpack.c.l.b16 %v5572
        %v5606 = vunpack.c.l.b16 %v5573
        %v5607 = vunpack.c.l.b16 %v5574
        %v5608 = vpack.c.b16 %v5593, %v5592
        %v5609 = vpack.c.b16 %v5595, %v5594
        %v5610 = vpack.c.b16 %v5597, %v5596
        %v5611 = vpack.c.b16 %v5599, %v5598
        %v5612 = vpack.c.b16 %v5601, %v5600
        %v5613 = vpack.c.b16 %v5603, %v5602
        %v5614 = vpack.c.b16 %v5605, %v5604
        %v5615 = vpack.c.b16 %v5607, %v5606
        %5624 = vmatprep.subr.bf16.mxu0 0
        %5625 = vmatpush1.bf16.msra.mxu0 %v5608
        %5626 = vmatprep.subr.bf16.mxu0 0
        %5627 = vmatpush1.bf16.msra.mxu0 %v5609
        %5628 = vmatprep.subr.bf16.mxu0 0
        %5629 = vmatpush1.bf16.msra.mxu0 %v5610
        %5630 = vmatprep.subr.bf16.mxu0 0
        %5631 = vmatpush1.bf16.msra.mxu0 %v5611
        %5632 = vmatprep.subr.bf16.mxu0 0
        %5633 = vmatpush1.bf16.msra.mxu0 %v5612
        %5634 = vmatprep.subr.bf16.mxu0 0
        %5635 = vmatpush1.bf16.msra.mxu0 %v5613
        %5636 = vmatprep.subr.bf16.mxu0 0
        %5637 = vmatpush1.bf16.msra.mxu0 %v5614
        %5638 = vmatprep.subr.bf16.mxu0 0
        %5639 = vmatpush1.bf16.msra.mxu0 %v5615
        %5640 = vmatprep.subr.bf16.mxu0 0
        %5641 = vmatpush1.bf16.msra.mxu0 0
        %5642 = vmatprep.subr.bf16.mxu0 0
        %5643 = vmatpush1.bf16.msra.mxu0 0
        %5644 = vmatprep.subr.bf16.mxu0 0
        %5645 = vmatpush1.bf16.msra.mxu0 0
        %5646 = vmatprep.subr.bf16.mxu0 0
        %5647 = vmatpush1.bf16.msra.mxu0 0
        %5648 = vmatprep.subr.bf16.mxu0 0
        %5649 = vmatpush1.bf16.msra.mxu0 0
        %5650 = vmatprep.subr.bf16.mxu0 0
        %5651 = vmatpush1.bf16.msra.mxu0 0
        %5652 = vmatprep.subr.bf16.mxu0 0
        %5653 = vmatpush1.bf16.msra.mxu0 0
        %5654 = vmatprep.subr.bf16.mxu0 0
        %5655 = vmatpush1.bf16.msra.mxu0 0
        %5656 = vmatprep.mubr.bf16.mxu0 0
        %5657 = vmatmul.mubr.bf16.gmra.mrb[0].mxu0 %v5558
        %v5658 = vpop.f32.mrb[0].mxu0
        %v5659 = vadd.f32 %v5575, %v5658
        %v5660 = vpop.f32.mrb[0].mxu0
        %v5661 = vpop.f32.mrb[0].mxu0
        %v5662 = vpop.f32.mrb[0].mxu0
        %5663 = vdwg.mxu0
        %vm5664 = vcmask 57344
        %5665 = vst.msk [vmem:[%s378] sm:$0x1] %vm5664, %v5659
        %s5666 = sand.u32 %s269, 1
        %s5667 = scalar_lea.sflag [#allocation3], %s5666
        %s5668 = sand.u32 %s269, 1
        %s5669 = scalar_lea.vmem [#allocation2], %s5668
        // Predicated region
        $region65: #{dqn_forward.1} parent=63 // pred_check
          %p5670 = pneg %p279
        $region66: #{dqn_forward.1} parent=63 // pred_check_branch
          %5672 = sbr.rel (%p5670) target = $region68
        $region67: #{dqn_forward.1} parent=63 // pred_region
          %s5674 = ssub.s32 16, 16
          %5675 = vsyncadd %s5667, %s5674
          %s5676 = smul.addr %s25, 16
          %s5677 = scalar_lea.hbm %s11, %s5676
          %s5679 = sshll.u32 %s5669, 4
          %s5680 = int_to_ptr.vmem [resolvable:$true] %s5679
          %5682 = dma.vmem_to_hbm [thread:$0]  %s5680, 16, %s5677, %s5667
        $region68: #{dqn_forward.1} parent=63 // pred_fallthru
          _
      $region64: #{dqn_forward.1} parent=5 // pred_fallthru
        _
      %p5683 = scmp.le.s32.totalorder 2, %s20
      // Predicated region
      $region69: #{dqn_forward.1} parent=5 // pred_check
        %p5684 = pneg %p5683
      $region70: #{dqn_forward.1} parent=5 // pred_check_branch
        %5686 = sbr.rel (%p5684) target = $region72
      $region71: #{dqn_forward.1} parent=5 // pred_region
        %s5687 = ssub.s32 %s20, 2
        // Predicated region
        $region73: #{dqn_forward.1} parent=71 // pred_check
          %p5688 = pneg %p285
        $region74: #{dqn_forward.1} parent=71 // pred_check_branch
          %5690 = sbr.rel (%p5688) target = $region76
        $region75: #{dqn_forward.1} parent=71 // pred_region
          %s5691 = sand.u32 %s270, 1
          %s5692 = scalar_lea.sflag [#allocation3], %s5691
          %s5693 = sand.u32 %s270, 1
          %s5694 = scalar_lea.vmem [#allocation2], %s5693
          %5695 = dma.done %s5692, 16
        $region76: #{dqn_forward.1} parent=71 // pred_fallthru
          _
      $region72: #{dqn_forward.1} parent=5 // pred_fallthru
        _
    $region6: #{dqn_forward.1} parent=1 // loop_footer
      %s24 = sadd.s32 1, %s20
    $region7: #{dqn_forward.1} parent=1 // loop_footer_branch
      %19 = sbr.rel target = $region3
    $region8: #{dqn_forward.1} parent=1 // loop_exit
      _
    %5696 = vsyncpa [#allocation3], 1
    %s5697 = scalar_lea.sflag [#allocation3], 1
    %5698 = vsyncpa %s5697, 1

</llo_original>
